<compile_context>
chip_gen: v6e
topology: v6e:2x2x1
jax: 0.10.0
libtpu: 0.0.40
codegen_flags: <defaults>
</compile_context>

<pallas_src>
import functools
import math

import jax
import jax.numpy as jnp
from jax.experimental import pallas as pl
from jax.experimental.pallas import tpu as pltpu

LN_EPS = 1e-6


# ---------------------------------------------------------------------------
# Kernel 1: q/k/v projections + per-position (H x H) biased attention
#           (one batch element per grid step)
# ---------------------------------------------------------------------------
def qkv_attention_kernel(q_ref, k_ref, v_ref,
                         wq_ref, bq_ref, wk_ref, wv_ref, bv_ref,
                         tile_ref, sum_ref, expand_ref, collapse_ref, bias_ref,
                         ctx_ref, qp_ref, *, n_head, head_dim):
    f32 = jnp.float32

    # Projections: bf16 operands into the MXU, f32 accumulation.
    xq = q_ref[0].astype(jnp.bfloat16)
    xk = k_ref[0].astype(jnp.bfloat16)
    xv = v_ref[0].astype(jnp.bfloat16)
    qp = jnp.dot(xq, wq_ref[...], preferred_element_type=f32) + bq_ref[...]   # (S, D)
    kp = jnp.dot(xk, wk_ref[...], preferred_element_type=f32)                 # (S, D) key: no bias
    vp = jnp.dot(xv, wv_ref[...], preferred_element_type=f32) + bv_ref[...]   # (S, D)

    tile_m = tile_ref[...]          # (h, D): repeat a head block across all heads, pre-scaled h**-0.5
    sum_m = sum_ref[...]            # (D, H): per-head lane-block sum
    expand_m = expand_ref[...]      # (H, D): broadcast a per-head scalar across its h lanes
    collapse_m = collapse_ref[...]  # (D, h): sum the H head blocks lane-wise
    bias = bias_ref[...]            # (S, H): broadcasted learned bias (same for every query head)

    # Per-position (H, H) attention, one query head at a time.  Everything stays
    # 2-D -> no in-kernel reshapes; head outputs are concatenated and written
    # with a single lane-dense (S, D) store.  n_head is small, so a static
    # Python loop keeps all slices static (live ranges stay tiny at these tiles).
    head_ctx = []
    for i in range(n_head):
        lo = i * head_dim
        q_i = qp[:, lo:lo + head_dim]                                          # (S, h)
        q_rep = jnp.dot(q_i, tile_m, preferred_element_type=f32)               # (S, D)
        scores = jnp.dot(q_rep * kp, sum_m, preferred_element_type=f32)        # (S, H) already scaled
        scores = scores + bias
        m = jnp.max(scores, axis=-1, keepdims=True)
        e = jnp.exp(scores - m)
        w_i = e * pl.reciprocal(jnp.sum(e, axis=-1, keepdims=True), approx=True)
        w_rep = jnp.dot(w_i, expand_m, preferred_element_type=f32)             # (S, D)
        head_ctx.append(
            jnp.dot(w_rep * vp, collapse_m, preferred_element_type=f32))       # (S, h)

    ctx_ref[0] = jnp.concatenate(head_ctx, axis=-1)   # natural (s, head, d) layout
    qp_ref[0] = qp                                    # projected query for the residual


# ---------------------------------------------------------------------------
# Kernel 2: output projection + residual(projected q) + custom LayerNorm
#           (one batch element per grid step)
# ---------------------------------------------------------------------------
def out_norm_kernel(ctx_ref, qp_ref, wo_ref, bo_ref, g_ref, b_ref, o_ref):
    f32 = jnp.float32
    ctx = ctx_ref[0].astype(jnp.bfloat16)
    y = jnp.dot(ctx, wo_ref[...], preferred_element_type=f32) + bo_ref[...] + qp_ref[0]

    d = y.shape[-1]
    mean = jnp.mean(y, axis=-1, keepdims=True)
    var = jnp.sum((y - mean) ** 2, axis=-1, keepdims=True) * (1.0 / (d - 1))   # unbiased
    std = jnp.sqrt(var)
    o_ref[0] = g_ref[...] * ((y - mean) / (std + LN_EPS)) + b_ref[...]


# ---------------------------------------------------------------------------
# Wrapper: constant/selector setup + pallas_call plumbing
# ---------------------------------------------------------------------------
def biased_cross_attention(q, k, v, params, *, n_head):
    B, S, D = q.shape
    h = D // n_head
    f32 = jnp.float32
    bf16 = jnp.bfloat16

    # Constant selector matrices (built once in glue).  The h**-0.5 score scale
    # is folded into tile_mat so the kernel never multiplies by it.
    col = jnp.arange(D)
    expand_mat = (col[None, :] // h == jnp.arange(n_head)[:, None]).astype(f32)   # (H, D)
    sum_mat = expand_mat.T                                                         # (D, H)
    collapse_mat = (col[None, :] % h == jnp.arange(h)[:, None]).astype(f32).T      # (D, h)
    tile_mat = collapse_mat.T * (float(h) ** -0.5)                                  # (h, D)

    # Learned bias (H, 1, h) broadcast against qk (B, S, H, H): dim 0 aligns with
    # the sequence axis, dim 2 with the key-head axis, identical for every query
    # head.  Reproduce that broadcast here (raises exactly when torch would).
    bias_eff = jnp.broadcast_to(params["bias"],
                                (S, n_head, n_head))[:, 0, :].astype(f32)           # (S, H)

    # Weights cast to bf16 once (MXU native path); biases stay f32.
    wq = params["wq"].astype(bf16)
    wk = params["wk"].astype(bf16)
    wv = params["wv"].astype(bf16)
    wo = params["wo"].astype(bf16)

    x_spec = pl.BlockSpec((1, S, D), lambda b: (b, 0, 0))

    def const(shape):
        return pl.BlockSpec(shape, lambda b: (0, 0))

    cparams = pltpu.CompilerParams(dimension_semantics=("parallel",))

    # ----- projections + per-position attention -----
    ctx_nat, qp = pl.pallas_call(
        functools.partial(qkv_attention_kernel, n_head=n_head, head_dim=h),
        out_shape=(jax.ShapeDtypeStruct((B, S, D), f32),
                   jax.ShapeDtypeStruct((B, S, D), f32)),
        grid_spec=pltpu.PrefetchScalarGridSpec(
            num_scalar_prefetch=0, grid=(B,),
            in_specs=[
                x_spec, x_spec, x_spec,
                const((D, D)), const((1, D)),        # Wq, bq
                const((D, D)),                       # Wk (bias=False)
                const((D, D)), const((1, D)),        # Wv, bv
                const((h, D)), const((D, n_head)),   # tile, sum
                const((n_head, D)), const((D, h)),   # expand, collapse
                const((S, n_head)),                  # broadcasted bias
            ],
            out_specs=(x_spec, x_spec)),
        compiler_params=cparams,
    )(q, k, v, wq, params["bq"], wk, wv, params["bv"],
      tile_mat, sum_mat, expand_mat, collapse_mat, bias_eff)

    # Reference: (w @ v).transpose(1, 2).contiguous().view(B, S, -1).
    # Pure memory relayout interleaving heads and positions -> done in XLA.
    ctx = ctx_nat.reshape(B, S, n_head, h).transpose(0, 2, 1, 3).reshape(B, S, D)

    # ----- output projection + residual + LayerNorm -----
    out = pl.pallas_call(
        out_norm_kernel,
        out_shape=jax.ShapeDtypeStruct((B, S, D), f32),
        grid_spec=pltpu.PrefetchScalarGridSpec(
            num_scalar_prefetch=0, grid=(B,),
            in_specs=[x_spec, x_spec,
                      const((D, D)), const((1, D)),   # Wout, bout
                      const((1, D)), const((1, D))],  # LayerNorm gamma, beta
            out_specs=x_spec),
        compiler_params=cparams,
    )(ctx, qp, wo, params["bo"], params["gamma"], params["beta"])
    return out


# ---------------------------------------------------------------------------
# Deterministic synthetic parameter init (matches the torch module's layout)
# ---------------------------------------------------------------------------
def init_params(key, n_state, n_head):
    h = n_state // n_head
    ks = jax.random.split(key, 8)

    def lin_w(kk, fan_in, fan_out):
        bound = 1.0 / math.sqrt(fan_in)
        # Stored pre-transposed (in, out) so kernels compute x @ W.
        return jax.random.uniform(kk, (fan_in, fan_out), jnp.float32, -bound, bound)

    def lin_b(kk, fan_in, fan_out):
        bound = 1.0 / math.sqrt(fan_in)
        return jax.random.uniform(kk, (1, fan_out), jnp.float32, -bound, bound)

    return {
        "wq": lin_w(ks[0], n_state, n_state), "bq": lin_b(ks[1], n_state, n_state),
        "wk": lin_w(ks[2], n_state, n_state),                       # key: bias=False
        "wv": lin_w(ks[3], n_state, n_state), "bv": lin_b(ks[4], n_state, n_state),
        "wo": lin_w(ks[5], n_state, n_state), "bo": lin_b(ks[6], n_state, n_state),
        # nn.Parameter(torch.zeros(n_head, 1, head_dim)); small random values here
        # so the bias broadcast path is actually exercised.
        "bias": 0.02 * jax.random.normal(ks[7], (n_head, 1, h), jnp.float32),
        "gamma": jnp.ones((1, n_state), jnp.float32),
        "beta": jnp.zeros((1, n_state), jnp.float32),
    }


if __name__ == "__main__":
    # The reference module's broadcasting requires seq_len == n_head == head_dim.
    B, S, D, H = 2, 8, 64, 8          # head_dim = 8
    key = jax.random.PRNGKey(0)
    kq, kk, kv, kp = jax.random.split(key, 4)
    q = jax.random.normal(kq, (B, S, D), jnp.float32)
    k = jax.random.normal(kk, (B, S, D), jnp.float32)
    v = jax.random.normal(kv, (B, S, D), jnp.float32)
    params = init_params(kp, D, H)

    out = biased_cross_attention(q, k, v, params, n_head=H)
    out = jax.block_until_ready(out)
    assert out.shape == (B, S, D) and out.dtype == jnp.float32
    assert bool(jnp.all(jnp.isfinite(out)))
    print("KERNEL_OK")
</pallas_src>

<mosaic_0001>
module attributes {stable_mosaic.version = 11 : i64} {
  func.func @qkv_attention_kernel(%arg0: i32, %arg1: memref<1x8x64xf32, #tpu.memory_space<vmem>>, %arg2: memref<1x8x64xf32, #tpu.memory_space<vmem>>, %arg3: memref<1x8x64xf32, #tpu.memory_space<vmem>>, %arg4: memref<64x64xbf16, #tpu.memory_space<vmem>>, %arg5: memref<1x64xf32, #tpu.memory_space<vmem>>, %arg6: memref<64x64xbf16, #tpu.memory_space<vmem>>, %arg7: memref<64x64xbf16, #tpu.memory_space<vmem>>, %arg8: memref<1x64xf32, #tpu.memory_space<vmem>>, %arg9: memref<8x64xf32, #tpu.memory_space<vmem>>, %arg10: memref<64x8xf32, #tpu.memory_space<vmem>>, %arg11: memref<8x64xf32, #tpu.memory_space<vmem>>, %arg12: memref<64x8xf32, #tpu.memory_space<vmem>>, %arg13: memref<8x8xf32, #tpu.memory_space<vmem>>, %arg14: memref<1x8x64xf32, #tpu.memory_space<vmem>>, %arg15: memref<1x8x64xf32, #tpu.memory_space<vmem>>) attributes {dimension_semantics = [#tpu.dimension_semantics<parallel>], iteration_bounds = array<i64: 2>, scalar_prefetch = 0 : i64, scratch_operands = 0 : i64, tpu.core_type = #tpu.core_type<tc>, window_params = [{transform_indices = @transform_0, window_bounds = array<i64: 1, 8, 64>}, {transform_indices = @transform_1, window_bounds = array<i64: 1, 8, 64>}, {transform_indices = @transform_2, window_bounds = array<i64: 1, 8, 64>}, {pipeline_mode = #tpu.pipeline_mode<synchronous>, transform_indices = @transform_3, window_bounds = array<i64: 64, 64>}, {pipeline_mode = #tpu.pipeline_mode<synchronous>, transform_indices = @transform_4, window_bounds = array<i64: 1, 64>}, {pipeline_mode = #tpu.pipeline_mode<synchronous>, transform_indices = @transform_5, window_bounds = array<i64: 64, 64>}, {pipeline_mode = #tpu.pipeline_mode<synchronous>, transform_indices = @transform_6, window_bounds = array<i64: 64, 64>}, {pipeline_mode = #tpu.pipeline_mode<synchronous>, transform_indices = @transform_7, window_bounds = array<i64: 1, 64>}, {pipeline_mode = #tpu.pipeline_mode<synchronous>, transform_indices = @transform_8, window_bounds = array<i64: 8, 64>}, {pipeline_mode = #tpu.pipeline_mode<synchronous>, transform_indices = @transform_9, window_bounds = array<i64: 64, 8>}, {pipeline_mode = #tpu.pipeline_mode<synchronous>, transform_indices = @transform_10, window_bounds = array<i64: 8, 64>}, {pipeline_mode = #tpu.pipeline_mode<synchronous>, transform_indices = @transform_11, window_bounds = array<i64: 64, 8>}, {pipeline_mode = #tpu.pipeline_mode<synchronous>, transform_indices = @transform_12, window_bounds = array<i64: 8, 8>}, {transform_indices = @transform_13, window_bounds = array<i64: 1, 8, 64>}, {transform_indices = @transform_14, window_bounds = array<i64: 1, 8, 64>}]} {
    %c0 = arith.constant 0 : index
    %c0_0 = arith.constant 0 : index
    %c0_1 = arith.constant 0 : index
    %0 = vector.load %arg1[%c0, %c0_0, %c0_1] : memref<1x8x64xf32, #tpu.memory_space<vmem>>, vector<1x8x64xf32>
    %1 = vector.shape_cast %0 : vector<1x8x64xf32> to vector<8x64xf32>
    %2 = arith.truncf %1 : vector<8x64xf32> to vector<8x64xbf16>
    %c0_2 = arith.constant 0 : index
    %c0_3 = arith.constant 0 : index
    %c0_4 = arith.constant 0 : index
    %3 = vector.load %arg2[%c0_2, %c0_3, %c0_4] : memref<1x8x64xf32, #tpu.memory_space<vmem>>, vector<1x8x64xf32>
    %4 = vector.shape_cast %3 : vector<1x8x64xf32> to vector<8x64xf32>
    %5 = arith.truncf %4 : vector<8x64xf32> to vector<8x64xbf16>
    %c0_5 = arith.constant 0 : index
    %c0_6 = arith.constant 0 : index
    %c0_7 = arith.constant 0 : index
    %6 = vector.load %arg3[%c0_5, %c0_6, %c0_7] : memref<1x8x64xf32, #tpu.memory_space<vmem>>, vector<1x8x64xf32>
    %7 = vector.shape_cast %6 : vector<1x8x64xf32> to vector<8x64xf32>
    %8 = arith.truncf %7 : vector<8x64xf32> to vector<8x64xbf16>
    %c0_8 = arith.constant 0 : index
    %c0_9 = arith.constant 0 : index
    %9 = vector.load %arg4[%c0_8, %c0_9] : memref<64x64xbf16, #tpu.memory_space<vmem>>, vector<64x64xbf16>
    %cst = arith.constant dense<0.000000e+00> : vector<8x64xf32>
    %10 = tpu.matmul %2, %9, %cst {dimension_numbers = #tpu.dot_dimension_numbers<[1], [0], [0], [1], [0, 0, 1, 1], [], []>} : vector<8x64xbf16>, vector<64x64xbf16>, vector<8x64xf32> -> vector<8x64xf32>
    %c0_10 = arith.constant 0 : index
    %c0_11 = arith.constant 0 : index
    %11 = vector.load %arg5[%c0_10, %c0_11] : memref<1x64xf32, #tpu.memory_space<vmem>>, vector<1x64xf32>
    %12 = vector.broadcast %11 : vector<1x64xf32> to vector<8x64xf32>
    %13 = arith.addf %10, %12 : vector<8x64xf32>
    %c0_12 = arith.constant 0 : index
    %c0_13 = arith.constant 0 : index
    %14 = vector.load %arg6[%c0_12, %c0_13] : memref<64x64xbf16, #tpu.memory_space<vmem>>, vector<64x64xbf16>
    %cst_14 = arith.constant dense<0.000000e+00> : vector<8x64xf32>
    %15 = tpu.matmul %5, %14, %cst_14 {dimension_numbers = #tpu.dot_dimension_numbers<[1], [0], [0], [1], [0, 0, 1, 1], [], []>} : vector<8x64xbf16>, vector<64x64xbf16>, vector<8x64xf32> -> vector<8x64xf32>
    %c0_15 = arith.constant 0 : index
    %c0_16 = arith.constant 0 : index
    %16 = vector.load %arg7[%c0_15, %c0_16] : memref<64x64xbf16, #tpu.memory_space<vmem>>, vector<64x64xbf16>
    %cst_17 = arith.constant dense<0.000000e+00> : vector<8x64xf32>
    %17 = tpu.matmul %8, %16, %cst_17 {dimension_numbers = #tpu.dot_dimension_numbers<[1], [0], [0], [1], [0, 0, 1, 1], [], []>} : vector<8x64xbf16>, vector<64x64xbf16>, vector<8x64xf32> -> vector<8x64xf32>
    %c0_18 = arith.constant 0 : index
    %c0_19 = arith.constant 0 : index
    %18 = vector.load %arg8[%c0_18, %c0_19] : memref<1x64xf32, #tpu.memory_space<vmem>>, vector<1x64xf32>
    %19 = vector.broadcast %18 : vector<1x64xf32> to vector<8x64xf32>
    %20 = arith.addf %17, %19 : vector<8x64xf32>
    %c0_20 = arith.constant 0 : index
    %c0_21 = arith.constant 0 : index
    %21 = vector.load %arg9[%c0_20, %c0_21] : memref<8x64xf32, #tpu.memory_space<vmem>>, vector<8x64xf32>
    %c0_22 = arith.constant 0 : index
    %c0_23 = arith.constant 0 : index
    %22 = vector.load %arg10[%c0_22, %c0_23] : memref<64x8xf32, #tpu.memory_space<vmem>>, vector<64x8xf32>
    %c0_24 = arith.constant 0 : index
    %c0_25 = arith.constant 0 : index
    %23 = vector.load %arg11[%c0_24, %c0_25] : memref<8x64xf32, #tpu.memory_space<vmem>>, vector<8x64xf32>
    %c0_26 = arith.constant 0 : index
    %c0_27 = arith.constant 0 : index
    %24 = vector.load %arg12[%c0_26, %c0_27] : memref<64x8xf32, #tpu.memory_space<vmem>>, vector<64x8xf32>
    %c0_28 = arith.constant 0 : index
    %c0_29 = arith.constant 0 : index
    %25 = vector.load %arg13[%c0_28, %c0_29] : memref<8x8xf32, #tpu.memory_space<vmem>>, vector<8x8xf32>
    %26 = vector.extract_strided_slice %13 {offsets = [0, 0], sizes = [8, 8], strides = [1, 1]} : vector<8x64xf32> to vector<8x8xf32>
    %cst_30 = arith.constant dense<0.000000e+00> : vector<8x64xf32>
    %27 = tpu.matmul %26, %21, %cst_30 {dimension_numbers = #tpu.dot_dimension_numbers<[1], [0], [0], [1], [0, 0, 1, 1], [], []>} : vector<8x8xf32>, vector<8x64xf32>, vector<8x64xf32> -> vector<8x64xf32>
    %28 = arith.mulf %27, %15 : vector<8x64xf32>
    %cst_31 = arith.constant dense<0.000000e+00> : vector<8x8xf32>
    %29 = tpu.matmul %28, %22, %cst_31 {dimension_numbers = #tpu.dot_dimension_numbers<[1], [0], [0], [1], [0, 0, 1, 1], [], []>} : vector<8x64xf32>, vector<64x8xf32>, vector<8x8xf32> -> vector<8x8xf32>
    %30 = arith.addf %29, %25 : vector<8x8xf32>
    %cst_32 = arith.constant dense<0xFF800000> : vector<8xf32>
    %31 = vector.multi_reduction <maximumf>, %30, %cst_32 [1] : vector<8x8xf32> to vector<8xf32>
    %32 = vector.shape_cast %31 : vector<8xf32> to vector<8x1xf32>
    %33 = vector.broadcast %32 : vector<8x1xf32> to vector<8x8xf32>
    %34 = arith.subf %30, %33 : vector<8x8xf32>
    %35 = math.exp %34 : vector<8x8xf32>
    %cst_33 = arith.constant dense<0.000000e+00> : vector<8xf32>
    %36 = vector.multi_reduction <add>, %35, %cst_33 [1] : vector<8x8xf32> to vector<8xf32>
    %37 = vector.shape_cast %36 : vector<8xf32> to vector<8x1xf32>
    %38 = tpu.reciprocal %37 {approx = true} : vector<8x1xf32> -> vector<8x1xf32>
    %39 = vector.broadcast %38 : vector<8x1xf32> to vector<8x8xf32>
    %40 = arith.mulf %35, %39 : vector<8x8xf32>
    %cst_34 = arith.constant dense<0.000000e+00> : vector<8x64xf32>
    %41 = tpu.matmul %40, %23, %cst_34 {dimension_numbers = #tpu.dot_dimension_numbers<[1], [0], [0], [1], [0, 0, 1, 1], [], []>} : vector<8x8xf32>, vector<8x64xf32>, vector<8x64xf32> -> vector<8x64xf32>
    %42 = arith.mulf %41, %20 : vector<8x64xf32>
    %cst_35 = arith.constant dense<0.000000e+00> : vector<8x8xf32>
    %43 = tpu.matmul %42, %24, %cst_35 {dimension_numbers = #tpu.dot_dimension_numbers<[1], [0], [0], [1], [0, 0, 1, 1], [], []>} : vector<8x64xf32>, vector<64x8xf32>, vector<8x8xf32> -> vector<8x8xf32>
    %44 = vector.extract_strided_slice %13 {offsets = [0, 8], sizes = [8, 8], strides = [1, 1]} : vector<8x64xf32> to vector<8x8xf32>
    %cst_36 = arith.constant dense<0.000000e+00> : vector<8x64xf32>
    %45 = tpu.matmul %44, %21, %cst_36 {dimension_numbers = #tpu.dot_dimension_numbers<[1], [0], [0], [1], [0, 0, 1, 1], [], []>} : vector<8x8xf32>, vector<8x64xf32>, vector<8x64xf32> -> vector<8x64xf32>
    %46 = arith.mulf %45, %15 : vector<8x64xf32>
    %cst_37 = arith.constant dense<0.000000e+00> : vector<8x8xf32>
    %47 = tpu.matmul %46, %22, %cst_37 {dimension_numbers = #tpu.dot_dimension_numbers<[1], [0], [0], [1], [0, 0, 1, 1], [], []>} : vector<8x64xf32>, vector<64x8xf32>, vector<8x8xf32> -> vector<8x8xf32>
    %48 = arith.addf %47, %25 : vector<8x8xf32>
    %cst_38 = arith.constant dense<0xFF800000> : vector<8xf32>
    %49 = vector.multi_reduction <maximumf>, %48, %cst_38 [1] : vector<8x8xf32> to vector<8xf32>
    %50 = vector.shape_cast %49 : vector<8xf32> to vector<8x1xf32>
    %51 = vector.broadcast %50 : vector<8x1xf32> to vector<8x8xf32>
    %52 = arith.subf %48, %51 : vector<8x8xf32>
    %53 = math.exp %52 : vector<8x8xf32>
    %cst_39 = arith.constant dense<0.000000e+00> : vector<8xf32>
    %54 = vector.multi_reduction <add>, %53, %cst_39 [1] : vector<8x8xf32> to vector<8xf32>
    %55 = vector.shape_cast %54 : vector<8xf32> to vector<8x1xf32>
    %56 = tpu.reciprocal %55 {approx = true} : vector<8x1xf32> -> vector<8x1xf32>
    %57 = vector.broadcast %56 : vector<8x1xf32> to vector<8x8xf32>
    %58 = arith.mulf %53, %57 : vector<8x8xf32>
    %cst_40 = arith.constant dense<0.000000e+00> : vector<8x64xf32>
    %59 = tpu.matmul %58, %23, %cst_40 {dimension_numbers = #tpu.dot_dimension_numbers<[1], [0], [0], [1], [0, 0, 1, 1], [], []>} : vector<8x8xf32>, vector<8x64xf32>, vector<8x64xf32> -> vector<8x64xf32>
    %60 = arith.mulf %59, %20 : vector<8x64xf32>
    %cst_41 = arith.constant dense<0.000000e+00> : vector<8x8xf32>
    %61 = tpu.matmul %60, %24, %cst_41 {dimension_numbers = #tpu.dot_dimension_numbers<[1], [0], [0], [1], [0, 0, 1, 1], [], []>} : vector<8x64xf32>, vector<64x8xf32>, vector<8x8xf32> -> vector<8x8xf32>
    %62 = vector.extract_strided_slice %13 {offsets = [0, 16], sizes = [8, 8], strides = [1, 1]} : vector<8x64xf32> to vector<8x8xf32>
    %cst_42 = arith.constant dense<0.000000e+00> : vector<8x64xf32>
    %63 = tpu.matmul %62, %21, %cst_42 {dimension_numbers = #tpu.dot_dimension_numbers<[1], [0], [0], [1], [0, 0, 1, 1], [], []>} : vector<8x8xf32>, vector<8x64xf32>, vector<8x64xf32> -> vector<8x64xf32>
    %64 = arith.mulf %63, %15 : vector<8x64xf32>
    %cst_43 = arith.constant dense<0.000000e+00> : vector<8x8xf32>
    %65 = tpu.matmul %64, %22, %cst_43 {dimension_numbers = #tpu.dot_dimension_numbers<[1], [0], [0], [1], [0, 0, 1, 1], [], []>} : vector<8x64xf32>, vector<64x8xf32>, vector<8x8xf32> -> vector<8x8xf32>
    %66 = arith.addf %65, %25 : vector<8x8xf32>
    %cst_44 = arith.constant dense<0xFF800000> : vector<8xf32>
    %67 = vector.multi_reduction <maximumf>, %66, %cst_44 [1] : vector<8x8xf32> to vector<8xf32>
    %68 = vector.shape_cast %67 : vector<8xf32> to vector<8x1xf32>
    %69 = vector.broadcast %68 : vector<8x1xf32> to vector<8x8xf32>
    %70 = arith.subf %66, %69 : vector<8x8xf32>
    %71 = math.exp %70 : vector<8x8xf32>
    %cst_45 = arith.constant dense<0.000000e+00> : vector<8xf32>
    %72 = vector.multi_reduction <add>, %71, %cst_45 [1] : vector<8x8xf32> to vector<8xf32>
    %73 = vector.shape_cast %72 : vector<8xf32> to vector<8x1xf32>
    %74 = tpu.reciprocal %73 {approx = true} : vector<8x1xf32> -> vector<8x1xf32>
    %75 = vector.broadcast %74 : vector<8x1xf32> to vector<8x8xf32>
    %76 = arith.mulf %71, %75 : vector<8x8xf32>
    %cst_46 = arith.constant dense<0.000000e+00> : vector<8x64xf32>
    %77 = tpu.matmul %76, %23, %cst_46 {dimension_numbers = #tpu.dot_dimension_numbers<[1], [0], [0], [1], [0, 0, 1, 1], [], []>} : vector<8x8xf32>, vector<8x64xf32>, vector<8x64xf32> -> vector<8x64xf32>
    %78 = arith.mulf %77, %20 : vector<8x64xf32>
    %cst_47 = arith.constant dense<0.000000e+00> : vector<8x8xf32>
    %79 = tpu.matmul %78, %24, %cst_47 {dimension_numbers = #tpu.dot_dimension_numbers<[1], [0], [0], [1], [0, 0, 1, 1], [], []>} : vector<8x64xf32>, vector<64x8xf32>, vector<8x8xf32> -> vector<8x8xf32>
    %80 = vector.extract_strided_slice %13 {offsets = [0, 24], sizes = [8, 8], strides = [1, 1]} : vector<8x64xf32> to vector<8x8xf32>
    %cst_48 = arith.constant dense<0.000000e+00> : vector<8x64xf32>
    %81 = tpu.matmul %80, %21, %cst_48 {dimension_numbers = #tpu.dot_dimension_numbers<[1], [0], [0], [1], [0, 0, 1, 1], [], []>} : vector<8x8xf32>, vector<8x64xf32>, vector<8x64xf32> -> vector<8x64xf32>
    %82 = arith.mulf %81, %15 : vector<8x64xf32>
    %cst_49 = arith.constant dense<0.000000e+00> : vector<8x8xf32>
    %83 = tpu.matmul %82, %22, %cst_49 {dimension_numbers = #tpu.dot_dimension_numbers<[1], [0], [0], [1], [0, 0, 1, 1], [], []>} : vector<8x64xf32>, vector<64x8xf32>, vector<8x8xf32> -> vector<8x8xf32>
    %84 = arith.addf %83, %25 : vector<8x8xf32>
    %cst_50 = arith.constant dense<0xFF800000> : vector<8xf32>
    %85 = vector.multi_reduction <maximumf>, %84, %cst_50 [1] : vector<8x8xf32> to vector<8xf32>
    %86 = vector.shape_cast %85 : vector<8xf32> to vector<8x1xf32>
    %87 = vector.broadcast %86 : vector<8x1xf32> to vector<8x8xf32>
    %88 = arith.subf %84, %87 : vector<8x8xf32>
    %89 = math.exp %88 : vector<8x8xf32>
    %cst_51 = arith.constant dense<0.000000e+00> : vector<8xf32>
    %90 = vector.multi_reduction <add>, %89, %cst_51 [1] : vector<8x8xf32> to vector<8xf32>
    %91 = vector.shape_cast %90 : vector<8xf32> to vector<8x1xf32>
    %92 = tpu.reciprocal %91 {approx = true} : vector<8x1xf32> -> vector<8x1xf32>
    %93 = vector.broadcast %92 : vector<8x1xf32> to vector<8x8xf32>
    %94 = arith.mulf %89, %93 : vector<8x8xf32>
    %cst_52 = arith.constant dense<0.000000e+00> : vector<8x64xf32>
    %95 = tpu.matmul %94, %23, %cst_52 {dimension_numbers = #tpu.dot_dimension_numbers<[1], [0], [0], [1], [0, 0, 1, 1], [], []>} : vector<8x8xf32>, vector<8x64xf32>, vector<8x64xf32> -> vector<8x64xf32>
    %96 = arith.mulf %95, %20 : vector<8x64xf32>
    %cst_53 = arith.constant dense<0.000000e+00> : vector<8x8xf32>
    %97 = tpu.matmul %96, %24, %cst_53 {dimension_numbers = #tpu.dot_dimension_numbers<[1], [0], [0], [1], [0, 0, 1, 1], [], []>} : vector<8x64xf32>, vector<64x8xf32>, vector<8x8xf32> -> vector<8x8xf32>
    %98 = vector.extract_strided_slice %13 {offsets = [0, 32], sizes = [8, 8], strides = [1, 1]} : vector<8x64xf32> to vector<8x8xf32>
    %cst_54 = arith.constant dense<0.000000e+00> : vector<8x64xf32>
    %99 = tpu.matmul %98, %21, %cst_54 {dimension_numbers = #tpu.dot_dimension_numbers<[1], [0], [0], [1], [0, 0, 1, 1], [], []>} : vector<8x8xf32>, vector<8x64xf32>, vector<8x64xf32> -> vector<8x64xf32>
    %100 = arith.mulf %99, %15 : vector<8x64xf32>
    %cst_55 = arith.constant dense<0.000000e+00> : vector<8x8xf32>
    %101 = tpu.matmul %100, %22, %cst_55 {dimension_numbers = #tpu.dot_dimension_numbers<[1], [0], [0], [1], [0, 0, 1, 1], [], []>} : vector<8x64xf32>, vector<64x8xf32>, vector<8x8xf32> -> vector<8x8xf32>
    %102 = arith.addf %101, %25 : vector<8x8xf32>
    %cst_56 = arith.constant dense<0xFF800000> : vector<8xf32>
    %103 = vector.multi_reduction <maximumf>, %102, %cst_56 [1] : vector<8x8xf32> to vector<8xf32>
    %104 = vector.shape_cast %103 : vector<8xf32> to vector<8x1xf32>
    %105 = vector.broadcast %104 : vector<8x1xf32> to vector<8x8xf32>
    %106 = arith.subf %102, %105 : vector<8x8xf32>
    %107 = math.exp %106 : vector<8x8xf32>
    %cst_57 = arith.constant dense<0.000000e+00> : vector<8xf32>
    %108 = vector.multi_reduction <add>, %107, %cst_57 [1] : vector<8x8xf32> to vector<8xf32>
    %109 = vector.shape_cast %108 : vector<8xf32> to vector<8x1xf32>
    %110 = tpu.reciprocal %109 {approx = true} : vector<8x1xf32> -> vector<8x1xf32>
    %111 = vector.broadcast %110 : vector<8x1xf32> to vector<8x8xf32>
    %112 = arith.mulf %107, %111 : vector<8x8xf32>
    %cst_58 = arith.constant dense<0.000000e+00> : vector<8x64xf32>
    %113 = tpu.matmul %112, %23, %cst_58 {dimension_numbers = #tpu.dot_dimension_numbers<[1], [0], [0], [1], [0, 0, 1, 1], [], []>} : vector<8x8xf32>, vector<8x64xf32>, vector<8x64xf32> -> vector<8x64xf32>
    %114 = arith.mulf %113, %20 : vector<8x64xf32>
    %cst_59 = arith.constant dense<0.000000e+00> : vector<8x8xf32>
    %115 = tpu.matmul %114, %24, %cst_59 {dimension_numbers = #tpu.dot_dimension_numbers<[1], [0], [0], [1], [0, 0, 1, 1], [], []>} : vector<8x64xf32>, vector<64x8xf32>, vector<8x8xf32> -> vector<8x8xf32>
    %116 = vector.extract_strided_slice %13 {offsets = [0, 40], sizes = [8, 8], strides = [1, 1]} : vector<8x64xf32> to vector<8x8xf32>
    %cst_60 = arith.constant dense<0.000000e+00> : vector<8x64xf32>
    %117 = tpu.matmul %116, %21, %cst_60 {dimension_numbers = #tpu.dot_dimension_numbers<[1], [0], [0], [1], [0, 0, 1, 1], [], []>} : vector<8x8xf32>, vector<8x64xf32>, vector<8x64xf32> -> vector<8x64xf32>
    %118 = arith.mulf %117, %15 : vector<8x64xf32>
    %cst_61 = arith.constant dense<0.000000e+00> : vector<8x8xf32>
    %119 = tpu.matmul %118, %22, %cst_61 {dimension_numbers = #tpu.dot_dimension_numbers<[1], [0], [0], [1], [0, 0, 1, 1], [], []>} : vector<8x64xf32>, vector<64x8xf32>, vector<8x8xf32> -> vector<8x8xf32>
    %120 = arith.addf %119, %25 : vector<8x8xf32>
    %cst_62 = arith.constant dense<0xFF800000> : vector<8xf32>
    %121 = vector.multi_reduction <maximumf>, %120, %cst_62 [1] : vector<8x8xf32> to vector<8xf32>
    %122 = vector.shape_cast %121 : vector<8xf32> to vector<8x1xf32>
    %123 = vector.broadcast %122 : vector<8x1xf32> to vector<8x8xf32>
    %124 = arith.subf %120, %123 : vector<8x8xf32>
    %125 = math.exp %124 : vector<8x8xf32>
    %cst_63 = arith.constant dense<0.000000e+00> : vector<8xf32>
    %126 = vector.multi_reduction <add>, %125, %cst_63 [1] : vector<8x8xf32> to vector<8xf32>
    %127 = vector.shape_cast %126 : vector<8xf32> to vector<8x1xf32>
    %128 = tpu.reciprocal %127 {approx = true} : vector<8x1xf32> -> vector<8x1xf32>
    %129 = vector.broadcast %128 : vector<8x1xf32> to vector<8x8xf32>
    %130 = arith.mulf %125, %129 : vector<8x8xf32>
    %cst_64 = arith.constant dense<0.000000e+00> : vector<8x64xf32>
    %131 = tpu.matmul %130, %23, %cst_64 {dimension_numbers = #tpu.dot_dimension_numbers<[1], [0], [0], [1], [0, 0, 1, 1], [], []>} : vector<8x8xf32>, vector<8x64xf32>, vector<8x64xf32> -> vector<8x64xf32>
    %132 = arith.mulf %131, %20 : vector<8x64xf32>
    %cst_65 = arith.constant dense<0.000000e+00> : vector<8x8xf32>
    %133 = tpu.matmul %132, %24, %cst_65 {dimension_numbers = #tpu.dot_dimension_numbers<[1], [0], [0], [1], [0, 0, 1, 1], [], []>} : vector<8x64xf32>, vector<64x8xf32>, vector<8x8xf32> -> vector<8x8xf32>
    %134 = vector.extract_strided_slice %13 {offsets = [0, 48], sizes = [8, 8], strides = [1, 1]} : vector<8x64xf32> to vector<8x8xf32>
    %cst_66 = arith.constant dense<0.000000e+00> : vector<8x64xf32>
    %135 = tpu.matmul %134, %21, %cst_66 {dimension_numbers = #tpu.dot_dimension_numbers<[1], [0], [0], [1], [0, 0, 1, 1], [], []>} : vector<8x8xf32>, vector<8x64xf32>, vector<8x64xf32> -> vector<8x64xf32>
    %136 = arith.mulf %135, %15 : vector<8x64xf32>
    %cst_67 = arith.constant dense<0.000000e+00> : vector<8x8xf32>
    %137 = tpu.matmul %136, %22, %cst_67 {dimension_numbers = #tpu.dot_dimension_numbers<[1], [0], [0], [1], [0, 0, 1, 1], [], []>} : vector<8x64xf32>, vector<64x8xf32>, vector<8x8xf32> -> vector<8x8xf32>
    %138 = arith.addf %137, %25 : vector<8x8xf32>
    %cst_68 = arith.constant dense<0xFF800000> : vector<8xf32>
    %139 = vector.multi_reduction <maximumf>, %138, %cst_68 [1] : vector<8x8xf32> to vector<8xf32>
    %140 = vector.shape_cast %139 : vector<8xf32> to vector<8x1xf32>
    %141 = vector.broadcast %140 : vector<8x1xf32> to vector<8x8xf32>
    %142 = arith.subf %138, %141 : vector<8x8xf32>
    %143 = math.exp %142 : vector<8x8xf32>
    %cst_69 = arith.constant dense<0.000000e+00> : vector<8xf32>
    %144 = vector.multi_reduction <add>, %143, %cst_69 [1] : vector<8x8xf32> to vector<8xf32>
    %145 = vector.shape_cast %144 : vector<8xf32> to vector<8x1xf32>
    %146 = tpu.reciprocal %145 {approx = true} : vector<8x1xf32> -> vector<8x1xf32>
    %147 = vector.broadcast %146 : vector<8x1xf32> to vector<8x8xf32>
    %148 = arith.mulf %143, %147 : vector<8x8xf32>
    %cst_70 = arith.constant dense<0.000000e+00> : vector<8x64xf32>
    %149 = tpu.matmul %148, %23, %cst_70 {dimension_numbers = #tpu.dot_dimension_numbers<[1], [0], [0], [1], [0, 0, 1, 1], [], []>} : vector<8x8xf32>, vector<8x64xf32>, vector<8x64xf32> -> vector<8x64xf32>
    %150 = arith.mulf %149, %20 : vector<8x64xf32>
    %cst_71 = arith.constant dense<0.000000e+00> : vector<8x8xf32>
    %151 = tpu.matmul %150, %24, %cst_71 {dimension_numbers = #tpu.dot_dimension_numbers<[1], [0], [0], [1], [0, 0, 1, 1], [], []>} : vector<8x64xf32>, vector<64x8xf32>, vector<8x8xf32> -> vector<8x8xf32>
    %152 = vector.extract_strided_slice %13 {offsets = [0, 56], sizes = [8, 8], strides = [1, 1]} : vector<8x64xf32> to vector<8x8xf32>
    %cst_72 = arith.constant dense<0.000000e+00> : vector<8x64xf32>
    %153 = tpu.matmul %152, %21, %cst_72 {dimension_numbers = #tpu.dot_dimension_numbers<[1], [0], [0], [1], [0, 0, 1, 1], [], []>} : vector<8x8xf32>, vector<8x64xf32>, vector<8x64xf32> -> vector<8x64xf32>
    %154 = arith.mulf %153, %15 : vector<8x64xf32>
    %cst_73 = arith.constant dense<0.000000e+00> : vector<8x8xf32>
    %155 = tpu.matmul %154, %22, %cst_73 {dimension_numbers = #tpu.dot_dimension_numbers<[1], [0], [0], [1], [0, 0, 1, 1], [], []>} : vector<8x64xf32>, vector<64x8xf32>, vector<8x8xf32> -> vector<8x8xf32>
    %156 = arith.addf %155, %25 : vector<8x8xf32>
    %cst_74 = arith.constant dense<0xFF800000> : vector<8xf32>
    %157 = vector.multi_reduction <maximumf>, %156, %cst_74 [1] : vector<8x8xf32> to vector<8xf32>
    %158 = vector.shape_cast %157 : vector<8xf32> to vector<8x1xf32>
    %159 = vector.broadcast %158 : vector<8x1xf32> to vector<8x8xf32>
    %160 = arith.subf %156, %159 : vector<8x8xf32>
    %161 = math.exp %160 : vector<8x8xf32>
    %cst_75 = arith.constant dense<0.000000e+00> : vector<8xf32>
    %162 = vector.multi_reduction <add>, %161, %cst_75 [1] : vector<8x8xf32> to vector<8xf32>
    %163 = vector.shape_cast %162 : vector<8xf32> to vector<8x1xf32>
    %164 = tpu.reciprocal %163 {approx = true} : vector<8x1xf32> -> vector<8x1xf32>
    %165 = vector.broadcast %164 : vector<8x1xf32> to vector<8x8xf32>
    %166 = arith.mulf %161, %165 : vector<8x8xf32>
    %cst_76 = arith.constant dense<0.000000e+00> : vector<8x64xf32>
    %167 = tpu.matmul %166, %23, %cst_76 {dimension_numbers = #tpu.dot_dimension_numbers<[1], [0], [0], [1], [0, 0, 1, 1], [], []>} : vector<8x8xf32>, vector<8x64xf32>, vector<8x64xf32> -> vector<8x64xf32>
    %168 = arith.mulf %167, %20 : vector<8x64xf32>
    %cst_77 = arith.constant dense<0.000000e+00> : vector<8x8xf32>
    %169 = tpu.matmul %168, %24, %cst_77 {dimension_numbers = #tpu.dot_dimension_numbers<[1], [0], [0], [1], [0, 0, 1, 1], [], []>} : vector<8x64xf32>, vector<64x8xf32>, vector<8x8xf32> -> vector<8x8xf32>
    %170 = tpu.concatenate %43, %61, %79, %97, %115, %133, %151, %169 in 1 : vector<8x8xf32>, vector<8x8xf32>, vector<8x8xf32>, vector<8x8xf32>, vector<8x8xf32>, vector<8x8xf32>, vector<8x8xf32>, vector<8x8xf32> -> vector<8x64xf32>
    %c0_78 = arith.constant 0 : index
    %c0_79 = arith.constant 0 : index
    %c0_80 = arith.constant 0 : index
    %171 = vector.load %arg14[%c0_78, %c0_79, %c0_80] : memref<1x8x64xf32, #tpu.memory_space<vmem>>, vector<1x8x64xf32>
    %172 = vector.shape_cast %171 : vector<1x8x64xf32> to vector<8x64xf32>
    %173 = vector.shape_cast %170 : vector<8x64xf32> to vector<1x8x64xf32>
    tpu.vector_store %arg14[%c0_78, %c0_79, %c0_80], %173 {strides = array<i32>} : memref<1x8x64xf32, #tpu.memory_space<vmem>>, vector<1x8x64xf32>,
    %c0_81 = arith.constant 0 : index
    %c0_82 = arith.constant 0 : index
    %c0_83 = arith.constant 0 : index
    %174 = vector.load %arg15[%c0_81, %c0_82, %c0_83] : memref<1x8x64xf32, #tpu.memory_space<vmem>>, vector<1x8x64xf32>
    %175 = vector.shape_cast %174 : vector<1x8x64xf32> to vector<8x64xf32>
    %176 = vector.shape_cast %13 : vector<8x64xf32> to vector<1x8x64xf32>
    tpu.vector_store %arg15[%c0_81, %c0_82, %c0_83], %176 {strides = array<i32>} : memref<1x8x64xf32, #tpu.memory_space<vmem>>, vector<1x8x64xf32>,
    return
  }
  func.func @transform_0(%arg0: i32) -> (i32, i32, i32) {
    %c0_i32 = arith.constant 0 : i32
    %c0_i32_0 = arith.constant 0 : i32
    %c0_i32_1 = arith.constant 0 : i32
    return %arg0, %c0_i32, %c0_i32_0 : i32, i32, i32
  }
  func.func @transform_1(%arg0: i32) -> (i32, i32, i32) {
    %c0_i32 = arith.constant 0 : i32
    %c0_i32_0 = arith.constant 0 : i32
    %c0_i32_1 = arith.constant 0 : i32
    return %arg0, %c0_i32, %c0_i32_0 : i32, i32, i32
  }
  func.func @transform_2(%arg0: i32) -> (i32, i32, i32) {
    %c0_i32 = arith.constant 0 : i32
    %c0_i32_0 = arith.constant 0 : i32
    %c0_i32_1 = arith.constant 0 : i32
    return %arg0, %c0_i32, %c0_i32_0 : i32, i32, i32
  }
  func.func @transform_3(%arg0: i32) -> (i32, i32) {
    %c0_i32 = arith.constant 0 : i32
    %c0_i32_0 = arith.constant 0 : i32
    %c0_i32_1 = arith.constant 0 : i32
    return %c0_i32, %c0_i32_0 : i32, i32
  }
  func.func @transform_4(%arg0: i32) -> (i32, i32) {
    %c0_i32 = arith.constant 0 : i32
    %c0_i32_0 = arith.constant 0 : i32
    %c0_i32_1 = arith.constant 0 : i32
    return %c0_i32, %c0_i32_0 : i32, i32
  }
  func.func @transform_5(%arg0: i32) -> (i32, i32) {
    %c0_i32 = arith.constant 0 : i32
    %c0_i32_0 = arith.constant 0 : i32
    %c0_i32_1 = arith.constant 0 : i32
    return %c0_i32, %c0_i32_0 : i32, i32
  }
  func.func @transform_6(%arg0: i32) -> (i32, i32) {
    %c0_i32 = arith.constant 0 : i32
    %c0_i32_0 = arith.constant 0 : i32
    %c0_i32_1 = arith.constant 0 : i32
    return %c0_i32, %c0_i32_0 : i32, i32
  }
  func.func @transform_7(%arg0: i32) -> (i32, i32) {
    %c0_i32 = arith.constant 0 : i32
    %c0_i32_0 = arith.constant 0 : i32
    %c0_i32_1 = arith.constant 0 : i32
    return %c0_i32, %c0_i32_0 : i32, i32
  }
  func.func @transform_8(%arg0: i32) -> (i32, i32) {
    %c0_i32 = arith.constant 0 : i32
    %c0_i32_0 = arith.constant 0 : i32
    %c0_i32_1 = arith.constant 0 : i32
    return %c0_i32, %c0_i32_0 : i32, i32
  }
  func.func @transform_9(%arg0: i32) -> (i32, i32) {
    %c0_i32 = arith.constant 0 : i32
    %c0_i32_0 = arith.constant 0 : i32
    %c0_i32_1 = arith.constant 0 : i32
    return %c0_i32, %c0_i32_0 : i32, i32
  }
  func.func @transform_10(%arg0: i32) -> (i32, i32) {
    %c0_i32 = arith.constant 0 : i32
    %c0_i32_0 = arith.constant 0 : i32
    %c0_i32_1 = arith.constant 0 : i32
    return %c0_i32, %c0_i32_0 : i32, i32
  }
  func.func @transform_11(%arg0: i32) -> (i32, i32) {
    %c0_i32 = arith.constant 0 : i32
    %c0_i32_0 = arith.constant 0 : i32
    %c0_i32_1 = arith.constant 0 : i32
    return %c0_i32, %c0_i32_0 : i32, i32
  }
  func.func @transform_12(%arg0: i32) -> (i32, i32) {
    %c0_i32 = arith.constant 0 : i32
    %c0_i32_0 = arith.constant 0 : i32
    %c0_i32_1 = arith.constant 0 : i32
    return %c0_i32, %c0_i32_0 : i32, i32
  }
  func.func @transform_13(%arg0: i32) -> (i32, i32, i32) {
    %c0_i32 = arith.constant 0 : i32
    %c0_i32_0 = arith.constant 0 : i32
    %c0_i32_1 = arith.constant 0 : i32
    return %arg0, %c0_i32, %c0_i32_0 : i32, i32, i32
  }
  func.func @transform_14(%arg0: i32) -> (i32, i32, i32) {
    %c0_i32 = arith.constant 0 : i32
    %c0_i32_0 = arith.constant 0 : i32
    %c0_i32_1 = arith.constant 0 : i32
    return %arg0, %c0_i32, %c0_i32_0 : i32, i32, i32
  }
}

</mosaic_0001>

<llo_original>
// kernel: tpu_custom_call.1
$region0: #{tpu_custom_call.1}
  #allocation0 [shape = 'u32[]', space=smem, size = 0x4, offset = 0x4, fixed_abs, tag = 'smem constant byte address 0x4 - core index']
  #allocation1 [shape = 'u32[144,128]{1,0:T(1,128)}', space=vmem, size = 0x12000, scoped, tag = 'internal scratch']
  %s0 = inlined_call_operand.vmem [shape: f32[2,8,64], index: 0, kind: input, shape index: {}]
  %s1 = inlined_call_operand.vmem [shape: f32[2,8,64], index: 1, kind: input, shape index: {}]
  %s2 = inlined_call_operand.vmem [shape: f32[2,8,64], index: 2, kind: input, shape index: {}]
  %s3 = inlined_call_operand.vmem [shape: bf16[64,64], index: 3, kind: input, shape index: {}]
  %s4 = inlined_call_operand.hbm [shape: f32[1,64], index: 4, kind: input, shape index: {}]
  %s5 = inlined_call_operand.vmem [shape: bf16[64,64], index: 5, kind: input, shape index: {}]
  %s6 = inlined_call_operand.vmem [shape: bf16[64,64], index: 6, kind: input, shape index: {}]
  %s7 = inlined_call_operand.hbm [shape: f32[1,64], index: 7, kind: input, shape index: {}]
  %s8 = inlined_call_operand.hbm [shape: f32[8,64], index: 8, kind: input, shape index: {}]
  %s9 = inlined_call_operand.vmem [shape: f32[64,8], index: 9, kind: input, shape index: {}]
  %s10 = inlined_call_operand.hbm [shape: f32[8,64], index: 10, kind: input, shape index: {}]
  %s11 = inlined_call_operand.vmem [shape: f32[64,8], index: 11, kind: input, shape index: {}]
  %s12 = inlined_call_operand.hbm [shape: f32[8,8], index: 12, kind: input, shape index: {}]
  %s13 = inlined_call_operand.hbm [shape: f32[2,8,64], index: 13, kind: output, shape index: {0}]
  %s14 = inlined_call_operand.hbm [shape: f32[2,8,64], index: 14, kind: output, shape index: {1}]
  %15 = xla_tuple %s13, %s14
  %s16 = sld [smem:[#allocation0]]
  $region113: #{tpu_custom_call.1} parent=0
    _
  %s18 = ssub.s32 1, %s16
  %s19 = scalar_select 0, %s18, %s16
  $region1: #{tpu_custom_call.1} parent=0
    #allocation2 [shape = 'u8[512]{0}', space=vmem, size = 0x400, scoped, tag = 'input window, operand 4, single buffered']
    #allocation3 [shape = 's32[2]{0}', space=sflag, size = 0x8, scoped, tag = 'scoped memory for tpu_custom_call.1']
    #allocation4 [shape = 's32[2]{0}', space=sflag, size = 0x8, scoped, tag = 'scoped memory for tpu_custom_call.1']
    #allocation5 [shape = 'u8[512]{0}', space=vmem, size = 0x400, scoped, tag = 'input window, operand 7, single buffered']
    #allocation6 [shape = 's32[1]{0}', space=sflag, size = 0x4, scoped, tag = 'scoped memory for tpu_custom_call.1']
    #allocation7 [shape = 'u8[4096]{0}', space=vmem, size = 0x1000, scoped, tag = 'input window, operand 8, single buffered']
    #allocation8 [shape = 'u8[4096]{0}', space=vmem, size = 0x1000, scoped, tag = 'input window, operand 10, single buffered']
    #allocation9 [shape = 's32[1]{0}', space=sflag, size = 0x4, scoped, tag = 'scoped memory for tpu_custom_call.1']
    #allocation10 [shape = 'u8[4096]{0}', space=vmem, size = 0x1000, scoped, tag = 'input window, operand 12, single buffered']
    #allocation11 [shape = 'u8[8192]{0}', space=vmem, size = 0x2000, scoped, tag = 'output window, operand 0']
    #allocation12 [shape = 'u8[8192]{0}', space=vmem, size = 0x2000, scoped, tag = 'output window, operand 1']
    #allocation13 [shape = 's32[2]{0}', space=sflag, size = 0x8, scoped, tag = 'scoped memory for tpu_custom_call.1']
    %20 = vsyncpa [#allocation3], 0
    %21 = vsyncpa [#allocation6], 0
    %22 = vsyncpa [#allocation9], 0
    %23 = vsyncpa [#allocation4], 0
    %s24 = scalar_lea.sflag [#allocation4], 1
    %25 = vsyncpa %s24, 0
    %26 = vsyncpa [#allocation13], 0
    %s27 = scalar_lea.sflag [#allocation13], 1
    %28 = vsyncpa %s27, 0
    loop: start=0, step=1, limit=4
    $region2: #{tpu_custom_call.1} parent=1 // loop_pre_header
      _
    $region3: #{tpu_custom_call.1} parent=1 // loop_header
      %s30 = sphi 0, %s34
      %p31 = scmp.ge.s32.totalorder %s30, 4
      %s40 = sphi 0, %s42
      %s43 = sphi 0, %s40
      %s44 = sphi 0, %s43
      %s60 = sphi 0, %s44
      %s66 = sphi 0, %s68
      %s69 = sphi 0, %s66
      %s70 = sphi 0, %s69
      %s86 = sphi 0, %s70
      %s92 = sphi 0, %s94
      %s95 = sphi 0, %s92
      %s96 = sphi 0, %s95
      %s112 = sphi 0, %s96
      %s116 = sphi 0, %s116
      %s118 = sphi 0, %s116
      %s119 = sphi 0, %s118
      %s133 = sphi 0, %s119
      %s137 = sphi 0, %s137
      %s139 = sphi 0, %s137
      %s140 = sphi 0, %s139
      %s154 = sphi 0, %s140
      %s158 = sphi 0, %s158
      %s160 = sphi 0, %s158
      %s161 = sphi 0, %s160
      %s175 = sphi 0, %s161
      %s179 = sphi 0, %s179
      %s181 = sphi 0, %s179
      %s182 = sphi 0, %s181
      %s196 = sphi 0, %s182
      %s200 = sphi 0, %s200
      %s202 = sphi 0, %s200
      %s203 = sphi 0, %s202
      %s217 = sphi 0, %s203
      %s221 = sphi 0, %s221
      %s223 = sphi 0, %s221
      %s224 = sphi 0, %s223
      %s238 = sphi 0, %s224
      %s242 = sphi 0, %s242
      %s244 = sphi 0, %s242
      %s245 = sphi 0, %s244
      %s259 = sphi 0, %s245
      %s263 = sphi 0, %s263
      %s265 = sphi 0, %s263
      %s266 = sphi 0, %s265
      %s280 = sphi 0, %s266
      %s284 = sphi 0, %s284
      %s286 = sphi 0, %s284
      %s287 = sphi 0, %s286
      %s301 = sphi 0, %s287
      %s305 = sphi 0, %s305
      %s307 = sphi 0, %s305
      %s308 = sphi 0, %s307
      %s322 = sphi 0, %s308
      %s328 = sphi 0, %s330
      %s331 = sphi 0, %s328
      %s332 = sphi 0, %s331
      %s348 = sphi 0, %s332
      %s354 = sphi 0, %s356
      %s357 = sphi 0, %s354
      %s358 = sphi 0, %s357
      %s374 = sphi 0, %s358
    $region4: #{tpu_custom_call.1} parent=1 // loop_header_branch
      %33 = sbr.rel (%p31) target = $region8
    $region5: #{tpu_custom_call.1} parent=1 // loop_body
      %s35 = ssub.s32 %s30, 1
      %s36 = ssub.s32 %s30, 2
      %s37 = sadd.s32 %s30, 1
      %s38 = ssub.s32 %s30, %s37
      %p39 = scmp.eq.s32.totalorder %s38, 0
      %s41 = sadd.s32 %s40, 1
      %s42 = scalar_select %p39, %s40, %s41
      %p45 = pneg %p39
      %p46 = scmp.eq.s32.totalorder %s30, 1
      %p47 = por %p45, %p46
      %p48 = scmp.ne.s32.totalorder %s40, %s43
      %p49 = scmp.eq.s32.totalorder %s30, 0
      %p50 = por %p48, %p49
      %p51 = scmp.ne.s32.totalorder %s40, %s43
      %p52 = scmp.eq.s32.totalorder %s35, 1
      %p53 = por %p51, %p52
      %p54 = scmp.ne.s32.totalorder %s43, %s44
      %p55 = scmp.eq.s32.totalorder %s35, 0
      %p56 = por %p54, %p55
      %p57 = scmp.ne.s32.totalorder %s43, %s44
      %p58 = scmp.eq.s32.totalorder %s36, 1
      %p59 = por %p57, %p58
      %p61 = scmp.ne.s32.totalorder %s44, %s60
      %p62 = scmp.eq.s32.totalorder %s36, 0
      %p63 = por %p61, %p62
      %s64 = ssub.s32 %s30, %s37
      %p65 = scmp.eq.s32.totalorder %s64, 0
      %s67 = sadd.s32 %s66, 1
      %s68 = scalar_select %p65, %s66, %s67
      %p71 = pneg %p65
      %p72 = scmp.eq.s32.totalorder %s30, 1
      %p73 = por %p71, %p72
      %p74 = scmp.ne.s32.totalorder %s66, %s69
      %p75 = scmp.eq.s32.totalorder %s30, 0
      %p76 = por %p74, %p75
      %p77 = scmp.ne.s32.totalorder %s66, %s69
      %p78 = scmp.eq.s32.totalorder %s35, 1
      %p79 = por %p77, %p78
      %p80 = scmp.ne.s32.totalorder %s69, %s70
      %p81 = scmp.eq.s32.totalorder %s35, 0
      %p82 = por %p80, %p81
      %p83 = scmp.ne.s32.totalorder %s69, %s70
      %p84 = scmp.eq.s32.totalorder %s36, 1
      %p85 = por %p83, %p84
      %p87 = scmp.ne.s32.totalorder %s70, %s86
      %p88 = scmp.eq.s32.totalorder %s36, 0
      %p89 = por %p87, %p88
      %s90 = ssub.s32 %s30, %s37
      %p91 = scmp.eq.s32.totalorder %s90, 0
      %s93 = sadd.s32 %s92, 1
      %s94 = scalar_select %p91, %s92, %s93
      %p97 = pneg %p91
      %p98 = scmp.eq.s32.totalorder %s30, 1
      %p99 = por %p97, %p98
      %p100 = scmp.ne.s32.totalorder %s92, %s95
      %p101 = scmp.eq.s32.totalorder %s30, 0
      %p102 = por %p100, %p101
      %p103 = scmp.ne.s32.totalorder %s92, %s95
      %p104 = scmp.eq.s32.totalorder %s35, 1
      %p105 = por %p103, %p104
      %p106 = scmp.ne.s32.totalorder %s95, %s96
      %p107 = scmp.eq.s32.totalorder %s35, 0
      %p108 = por %p106, %p107
      %p109 = scmp.ne.s32.totalorder %s95, %s96
      %p110 = scmp.eq.s32.totalorder %s36, 1
      %p111 = por %p109, %p110
      %p113 = scmp.ne.s32.totalorder %s96, %s112
      %p114 = scmp.eq.s32.totalorder %s36, 0
      %p115 = por %p113, %p114
      %s117 = sadd.s32 %s116, 1
      %p120 = scmp.eq.s32.totalorder %s30, 1
      %p121 = scmp.ne.s32.totalorder %s116, %s118
      %p122 = scmp.eq.s32.totalorder %s30, 0
      %p123 = por %p121, %p122
      %p124 = scmp.ne.s32.totalorder %s116, %s118
      %p125 = scmp.eq.s32.totalorder %s35, 1
      %p126 = por %p124, %p125
      %p127 = scmp.ne.s32.totalorder %s118, %s119
      %p128 = scmp.eq.s32.totalorder %s35, 0
      %p129 = por %p127, %p128
      %p130 = scmp.ne.s32.totalorder %s118, %s119
      %p131 = scmp.eq.s32.totalorder %s36, 1
      %p132 = por %p130, %p131
      %p134 = scmp.ne.s32.totalorder %s119, %s133
      %p135 = scmp.eq.s32.totalorder %s36, 0
      %p136 = por %p134, %p135
      %s138 = sadd.s32 %s137, 1
      %p141 = scmp.eq.s32.totalorder %s30, 1
      %p142 = scmp.ne.s32.totalorder %s137, %s139
      %p143 = scmp.eq.s32.totalorder %s30, 0
      %p144 = por %p142, %p143
      %p145 = scmp.ne.s32.totalorder %s137, %s139
      %p146 = scmp.eq.s32.totalorder %s35, 1
      %p147 = por %p145, %p146
      %p148 = scmp.ne.s32.totalorder %s139, %s140
      %p149 = scmp.eq.s32.totalorder %s35, 0
      %p150 = por %p148, %p149
      %p151 = scmp.ne.s32.totalorder %s139, %s140
      %p152 = scmp.eq.s32.totalorder %s36, 1
      %p153 = por %p151, %p152
      %p155 = scmp.ne.s32.totalorder %s140, %s154
      %p156 = scmp.eq.s32.totalorder %s36, 0
      %p157 = por %p155, %p156
      %s159 = sadd.s32 %s158, 1
      %p162 = scmp.eq.s32.totalorder %s30, 1
      %p163 = scmp.ne.s32.totalorder %s158, %s160
      %p164 = scmp.eq.s32.totalorder %s30, 0
      %p165 = por %p163, %p164
      %p166 = scmp.ne.s32.totalorder %s158, %s160
      %p167 = scmp.eq.s32.totalorder %s35, 1
      %p168 = por %p166, %p167
      %p169 = scmp.ne.s32.totalorder %s160, %s161
      %p170 = scmp.eq.s32.totalorder %s35, 0
      %p171 = por %p169, %p170
      %p172 = scmp.ne.s32.totalorder %s160, %s161
      %p173 = scmp.eq.s32.totalorder %s36, 1
      %p174 = por %p172, %p173
      %p176 = scmp.ne.s32.totalorder %s161, %s175
      %p177 = scmp.eq.s32.totalorder %s36, 0
      %p178 = por %p176, %p177
      %s180 = sadd.s32 %s179, 1
      %p183 = scmp.eq.s32.totalorder %s30, 1
      %p184 = scmp.ne.s32.totalorder %s179, %s181
      %p185 = scmp.eq.s32.totalorder %s30, 0
      %p186 = por %p184, %p185
      %p187 = scmp.ne.s32.totalorder %s179, %s181
      %p188 = scmp.eq.s32.totalorder %s35, 1
      %p189 = por %p187, %p188
      %p190 = scmp.ne.s32.totalorder %s181, %s182
      %p191 = scmp.eq.s32.totalorder %s35, 0
      %p192 = por %p190, %p191
      %p193 = scmp.ne.s32.totalorder %s181, %s182
      %p194 = scmp.eq.s32.totalorder %s36, 1
      %p195 = por %p193, %p194
      %p197 = scmp.ne.s32.totalorder %s182, %s196
      %p198 = scmp.eq.s32.totalorder %s36, 0
      %p199 = por %p197, %p198
      %s201 = sadd.s32 %s200, 1
      %p204 = scmp.eq.s32.totalorder %s30, 1
      %p205 = scmp.ne.s32.totalorder %s200, %s202
      %p206 = scmp.eq.s32.totalorder %s30, 0
      %p207 = por %p205, %p206
      %p208 = scmp.ne.s32.totalorder %s200, %s202
      %p209 = scmp.eq.s32.totalorder %s35, 1
      %p210 = por %p208, %p209
      %p211 = scmp.ne.s32.totalorder %s202, %s203
      %p212 = scmp.eq.s32.totalorder %s35, 0
      %p213 = por %p211, %p212
      %p214 = scmp.ne.s32.totalorder %s202, %s203
      %p215 = scmp.eq.s32.totalorder %s36, 1
      %p216 = por %p214, %p215
      %p218 = scmp.ne.s32.totalorder %s203, %s217
      %p219 = scmp.eq.s32.totalorder %s36, 0
      %p220 = por %p218, %p219
      %s222 = sadd.s32 %s221, 1
      %p225 = scmp.eq.s32.totalorder %s30, 1
      %p226 = scmp.ne.s32.totalorder %s221, %s223
      %p227 = scmp.eq.s32.totalorder %s30, 0
      %p228 = por %p226, %p227
      %p229 = scmp.ne.s32.totalorder %s221, %s223
      %p230 = scmp.eq.s32.totalorder %s35, 1
      %p231 = por %p229, %p230
      %p232 = scmp.ne.s32.totalorder %s223, %s224
      %p233 = scmp.eq.s32.totalorder %s35, 0
      %p234 = por %p232, %p233
      %p235 = scmp.ne.s32.totalorder %s223, %s224
      %p236 = scmp.eq.s32.totalorder %s36, 1
      %p237 = por %p235, %p236
      %p239 = scmp.ne.s32.totalorder %s224, %s238
      %p240 = scmp.eq.s32.totalorder %s36, 0
      %p241 = por %p239, %p240
      %s243 = sadd.s32 %s242, 1
      %p246 = scmp.eq.s32.totalorder %s30, 1
      %p247 = scmp.ne.s32.totalorder %s242, %s244
      %p248 = scmp.eq.s32.totalorder %s30, 0
      %p249 = por %p247, %p248
      %p250 = scmp.ne.s32.totalorder %s242, %s244
      %p251 = scmp.eq.s32.totalorder %s35, 1
      %p252 = por %p250, %p251
      %p253 = scmp.ne.s32.totalorder %s244, %s245
      %p254 = scmp.eq.s32.totalorder %s35, 0
      %p255 = por %p253, %p254
      %p256 = scmp.ne.s32.totalorder %s244, %s245
      %p257 = scmp.eq.s32.totalorder %s36, 1
      %p258 = por %p256, %p257
      %p260 = scmp.ne.s32.totalorder %s245, %s259
      %p261 = scmp.eq.s32.totalorder %s36, 0
      %p262 = por %p260, %p261
      %s264 = sadd.s32 %s263, 1
      %p267 = scmp.eq.s32.totalorder %s30, 1
      %p268 = scmp.ne.s32.totalorder %s263, %s265
      %p269 = scmp.eq.s32.totalorder %s30, 0
      %p270 = por %p268, %p269
      %p271 = scmp.ne.s32.totalorder %s263, %s265
      %p272 = scmp.eq.s32.totalorder %s35, 1
      %p273 = por %p271, %p272
      %p274 = scmp.ne.s32.totalorder %s265, %s266
      %p275 = scmp.eq.s32.totalorder %s35, 0
      %p276 = por %p274, %p275
      %p277 = scmp.ne.s32.totalorder %s265, %s266
      %p278 = scmp.eq.s32.totalorder %s36, 1
      %p279 = por %p277, %p278
      %p281 = scmp.ne.s32.totalorder %s266, %s280
      %p282 = scmp.eq.s32.totalorder %s36, 0
      %p283 = por %p281, %p282
      %s285 = sadd.s32 %s284, 1
      %p288 = scmp.eq.s32.totalorder %s30, 1
      %p289 = scmp.ne.s32.totalorder %s284, %s286
      %p290 = scmp.eq.s32.totalorder %s30, 0
      %p291 = por %p289, %p290
      %p292 = scmp.ne.s32.totalorder %s284, %s286
      %p293 = scmp.eq.s32.totalorder %s35, 1
      %p294 = por %p292, %p293
      %p295 = scmp.ne.s32.totalorder %s286, %s287
      %p296 = scmp.eq.s32.totalorder %s35, 0
      %p297 = por %p295, %p296
      %p298 = scmp.ne.s32.totalorder %s286, %s287
      %p299 = scmp.eq.s32.totalorder %s36, 1
      %p300 = por %p298, %p299
      %p302 = scmp.ne.s32.totalorder %s287, %s301
      %p303 = scmp.eq.s32.totalorder %s36, 0
      %p304 = por %p302, %p303
      %s306 = sadd.s32 %s305, 1
      %p309 = scmp.eq.s32.totalorder %s30, 1
      %p310 = scmp.ne.s32.totalorder %s305, %s307
      %p311 = scmp.eq.s32.totalorder %s30, 0
      %p312 = por %p310, %p311
      %p313 = scmp.ne.s32.totalorder %s305, %s307
      %p314 = scmp.eq.s32.totalorder %s35, 1
      %p315 = por %p313, %p314
      %p316 = scmp.ne.s32.totalorder %s307, %s308
      %p317 = scmp.eq.s32.totalorder %s35, 0
      %p318 = por %p316, %p317
      %p319 = scmp.ne.s32.totalorder %s307, %s308
      %p320 = scmp.eq.s32.totalorder %s36, 1
      %p321 = por %p319, %p320
      %p323 = scmp.ne.s32.totalorder %s308, %s322
      %p324 = scmp.eq.s32.totalorder %s36, 0
      %p325 = por %p323, %p324
      %s326 = ssub.s32 %s30, %s37
      %p327 = scmp.eq.s32.totalorder %s326, 0
      %s329 = sadd.s32 %s328, 1
      %s330 = scalar_select %p327, %s328, %s329
      %p333 = pneg %p327
      %p334 = scmp.eq.s32.totalorder %s30, 1
      %p335 = por %p333, %p334
      %p336 = scmp.ne.s32.totalorder %s328, %s331
      %p337 = scmp.eq.s32.totalorder %s30, 0
      %p338 = por %p336, %p337
      %p339 = scmp.ne.s32.totalorder %s328, %s331
      %p340 = scmp.eq.s32.totalorder %s35, 1
      %p341 = por %p339, %p340
      %p342 = scmp.ne.s32.totalorder %s331, %s332
      %p343 = scmp.eq.s32.totalorder %s35, 0
      %p344 = por %p342, %p343
      %p345 = scmp.ne.s32.totalorder %s331, %s332
      %p346 = scmp.eq.s32.totalorder %s36, 1
      %p347 = por %p345, %p346
      %p349 = scmp.ne.s32.totalorder %s332, %s348
      %p350 = scmp.eq.s32.totalorder %s36, 0
      %p351 = por %p349, %p350
      %s352 = ssub.s32 %s30, %s37
      %p353 = scmp.eq.s32.totalorder %s352, 0
      %s355 = sadd.s32 %s354, 1
      %s356 = scalar_select %p353, %s354, %s355
      %p359 = pneg %p353
      %p360 = scmp.eq.s32.totalorder %s30, 1
      %p361 = por %p359, %p360
      %p362 = scmp.ne.s32.totalorder %s354, %s357
      %p363 = scmp.eq.s32.totalorder %s30, 0
      %p364 = por %p362, %p363
      %p365 = scmp.ne.s32.totalorder %s354, %s357
      %p366 = scmp.eq.s32.totalorder %s35, 1
      %p367 = por %p365, %p366
      %p368 = scmp.ne.s32.totalorder %s357, %s358
      %p369 = scmp.eq.s32.totalorder %s35, 0
      %p370 = por %p368, %p369
      %p371 = scmp.ne.s32.totalorder %s357, %s358
      %p372 = scmp.eq.s32.totalorder %s36, 1
      %p373 = por %p371, %p372
      %p375 = scmp.ne.s32.totalorder %s358, %s374
      %p376 = scmp.eq.s32.totalorder %s36, 0
      %p377 = por %p375, %p376
      %p378 = scmp.le.s32.totalorder 1, %s30
      %p379 = scmp.lt.s32.totalorder %s30, 3
      %p380 = pnand %p378, %p379
      %p381 = pneg %p380
      // Predicated region
      $region9: #{tpu_custom_call.1} parent=5 // pred_check
        _
      $region10: #{tpu_custom_call.1} parent=5 // pred_check_branch
        %383 = sbr.rel (%p380) target = $region12
      $region11: #{tpu_custom_call.1} parent=5 // pred_region
        %s384 = ssub.s32 %s30, 1
        // Predicated region
        $region13: #{tpu_custom_call.1} parent=11 // pred_check
          %p385 = pneg %p129
        $region14: #{tpu_custom_call.1} parent=11 // pred_check_branch
          %387 = sbr.rel (%p385) target = $region16
        $region15: #{tpu_custom_call.1} parent=11 // pred_region
          _
        $region16: #{tpu_custom_call.1} parent=11 // pred_fallthru
          _
        // Predicated region
        $region17: #{tpu_custom_call.1} parent=11 // pred_check
          %p388 = pneg %p150
        $region18: #{tpu_custom_call.1} parent=11 // pred_check_branch
          %390 = sbr.rel (%p388) target = $region20
        $region19: #{tpu_custom_call.1} parent=11 // pred_region
          %s392 = ssub.s32 16, 16
          %393 = vsyncadd [#allocation3], %s392
          %s395 = sshll.u32 [#allocation2], 4
          %s396 = int_to_ptr.vmem [resolvable:$true] %s395
          %398 = dma.hbm_to_vmem [thread:$0]  %s4, 16, %s396, [#allocation3]
        $region20: #{tpu_custom_call.1} parent=11 // pred_fallthru
          _
        // Predicated region
        $region21: #{tpu_custom_call.1} parent=11 // pred_check
          %p399 = pneg %p171
        $region22: #{tpu_custom_call.1} parent=11 // pred_check_branch
          %401 = sbr.rel (%p399) target = $region24
        $region23: #{tpu_custom_call.1} parent=11 // pred_region
          _
        $region24: #{tpu_custom_call.1} parent=11 // pred_fallthru
          _
        // Predicated region
        $region25: #{tpu_custom_call.1} parent=11 // pred_check
          %p402 = pneg %p192
        $region26: #{tpu_custom_call.1} parent=11 // pred_check_branch
          %404 = sbr.rel (%p402) target = $region28
        $region27: #{tpu_custom_call.1} parent=11 // pred_region
          _
        $region28: #{tpu_custom_call.1} parent=11 // pred_fallthru
          _
        // Predicated region
        $region29: #{tpu_custom_call.1} parent=11 // pred_check
          %p405 = pneg %p213
        $region30: #{tpu_custom_call.1} parent=11 // pred_check_branch
          %407 = sbr.rel (%p405) target = $region32
        $region31: #{tpu_custom_call.1} parent=11 // pred_region
          %s409 = ssub.s32 16, 16
          %410 = vsyncadd [#allocation6], %s409
          %s412 = sshll.u32 [#allocation5], 4
          %s413 = int_to_ptr.vmem [resolvable:$true] %s412
          %415 = dma.hbm_to_vmem [thread:$0]  %s7, 16, %s413, [#allocation6]
        $region32: #{tpu_custom_call.1} parent=11 // pred_fallthru
          _
        // Predicated region
        $region33: #{tpu_custom_call.1} parent=11 // pred_check
          %p416 = pneg %p234
        $region34: #{tpu_custom_call.1} parent=11 // pred_check_branch
          %418 = sbr.rel (%p416) target = $region36
        $region35: #{tpu_custom_call.1} parent=11 // pred_region
          %s420 = ssub.s32 128, 128
          %421 = vsyncadd [#allocation6], %s420
          %s423 = sshll.u32 [#allocation7], 4
          %s424 = int_to_ptr.vmem [resolvable:$true] %s423
          %426 = dma.hbm_to_vmem [thread:$0]  %s8, 128, %s424, [#allocation6]
        $region36: #{tpu_custom_call.1} parent=11 // pred_fallthru
          _
        // Predicated region
        $region37: #{tpu_custom_call.1} parent=11 // pred_check
          %p427 = pneg %p255
        $region38: #{tpu_custom_call.1} parent=11 // pred_check_branch
          %429 = sbr.rel (%p427) target = $region40
        $region39: #{tpu_custom_call.1} parent=11 // pred_region
          _
        $region40: #{tpu_custom_call.1} parent=11 // pred_fallthru
          _
        // Predicated region
        $region41: #{tpu_custom_call.1} parent=11 // pred_check
          %p430 = pneg %p276
        $region42: #{tpu_custom_call.1} parent=11 // pred_check_branch
          %432 = sbr.rel (%p430) target = $region44
        $region43: #{tpu_custom_call.1} parent=11 // pred_region
          %s434 = ssub.s32 128, 128
          %435 = vsyncadd [#allocation9], %s434
          %s437 = sshll.u32 [#allocation8], 4
          %s438 = int_to_ptr.vmem [resolvable:$true] %s437
          %440 = dma.hbm_to_vmem [thread:$0]  %s10, 128, %s438, [#allocation9]
        $region44: #{tpu_custom_call.1} parent=11 // pred_fallthru
          _
        // Predicated region
        $region45: #{tpu_custom_call.1} parent=11 // pred_check
          %p441 = pneg %p297
        $region46: #{tpu_custom_call.1} parent=11 // pred_check_branch
          %443 = sbr.rel (%p441) target = $region48
        $region47: #{tpu_custom_call.1} parent=11 // pred_region
          _
        $region48: #{tpu_custom_call.1} parent=11 // pred_fallthru
          _
        // Predicated region
        $region49: #{tpu_custom_call.1} parent=11 // pred_check
          %p444 = pneg %p318
        $region50: #{tpu_custom_call.1} parent=11 // pred_check_branch
          %446 = sbr.rel (%p444) target = $region52
        $region51: #{tpu_custom_call.1} parent=11 // pred_region
          %s448 = ssub.s32 128, 128
          %449 = vsyncadd [#allocation9], %s448
          %s451 = sshll.u32 [#allocation10], 4
          %s452 = int_to_ptr.vmem [resolvable:$true] %s451
          %454 = dma.hbm_to_vmem [thread:$0]  %s12, 128, %s452, [#allocation9]
        $region52: #{tpu_custom_call.1} parent=11 // pred_fallthru
          _
      $region12: #{tpu_custom_call.1} parent=5 // pred_fallthru
        _
      %p455 = scmp.lt.s32.totalorder %s30, 2
      // Predicated region
      $region53: #{tpu_custom_call.1} parent=5 // pred_check
        %p456 = pneg %p455
      $region54: #{tpu_custom_call.1} parent=5 // pred_check_branch
        %458 = sbr.rel (%p456) target = $region56
      $region55: #{tpu_custom_call.1} parent=5 // pred_region
        // Predicated region
        $region57: #{tpu_custom_call.1} parent=55 // pred_check
          %p459 = pneg %p50
        $region58: #{tpu_custom_call.1} parent=55 // pred_check_branch
          %461 = sbr.rel (%p459) target = $region60
        $region59: #{tpu_custom_call.1} parent=55 // pred_region
          %p462 = scmp.lt.s32.totalorder %s30, 1
          %s463 = scalar_select %p462, %s30, 1
          %s464 = smul.addr %s463, 8
          %s465 = scalar_lea.vmem %s0, %s464
        $region60: #{tpu_custom_call.1} parent=55 // pred_fallthru
          _
        // Predicated region
        $region61: #{tpu_custom_call.1} parent=55 // pred_check
          %p466 = pneg %p76
        $region62: #{tpu_custom_call.1} parent=55 // pred_check_branch
          %468 = sbr.rel (%p466) target = $region64
        $region63: #{tpu_custom_call.1} parent=55 // pred_region
          %p469 = scmp.lt.s32.totalorder %s30, 1
          %s470 = scalar_select %p469, %s30, 1
          %s471 = smul.addr %s470, 8
          %s472 = scalar_lea.vmem %s1, %s471
        $region64: #{tpu_custom_call.1} parent=55 // pred_fallthru
          _
        // Predicated region
        $region65: #{tpu_custom_call.1} parent=55 // pred_check
          %p473 = pneg %p102
        $region66: #{tpu_custom_call.1} parent=55 // pred_check_branch
          %475 = sbr.rel (%p473) target = $region68
        $region67: #{tpu_custom_call.1} parent=55 // pred_region
          %p476 = scmp.lt.s32.totalorder %s30, 1
          %s477 = scalar_select %p476, %s30, 1
          %s478 = smul.addr %s477, 8
          %s479 = scalar_lea.vmem %s2, %s478
        $region68: #{tpu_custom_call.1} parent=55 // pred_fallthru
          _
      $region56: #{tpu_custom_call.1} parent=5 // pred_fallthru
        _
      %p480 = scmp.le.s32.totalorder 1, %s30
      %p481 = scmp.lt.s32.totalorder %s30, 3
      %p482 = pnand %p480, %p481
      %p483 = pneg %p482
      // Predicated region
      $region69: #{tpu_custom_call.1} parent=5 // pred_check
        _
      $region70: #{tpu_custom_call.1} parent=5 // pred_check_branch
        %485 = sbr.rel (%p482) target = $region72
      $region71: #{tpu_custom_call.1} parent=5 // pred_region
        %s486 = ssub.s32 %s30, 1
        // Predicated region
        $region73: #{tpu_custom_call.1} parent=71 // pred_check
          %p487 = pneg %p150
        $region74: #{tpu_custom_call.1} parent=71 // pred_check_branch
          %489 = sbr.rel (%p487) target = $region76
        $region75: #{tpu_custom_call.1} parent=71 // pred_region
          %490 = dma.done [#allocation3], 16
        $region76: #{tpu_custom_call.1} parent=71 // pred_fallthru
          _
        // Predicated region
        $region77: #{tpu_custom_call.1} parent=71 // pred_check
          %p491 = pneg %p213
        $region78: #{tpu_custom_call.1} parent=71 // pred_check_branch
          %493 = sbr.rel (%p491) target = $region80
        $region79: #{tpu_custom_call.1} parent=71 // pred_region
          %494 = dma.done [#allocation6], 16
        $region80: #{tpu_custom_call.1} parent=71 // pred_fallthru
          _
        // Predicated region
        $region81: #{tpu_custom_call.1} parent=71 // pred_check
          %p495 = pneg %p234
        $region82: #{tpu_custom_call.1} parent=71 // pred_check_branch
          %497 = sbr.rel (%p495) target = $region84
        $region83: #{tpu_custom_call.1} parent=71 // pred_region
          %498 = dma.done [#allocation6], 128
        $region84: #{tpu_custom_call.1} parent=71 // pred_fallthru
          _
        // Predicated region
        $region85: #{tpu_custom_call.1} parent=71 // pred_check
          %p499 = pneg %p276
        $region86: #{tpu_custom_call.1} parent=71 // pred_check_branch
          %501 = sbr.rel (%p499) target = $region88
        $region87: #{tpu_custom_call.1} parent=71 // pred_region
          %502 = dma.done [#allocation9], 128
        $region88: #{tpu_custom_call.1} parent=71 // pred_fallthru
          _
        // Predicated region
        $region89: #{tpu_custom_call.1} parent=71 // pred_check
          %p503 = pneg %p318
        $region90: #{tpu_custom_call.1} parent=71 // pred_check_branch
          %505 = sbr.rel (%p503) target = $region92
        $region91: #{tpu_custom_call.1} parent=71 // pred_region
          %506 = dma.done [#allocation9], 128
        $region92: #{tpu_custom_call.1} parent=71 // pred_fallthru
          _
        %p507 = scmp.lt.s32.totalorder %s35, 1
        %s508 = scalar_select %p507, %s35, 1
        %s509 = smul.addr %s508, 8
        %s510 = scalar_lea.vmem %s0, %s509
        %p511 = pneg %p56
        %p512 = pneg %p53
        %p513 = scmp.lt.s32.totalorder %s35, 1
        %s514 = scalar_select %p513, %s35, 1
        %s515 = smul.addr %s514, 8
        %s516 = scalar_lea.vmem %s1, %s515
        %p517 = pneg %p82
        %p518 = pneg %p79
        %p519 = scmp.lt.s32.totalorder %s35, 1
        %s520 = scalar_select %p519, %s35, 1
        %s521 = smul.addr %s520, 8
        %s522 = scalar_lea.vmem %s2, %s521
        %p523 = pneg %p108
        %p524 = pneg %p105
        %p525 = pneg %p129
        %p526 = pneg %p126
        %p527 = pneg %p150
        %p528 = pneg %p147
        %p529 = pneg %p171
        %p530 = pneg %p168
        %p531 = pneg %p192
        %p532 = pneg %p189
        %p533 = pneg %p213
        %p534 = pneg %p210
        %p535 = pneg %p234
        %p536 = pneg %p231
        %p537 = pneg %p255
        %p538 = pneg %p252
        %p539 = pneg %p276
        %p540 = pneg %p273
        %p541 = pneg %p297
        %p542 = pneg %p294
        %p543 = pneg %p318
        %p544 = pneg %p315
        %p545 = pneg %p344
        %p546 = pneg %p341
        %s547 = sand.u32 %s331, 1
        %s548 = scalar_lea.sflag [#allocation4], %s547
        %s549 = sand.u32 %s331, 1
        %s550 = smul.addr %s549, 8
        %s551 = scalar_lea.vmem [#allocation11], %s550
        %p552 = pneg %p370
        %p553 = pneg %p367
        %s554 = sand.u32 %s357, 1
        %s555 = scalar_lea.sflag [#allocation13], %s554
        %s556 = sand.u32 %s357, 1
        %s557 = smul.addr %s556, 8
        %s558 = scalar_lea.vmem [#allocation12], %s557
        %p559 = scmp.lt.s32.totalorder %s35, 1
        %s560 = scalar_select %p559, %s35, 1
        %s561 = smul.addr %s560, 8
        %s562 = scalar_lea.vmem %s0, %s561
        %p563 = scmp.lt.s32.totalorder %s35, 1
        %s564 = scalar_select %p563, %s35, 1
        %s565 = smul.addr %s564, 8
        %s566 = scalar_lea.vmem %s1, %s565
        %p567 = scmp.lt.s32.totalorder %s35, 1
        %s568 = scalar_select %p567, %s35, 1
        %s569 = smul.addr %s568, 8
        %s570 = scalar_lea.vmem %s2, %s569
        %v572 = vld [vmem:[%s562] sm:$0xff]
        %v573 = vpack.c.bf16 %v572, %v572
        %v574 = vld [vmem:[%s566] sm:$0xff]
        %v575 = vpack.c.bf16 %v574, %v574
        %v576 = vld [vmem:[%s570] sm:$0xff]
        %v577 = vpack.c.bf16 %v576, %v576
        %v578 = vld [vmem:[%s3] sm:$0xf]
        %v579 = vld [vmem:[%s3 + $0x4] sm:$0xf]
        %v580 = vld [vmem:[%s3 + $0x8] sm:$0xf]
        %v581 = vld [vmem:[%s3 + $0xc] sm:$0xf]
        %v582 = vld [vmem:[%s3 + $0x10] sm:$0xf]
        %v583 = vld [vmem:[%s3 + $0x14] sm:$0xf]
        %v584 = vld [vmem:[%s3 + $0x18] sm:$0xf]
        %v585 = vld [vmem:[%s3 + $0x1c] sm:$0xf]
        %v586 = vld [vmem:[#allocation2] sm:$0x1]
        %v588 = vlaneseq
        %v589 = vshrl.u32 %v588, 7
        %v590 = vsub.s32 0, %v589
        %v591 = vrot.slane %v586, %v590
        %v601 = vunpack.c.l.b16 %v578
        %v602 = vunpack.c.l.b16 %v579
        %v603 = vunpack.c.l.b16 %v580
        %v604 = vunpack.c.l.b16 %v581
        %v605 = vunpack.c.l.b16 %v582
        %v606 = vunpack.c.l.b16 %v583
        %v607 = vunpack.c.l.b16 %v584
        %v608 = vunpack.c.l.b16 %v585
        %v609 = vpack.c.b16 %v602, %v601
        %v610 = vpack.c.b16 %v604, %v603
        %v611 = vpack.c.b16 %v606, %v605
        %v612 = vpack.c.b16 %v608, %v607
        %vm617 = vcmask 523264
        %v619 = vsel %vm617, %v573, 0
        %621 = vmatprep.subr.bf16.mxu0 0
        %622 = vmatpush1.bf16.msra.mxu0 0
        %623 = vmatprep.subr.bf16.mxu0 0
        %624 = vmatpush1.bf16.msra.mxu0 0
        %625 = vmatprep.subr.bf16.mxu0 0
        %626 = vmatpush1.bf16.msra.mxu0 0
        %627 = vmatprep.subr.bf16.mxu0 0
        %628 = vmatpush1.bf16.msra.mxu0 0
        %629 = vmatprep.subr.bf16.mxu0 0
        %630 = vmatpush1.bf16.msra.mxu0 %v612
        %631 = vmatprep.subr.bf16.mxu0 0
        %632 = vmatpush1.bf16.msra.mxu0 %v611
        %633 = vmatprep.subr.bf16.mxu0 0
        %634 = vmatpush1.bf16.msra.mxu0 %v610
        %635 = vmatprep.subr.bf16.mxu0 0
        %636 = vmatpush1.bf16.msra.mxu0 %v609
        %637 = vmatprep.subr.bf16.mxu0 0
        %638 = vmatpush2.bf16.msra.mxu0 0
        %639 = vmatprep.subr.bf16.mxu0 0
        %640 = vmatpush2.bf16.msra.mxu0 0
        %641 = vmatprep.subr.bf16.mxu0 0
        %642 = vmatpush2.bf16.msra.mxu0 0
        %643 = vmatprep.subr.bf16.mxu0 0
        %644 = vmatpush2.bf16.msra.mxu0 0
        %645 = vmatprep.subr.bf16.mxu0 0
        %646 = vmatpush2.bf16.msra.mxu0 0
        %647 = vmatprep.subr.bf16.mxu0 0
        %648 = vmatpush2.bf16.msra.mxu0 0
        %649 = vmatprep.subr.bf16.mxu0 0
        %650 = vmatpush2.bf16.msra.mxu0 0
        %651 = vmatprep.subr.bf16.mxu0 0
        %652 = vmatpush2.bf16.msra.mxu0 0
        %653 = vmatprep.mubr.bf16.mxu0 0
        %654 = vmatmul.mubr.bf16.gmra.mxu0 %v619
        %v655 = vpop.f32.mrf.mxu0
        %v656 = vadd.f32 %v591, %v655
        %v657 = vpop.f32.mrf.mxu0
        %v658 = vpop.f32.mrf.mxu0
        %v659 = vpop.f32.mrf.mxu0
        %660 = vdwg.mxu0
        %v661 = vld [vmem:[%s5] sm:$0xf]
        %v662 = vld [vmem:[%s5 + $0x4] sm:$0xf]
        %v663 = vld [vmem:[%s5 + $0x8] sm:$0xf]
        %v664 = vld [vmem:[%s5 + $0xc] sm:$0xf]
        %v665 = vld [vmem:[%s5 + $0x10] sm:$0xf]
        %v666 = vld [vmem:[%s5 + $0x14] sm:$0xf]
        %v667 = vld [vmem:[%s5 + $0x18] sm:$0xf]
        %v668 = vld [vmem:[%s5 + $0x1c] sm:$0xf]
        %v677 = vunpack.c.l.b16 %v661
        %v678 = vunpack.c.l.b16 %v662
        %v679 = vunpack.c.l.b16 %v663
        %v680 = vunpack.c.l.b16 %v664
        %v681 = vunpack.c.l.b16 %v665
        %v682 = vunpack.c.l.b16 %v666
        %v683 = vunpack.c.l.b16 %v667
        %v684 = vunpack.c.l.b16 %v668
        %v685 = vpack.c.b16 %v678, %v677
        %v686 = vpack.c.b16 %v680, %v679
        %v687 = vpack.c.b16 %v682, %v681
        %v688 = vpack.c.b16 %v684, %v683
        %v694 = vsel %vm617, %v575, 0
        %696 = vmatprep.subr.bf16.mxu0 0
        %697 = vmatpush1.bf16.msra.mxu0 0
        %698 = vmatprep.subr.bf16.mxu0 0
        %699 = vmatpush1.bf16.msra.mxu0 0
        %700 = vmatprep.subr.bf16.mxu0 0
        %701 = vmatpush1.bf16.msra.mxu0 0
        %702 = vmatprep.subr.bf16.mxu0 0
        %703 = vmatpush1.bf16.msra.mxu0 0
        %704 = vmatprep.subr.bf16.mxu0 0
        %705 = vmatpush1.bf16.msra.mxu0 %v688
        %706 = vmatprep.subr.bf16.mxu0 0
        %707 = vmatpush1.bf16.msra.mxu0 %v687
        %708 = vmatprep.subr.bf16.mxu0 0
        %709 = vmatpush1.bf16.msra.mxu0 %v686
        %710 = vmatprep.subr.bf16.mxu0 0
        %711 = vmatpush1.bf16.msra.mxu0 %v685
        %712 = vmatprep.subr.bf16.mxu0 0
        %713 = vmatpush2.bf16.msra.mxu0 0
        %714 = vmatprep.subr.bf16.mxu0 0
        %715 = vmatpush2.bf16.msra.mxu0 0
        %716 = vmatprep.subr.bf16.mxu0 0
        %717 = vmatpush2.bf16.msra.mxu0 0
        %718 = vmatprep.subr.bf16.mxu0 0
        %719 = vmatpush2.bf16.msra.mxu0 0
        %720 = vmatprep.subr.bf16.mxu0 0
        %721 = vmatpush2.bf16.msra.mxu0 0
        %722 = vmatprep.subr.bf16.mxu0 0
        %723 = vmatpush2.bf16.msra.mxu0 0
        %724 = vmatprep.subr.bf16.mxu0 0
        %725 = vmatpush2.bf16.msra.mxu0 0
        %726 = vmatprep.subr.bf16.mxu0 0
        %727 = vmatpush2.bf16.msra.mxu0 0
        %728 = vmatprep.mubr.bf16.mxu0 0
        %729 = vmatmul.mubr.bf16.gmra.mxu0 %v694
        %v730 = vpop.f32.mrf.mxu0
        %v731 = vadd.f32 0.0, %v730
        %v732 = vpop.f32.mrf.mxu0
        %v733 = vpop.f32.mrf.mxu0
        %v734 = vpop.f32.mrf.mxu0
        %735 = vdwg.mxu0
        %v736 = vld [vmem:[%s6] sm:$0xf]
        %v737 = vld [vmem:[%s6 + $0x4] sm:$0xf]
        %v738 = vld [vmem:[%s6 + $0x8] sm:$0xf]
        %v739 = vld [vmem:[%s6 + $0xc] sm:$0xf]
        %v740 = vld [vmem:[%s6 + $0x10] sm:$0xf]
        %v741 = vld [vmem:[%s6 + $0x14] sm:$0xf]
        %v742 = vld [vmem:[%s6 + $0x18] sm:$0xf]
        %v743 = vld [vmem:[%s6 + $0x1c] sm:$0xf]
        %v744 = vld [vmem:[#allocation5] sm:$0x1]
        %v746 = vlaneseq
        %v747 = vshrl.u32 %v746, 7
        %v748 = vsub.s32 0, %v747
        %v749 = vrot.slane %v744, %v748
        %v759 = vunpack.c.l.b16 %v736
        %v760 = vunpack.c.l.b16 %v737
        %v761 = vunpack.c.l.b16 %v738
        %v762 = vunpack.c.l.b16 %v739
        %v763 = vunpack.c.l.b16 %v740
        %v764 = vunpack.c.l.b16 %v741
        %v765 = vunpack.c.l.b16 %v742
        %v766 = vunpack.c.l.b16 %v743
        %v767 = vpack.c.b16 %v760, %v759
        %v768 = vpack.c.b16 %v762, %v761
        %v769 = vpack.c.b16 %v764, %v763
        %v770 = vpack.c.b16 %v766, %v765
        %v776 = vsel %vm617, %v577, 0
        %778 = vmatprep.subr.bf16.mxu0 0
        %779 = vmatpush1.bf16.msra.mxu0 0
        %780 = vmatprep.subr.bf16.mxu0 0
        %781 = vmatpush1.bf16.msra.mxu0 0
        %782 = vmatprep.subr.bf16.mxu0 0
        %783 = vmatpush1.bf16.msra.mxu0 0
        %784 = vmatprep.subr.bf16.mxu0 0
        %785 = vmatpush1.bf16.msra.mxu0 0
        %786 = vmatprep.subr.bf16.mxu0 0
        %787 = vmatpush1.bf16.msra.mxu0 %v770
        %788 = vmatprep.subr.bf16.mxu0 0
        %789 = vmatpush1.bf16.msra.mxu0 %v769
        %790 = vmatprep.subr.bf16.mxu0 0
        %791 = vmatpush1.bf16.msra.mxu0 %v768
        %792 = vmatprep.subr.bf16.mxu0 0
        %793 = vmatpush1.bf16.msra.mxu0 %v767
        %794 = vmatprep.subr.bf16.mxu0 0
        %795 = vmatpush2.bf16.msra.mxu0 0
        %796 = vmatprep.subr.bf16.mxu0 0
        %797 = vmatpush2.bf16.msra.mxu0 0
        %798 = vmatprep.subr.bf16.mxu0 0
        %799 = vmatpush2.bf16.msra.mxu0 0
        %800 = vmatprep.subr.bf16.mxu0 0
        %801 = vmatpush2.bf16.msra.mxu0 0
        %802 = vmatprep.subr.bf16.mxu0 0
        %803 = vmatpush2.bf16.msra.mxu0 0
        %804 = vmatprep.subr.bf16.mxu0 0
        %805 = vmatpush2.bf16.msra.mxu0 0
        %806 = vmatprep.subr.bf16.mxu0 0
        %807 = vmatpush2.bf16.msra.mxu0 0
        %808 = vmatprep.subr.bf16.mxu0 0
        %809 = vmatpush2.bf16.msra.mxu0 0
        %810 = vmatprep.mubr.bf16.mxu0 0
        %811 = vmatmul.mubr.bf16.gmra.mxu0 %v776
        %v812 = vpop.f32.mrf.mxu0
        %v813 = vadd.f32 %v749, %v812
        %v814 = vpop.f32.mrf.mxu0
        %v815 = vpop.f32.mrf.mxu0
        %v816 = vpop.f32.mrf.mxu0
        %817 = vdwg.mxu0
        %v818 = vld [vmem:[#allocation7] sm:$0xff]
        %v819 = vld [vmem:[%s9] sm:$0xff]
        %v820 = vld [vmem:[%s9 + $0x8] sm:$0xff]
        %v821 = vld [vmem:[%s9 + $0x10] sm:$0xff]
        %v822 = vld [vmem:[%s9 + $0x18] sm:$0xff]
        %v823 = vld [vmem:[%s9 + $0x20] sm:$0xff]
        %v824 = vld [vmem:[%s9 + $0x28] sm:$0xff]
        %v825 = vld [vmem:[%s9 + $0x30] sm:$0xff]
        %v826 = vld [vmem:[%s9 + $0x38] sm:$0xff]
        %v827 = vld [vmem:[#allocation8] sm:$0xff]
        %v828 = vld [vmem:[%s11] sm:$0xff]
        %v829 = vld [vmem:[%s11 + $0x8] sm:$0xff]
        %v830 = vld [vmem:[%s11 + $0x10] sm:$0xff]
        %v831 = vld [vmem:[%s11 + $0x18] sm:$0xff]
        %v832 = vld [vmem:[%s11 + $0x20] sm:$0xff]
        %v833 = vld [vmem:[%s11 + $0x28] sm:$0xff]
        %v834 = vld [vmem:[%s11 + $0x30] sm:$0xff]
        %v835 = vld [vmem:[%s11 + $0x38] sm:$0xff]
        %v836 = vld [vmem:[#allocation10] sm:$0xff]
        %vm837 = vcmask 64512
        %v839 = vsel %vm837, %v656, 0
        %841 = vmatprep.subr.mxu0 0.0
        %842 = vmatpush1.msra.mxu0 0.0
        %843 = vmatprep.subr.mxu0 0.0
        %844 = vmatpush1.msra.mxu0 0.0
        %845 = vmatprep.subr.mxu0 0.0
        %846 = vmatpush1.msra.mxu0 0.0
        %847 = vmatprep.subr.mxu0 0.0
        %848 = vmatpush1.msra.mxu0 0.0
        %849 = vmatprep.subr.mxu0 0.0
        %850 = vmatpush1.msra.mxu0 0.0
        %851 = vmatprep.subr.mxu0 0.0
        %852 = vmatpush1.msra.mxu0 0.0
        %853 = vmatprep.subr.mxu0 0.0
        %854 = vmatpush1.msra.mxu0 0.0
        %855 = vmatprep.subr.mxu0 0.0
        %856 = vmatpush1.msra.mxu0 0.0
        %857 = vmatprep.subr.mxu0 0.0
        %858 = vmatpush1.msra.mxu0 0.0
        %859 = vmatprep.subr.mxu0 0.0
        %860 = vmatpush1.msra.mxu0 0.0
        %861 = vmatprep.subr.mxu0 0.0
        %862 = vmatpush1.msra.mxu0 0.0
        %863 = vmatprep.subr.mxu0 0.0
        %864 = vmatpush1.msra.mxu0 0.0
        %865 = vmatprep.subr.mxu0 0.0
        %866 = vmatpush1.msra.mxu0 0.0
        %867 = vmatprep.subr.mxu0 0.0
        %868 = vmatpush1.msra.mxu0 0.0
        %869 = vmatprep.subr.mxu0 0.0
        %870 = vmatpush1.msra.mxu0 0.0
        %871 = vmatprep.subr.mxu0 0.0
        %872 = vmatpush1.msra.mxu0 %v818
        %873 = vmatprep.subr.mxu0 0.0
        %874 = vmatpush2.msra.mxu0 0.0
        %875 = vmatprep.subr.mxu0 0.0
        %876 = vmatpush2.msra.mxu0 0.0
        %877 = vmatprep.subr.mxu0 0.0
        %878 = vmatpush2.msra.mxu0 0.0
        %879 = vmatprep.subr.mxu0 0.0
        %880 = vmatpush2.msra.mxu0 0.0
        %881 = vmatprep.subr.mxu0 0.0
        %882 = vmatpush2.msra.mxu0 0.0
        %883 = vmatprep.subr.mxu0 0.0
        %884 = vmatpush2.msra.mxu0 0.0
        %885 = vmatprep.subr.mxu0 0.0
        %886 = vmatpush2.msra.mxu0 0.0
        %887 = vmatprep.subr.mxu0 0.0
        %888 = vmatpush2.msra.mxu0 0.0
        %889 = vmatprep.subr.mxu0 0.0
        %890 = vmatpush2.msra.mxu0 0.0
        %891 = vmatprep.subr.mxu0 0.0
        %892 = vmatpush2.msra.mxu0 0.0
        %893 = vmatprep.subr.mxu0 0.0
        %894 = vmatpush2.msra.mxu0 0.0
        %895 = vmatprep.subr.mxu0 0.0
        %896 = vmatpush2.msra.mxu0 0.0
        %897 = vmatprep.subr.mxu0 0.0
        %898 = vmatpush2.msra.mxu0 0.0
        %899 = vmatprep.subr.mxu0 0.0
        %900 = vmatpush2.msra.mxu0 0.0
        %901 = vmatprep.subr.mxu0 0.0
        %902 = vmatpush2.msra.mxu0 0.0
        %903 = vmatprep.subr.mxu0 0.0
        %904 = vmatpush2.msra.mxu0 0.0
        %905 = vmatprep.mubr.f32.mxu0 0.0
        %906 = vmatmul.mubr.f32.gmra.mxu0 %v839
        %v907 = vpop.f32.mrf.mxu0
        %v908 = vadd.f32 0.0, %v907
        %v909 = vpop.f32.mrf.mxu0
        %910 = vdwg.mxu0
        %v911 = vmul.f32 %v908, %v731
        %v913 = vsel %vm617, %v911, 0
        %915 = vmatprep.subr.mxu0 0.0
        %916 = vmatpush1.msra.mxu0 0.0
        %917 = vmatprep.subr.mxu0 0.0
        %918 = vmatpush1.msra.mxu0 0.0
        %919 = vmatprep.subr.mxu0 0.0
        %920 = vmatpush1.msra.mxu0 0.0
        %921 = vmatprep.subr.mxu0 0.0
        %922 = vmatpush1.msra.mxu0 0.0
        %923 = vmatprep.subr.mxu0 0.0
        %924 = vmatpush1.msra.mxu0 0.0
        %925 = vmatprep.subr.mxu0 0.0
        %926 = vmatpush1.msra.mxu0 0.0
        %927 = vmatprep.subr.mxu0 0.0
        %928 = vmatpush1.msra.mxu0 0.0
        %929 = vmatprep.subr.mxu0 0.0
        %930 = vmatpush1.msra.mxu0 0.0
        %931 = vmatprep.subr.mxu0 0.0
        %932 = vmatpush1.msra.mxu0 %v826
        %933 = vmatprep.subr.mxu0 0.0
        %934 = vmatpush1.msra.mxu0 %v825
        %935 = vmatprep.subr.mxu0 0.0
        %936 = vmatpush1.msra.mxu0 %v824
        %937 = vmatprep.subr.mxu0 0.0
        %938 = vmatpush1.msra.mxu0 %v823
        %939 = vmatprep.subr.mxu0 0.0
        %940 = vmatpush1.msra.mxu0 %v822
        %941 = vmatprep.subr.mxu0 0.0
        %942 = vmatpush1.msra.mxu0 %v821
        %943 = vmatprep.subr.mxu0 0.0
        %944 = vmatpush1.msra.mxu0 %v820
        %945 = vmatprep.subr.mxu0 0.0
        %946 = vmatpush1.msra.mxu0 %v819
        %947 = vmatprep.subr.mxu0 0.0
        %948 = vmatpush2.msra.mxu0 0.0
        %949 = vmatprep.subr.mxu0 0.0
        %950 = vmatpush2.msra.mxu0 0.0
        %951 = vmatprep.subr.mxu0 0.0
        %952 = vmatpush2.msra.mxu0 0.0
        %953 = vmatprep.subr.mxu0 0.0
        %954 = vmatpush2.msra.mxu0 0.0
        %955 = vmatprep.subr.mxu0 0.0
        %956 = vmatpush2.msra.mxu0 0.0
        %957 = vmatprep.subr.mxu0 0.0
        %958 = vmatpush2.msra.mxu0 0.0
        %959 = vmatprep.subr.mxu0 0.0
        %960 = vmatpush2.msra.mxu0 0.0
        %961 = vmatprep.subr.mxu0 0.0
        %962 = vmatpush2.msra.mxu0 0.0
        %963 = vmatprep.subr.mxu0 0.0
        %964 = vmatpush2.msra.mxu0 0.0
        %965 = vmatprep.subr.mxu0 0.0
        %966 = vmatpush2.msra.mxu0 0.0
        %967 = vmatprep.subr.mxu0 0.0
        %968 = vmatpush2.msra.mxu0 0.0
        %969 = vmatprep.subr.mxu0 0.0
        %970 = vmatpush2.msra.mxu0 0.0
        %971 = vmatprep.subr.mxu0 0.0
        %972 = vmatpush2.msra.mxu0 0.0
        %973 = vmatprep.subr.mxu0 0.0
        %974 = vmatpush2.msra.mxu0 0.0
        %975 = vmatprep.subr.mxu0 0.0
        %976 = vmatpush2.msra.mxu0 0.0
        %977 = vmatprep.subr.mxu0 0.0
        %978 = vmatpush2.msra.mxu0 0.0
        %979 = vmatprep.mubr.f32.mxu0 0.0
        %980 = vmatmul.mubr.f32.gmra.mxu0 %v913
        %v981 = vpop.f32.mrf.mxu0
        %v982 = vadd.f32 %v836, %v981
        %v983 = vpop.f32.mrf.mxu0
        %984 = vdwg.mxu0
        %v985 = vsel %vm837, %v982, -inf
        %986 = vmax.xlane.f32.xlu0 %v985
        %v987 = vpop.xlane.xlu0 %986
        %v988 = vsub.f32 %v982, %v987
        %v989 = vmul.f32 %v988, 1.442695
        %v990 = vpow.pop %v989
        %v991 = vsel %vm837, %v990, 0.0
        %992 = vadd.xlane.f32.xlu0 %v991
        %v993 = vpop.xlane.xlu0 %992
        %v994 = vrcp.pop %v993
        %v995 = vmul.f32 %v990, %v994
        %v997 = vsel %vm837, %v995, 0
        %999 = vmatprep.subr.mxu0 0.0
        %1000 = vmatpush1.msra.mxu0 0.0
        %1001 = vmatprep.subr.mxu0 0.0
        %1002 = vmatpush1.msra.mxu0 0.0
        %1003 = vmatprep.subr.mxu0 0.0
        %1004 = vmatpush1.msra.mxu0 0.0
        %1005 = vmatprep.subr.mxu0 0.0
        %1006 = vmatpush1.msra.mxu0 0.0
        %1007 = vmatprep.subr.mxu0 0.0
        %1008 = vmatpush1.msra.mxu0 0.0
        %1009 = vmatprep.subr.mxu0 0.0
        %1010 = vmatpush1.msra.mxu0 0.0
        %1011 = vmatprep.subr.mxu0 0.0
        %1012 = vmatpush1.msra.mxu0 0.0
        %1013 = vmatprep.subr.mxu0 0.0
        %1014 = vmatpush1.msra.mxu0 0.0
        %1015 = vmatprep.subr.mxu0 0.0
        %1016 = vmatpush1.msra.mxu0 0.0
        %1017 = vmatprep.subr.mxu0 0.0
        %1018 = vmatpush1.msra.mxu0 0.0
        %1019 = vmatprep.subr.mxu0 0.0
        %1020 = vmatpush1.msra.mxu0 0.0
        %1021 = vmatprep.subr.mxu0 0.0
        %1022 = vmatpush1.msra.mxu0 0.0
        %1023 = vmatprep.subr.mxu0 0.0
        %1024 = vmatpush1.msra.mxu0 0.0
        %1025 = vmatprep.subr.mxu0 0.0
        %1026 = vmatpush1.msra.mxu0 0.0
        %1027 = vmatprep.subr.mxu0 0.0
        %1028 = vmatpush1.msra.mxu0 0.0
        %1029 = vmatprep.subr.mxu0 0.0
        %1030 = vmatpush1.msra.mxu0 %v827
        %1031 = vmatprep.subr.mxu0 0.0
        %1032 = vmatpush2.msra.mxu0 0.0
        %1033 = vmatprep.subr.mxu0 0.0
        %1034 = vmatpush2.msra.mxu0 0.0
        %1035 = vmatprep.subr.mxu0 0.0
        %1036 = vmatpush2.msra.mxu0 0.0
        %1037 = vmatprep.subr.mxu0 0.0
        %1038 = vmatpush2.msra.mxu0 0.0
        %1039 = vmatprep.subr.mxu0 0.0
        %1040 = vmatpush2.msra.mxu0 0.0
        %1041 = vmatprep.subr.mxu0 0.0
        %1042 = vmatpush2.msra.mxu0 0.0
        %1043 = vmatprep.subr.mxu0 0.0
        %1044 = vmatpush2.msra.mxu0 0.0
        %1045 = vmatprep.subr.mxu0 0.0
        %1046 = vmatpush2.msra.mxu0 0.0
        %1047 = vmatprep.subr.mxu0 0.0
        %1048 = vmatpush2.msra.mxu0 0.0
        %1049 = vmatprep.subr.mxu0 0.0
        %1050 = vmatpush2.msra.mxu0 0.0
        %1051 = vmatprep.subr.mxu0 0.0
        %1052 = vmatpush2.msra.mxu0 0.0
        %1053 = vmatprep.subr.mxu0 0.0
        %1054 = vmatpush2.msra.mxu0 0.0
        %1055 = vmatprep.subr.mxu0 0.0
        %1056 = vmatpush2.msra.mxu0 0.0
        %1057 = vmatprep.subr.mxu0 0.0
        %1058 = vmatpush2.msra.mxu0 0.0
        %1059 = vmatprep.subr.mxu0 0.0
        %1060 = vmatpush2.msra.mxu0 0.0
        %1061 = vmatprep.subr.mxu0 0.0
        %1062 = vmatpush2.msra.mxu0 0.0
        %1063 = vmatprep.mubr.f32.mxu0 0.0
        %1064 = vmatmul.mubr.f32.gmra.mxu0 %v997
        %v1065 = vpop.f32.mrf.mxu0
        %v1066 = vadd.f32 0.0, %v1065
        %v1067 = vpop.f32.mrf.mxu0
        %1068 = vdwg.mxu0
        %v1069 = vmul.f32 %v1066, %v813
        %v1071 = vsel %vm617, %v1069, 0
        %1073 = vmatprep.subr.mxu0 0.0
        %1074 = vmatpush1.msra.mxu0 0.0
        %1075 = vmatprep.subr.mxu0 0.0
        %1076 = vmatpush1.msra.mxu0 0.0
        %1077 = vmatprep.subr.mxu0 0.0
        %1078 = vmatpush1.msra.mxu0 0.0
        %1079 = vmatprep.subr.mxu0 0.0
        %1080 = vmatpush1.msra.mxu0 0.0
        %1081 = vmatprep.subr.mxu0 0.0
        %1082 = vmatpush1.msra.mxu0 0.0
        %1083 = vmatprep.subr.mxu0 0.0
        %1084 = vmatpush1.msra.mxu0 0.0
        %1085 = vmatprep.subr.mxu0 0.0
        %1086 = vmatpush1.msra.mxu0 0.0
        %1087 = vmatprep.subr.mxu0 0.0
        %1088 = vmatpush1.msra.mxu0 0.0
        %1089 = vmatprep.subr.mxu0 0.0
        %1090 = vmatpush1.msra.mxu0 %v835
        %1091 = vmatprep.subr.mxu0 0.0
        %1092 = vmatpush1.msra.mxu0 %v834
        %1093 = vmatprep.subr.mxu0 0.0
        %1094 = vmatpush1.msra.mxu0 %v833
        %1095 = vmatprep.subr.mxu0 0.0
        %1096 = vmatpush1.msra.mxu0 %v832
        %1097 = vmatprep.subr.mxu0 0.0
        %1098 = vmatpush1.msra.mxu0 %v831
        %1099 = vmatprep.subr.mxu0 0.0
        %1100 = vmatpush1.msra.mxu0 %v830
        %1101 = vmatprep.subr.mxu0 0.0
        %1102 = vmatpush1.msra.mxu0 %v829
        %1103 = vmatprep.subr.mxu0 0.0
        %1104 = vmatpush1.msra.mxu0 %v828
        %1105 = vmatprep.subr.mxu0 0.0
        %1106 = vmatpush2.msra.mxu0 0.0
        %1107 = vmatprep.subr.mxu0 0.0
        %1108 = vmatpush2.msra.mxu0 0.0
        %1109 = vmatprep.subr.mxu0 0.0
        %1110 = vmatpush2.msra.mxu0 0.0
        %1111 = vmatprep.subr.mxu0 0.0
        %1112 = vmatpush2.msra.mxu0 0.0
        %1113 = vmatprep.subr.mxu0 0.0
        %1114 = vmatpush2.msra.mxu0 0.0
        %1115 = vmatprep.subr.mxu0 0.0
        %1116 = vmatpush2.msra.mxu0 0.0
        %1117 = vmatprep.subr.mxu0 0.0
        %1118 = vmatpush2.msra.mxu0 0.0
        %1119 = vmatprep.subr.mxu0 0.0
        %1120 = vmatpush2.msra.mxu0 0.0
        %1121 = vmatprep.subr.mxu0 0.0
        %1122 = vmatpush2.msra.mxu0 0.0
        %1123 = vmatprep.subr.mxu0 0.0
        %1124 = vmatpush2.msra.mxu0 0.0
        %1125 = vmatprep.subr.mxu0 0.0
        %1126 = vmatpush2.msra.mxu0 0.0
        %1127 = vmatprep.subr.mxu0 0.0
        %1128 = vmatpush2.msra.mxu0 0.0
        %1129 = vmatprep.subr.mxu0 0.0
        %1130 = vmatpush2.msra.mxu0 0.0
        %1131 = vmatprep.subr.mxu0 0.0
        %1132 = vmatpush2.msra.mxu0 0.0
        %1133 = vmatprep.subr.mxu0 0.0
        %1134 = vmatpush2.msra.mxu0 0.0
        %1135 = vmatprep.subr.mxu0 0.0
        %1136 = vmatpush2.msra.mxu0 0.0
        %1137 = vmatprep.mubr.f32.mxu0 0.0
        %1138 = vmatmul.mubr.f32.gmra.mxu0 %v1071
        %v1139 = vpop.f32.mrf.mxu0
        %v1140 = vadd.f32 0.0, %v1139
        %v1141 = vpop.f32.mrf.mxu0
        %1142 = vdwg.mxu0
        %1143 = vrot.lane.b32.xlu0 %v656, 120
        %v1144 = vpop.permute.xlu0 %1143
        %v1145 = vsel %vm837, %v1144, 0
        %1147 = vmatprep.subr.mxu0 0.0
        %1148 = vmatpush1.msra.mxu0 0.0
        %1149 = vmatprep.subr.mxu0 0.0
        %1150 = vmatpush1.msra.mxu0 0.0
        %1151 = vmatprep.subr.mxu0 0.0
        %1152 = vmatpush1.msra.mxu0 0.0
        %1153 = vmatprep.subr.mxu0 0.0
        %1154 = vmatpush1.msra.mxu0 0.0
        %1155 = vmatprep.subr.mxu0 0.0
        %1156 = vmatpush1.msra.mxu0 0.0
        %1157 = vmatprep.subr.mxu0 0.0
        %1158 = vmatpush1.msra.mxu0 0.0
        %1159 = vmatprep.subr.mxu0 0.0
        %1160 = vmatpush1.msra.mxu0 0.0
        %1161 = vmatprep.subr.mxu0 0.0
        %1162 = vmatpush1.msra.mxu0 0.0
        %1163 = vmatprep.subr.mxu0 0.0
        %1164 = vmatpush1.msra.mxu0 0.0
        %1165 = vmatprep.subr.mxu0 0.0
        %1166 = vmatpush1.msra.mxu0 0.0
        %1167 = vmatprep.subr.mxu0 0.0
        %1168 = vmatpush1.msra.mxu0 0.0
        %1169 = vmatprep.subr.mxu0 0.0
        %1170 = vmatpush1.msra.mxu0 0.0
        %1171 = vmatprep.subr.mxu0 0.0
        %1172 = vmatpush1.msra.mxu0 0.0
        %1173 = vmatprep.subr.mxu0 0.0
        %1174 = vmatpush1.msra.mxu0 0.0
        %1175 = vmatprep.subr.mxu0 0.0
        %1176 = vmatpush1.msra.mxu0 0.0
        %1177 = vmatprep.subr.mxu0 0.0
        %1178 = vmatpush1.msra.mxu0 %v818
        %1179 = vmatprep.subr.mxu0 0.0
        %1180 = vmatpush2.msra.mxu0 0.0
        %1181 = vmatprep.subr.mxu0 0.0
        %1182 = vmatpush2.msra.mxu0 0.0
        %1183 = vmatprep.subr.mxu0 0.0
        %1184 = vmatpush2.msra.mxu0 0.0
        %1185 = vmatprep.subr.mxu0 0.0
        %1186 = vmatpush2.msra.mxu0 0.0
        %1187 = vmatprep.subr.mxu0 0.0
        %1188 = vmatpush2.msra.mxu0 0.0
        %1189 = vmatprep.subr.mxu0 0.0
        %1190 = vmatpush2.msra.mxu0 0.0
        %1191 = vmatprep.subr.mxu0 0.0
        %1192 = vmatpush2.msra.mxu0 0.0
        %1193 = vmatprep.subr.mxu0 0.0
        %1194 = vmatpush2.msra.mxu0 0.0
        %1195 = vmatprep.subr.mxu0 0.0
        %1196 = vmatpush2.msra.mxu0 0.0
        %1197 = vmatprep.subr.mxu0 0.0
        %1198 = vmatpush2.msra.mxu0 0.0
        %1199 = vmatprep.subr.mxu0 0.0
        %1200 = vmatpush2.msra.mxu0 0.0
        %1201 = vmatprep.subr.mxu0 0.0
        %1202 = vmatpush2.msra.mxu0 0.0
        %1203 = vmatprep.subr.mxu0 0.0
        %1204 = vmatpush2.msra.mxu0 0.0
        %1205 = vmatprep.subr.mxu0 0.0
        %1206 = vmatpush2.msra.mxu0 0.0
        %1207 = vmatprep.subr.mxu0 0.0
        %1208 = vmatpush2.msra.mxu0 0.0
        %1209 = vmatprep.subr.mxu0 0.0
        %1210 = vmatpush2.msra.mxu0 0.0
        %1211 = vmatprep.mubr.f32.mxu0 0.0
        %1212 = vmatmul.mubr.f32.gmra.mxu0 %v1145
        %v1213 = vpop.f32.mrf.mxu0
        %v1214 = vadd.f32 0.0, %v1213
        %v1215 = vpop.f32.mrf.mxu0
        %1216 = vdwg.mxu0
        %v1217 = vmul.f32 %v1214, %v731
        %v1219 = vsel %vm617, %v1217, 0
        %1221 = vmatprep.subr.mxu0 0.0
        %1222 = vmatpush1.msra.mxu0 0.0
        %1223 = vmatprep.subr.mxu0 0.0
        %1224 = vmatpush1.msra.mxu0 0.0
        %1225 = vmatprep.subr.mxu0 0.0
        %1226 = vmatpush1.msra.mxu0 0.0
        %1227 = vmatprep.subr.mxu0 0.0
        %1228 = vmatpush1.msra.mxu0 0.0
        %1229 = vmatprep.subr.mxu0 0.0
        %1230 = vmatpush1.msra.mxu0 0.0
        %1231 = vmatprep.subr.mxu0 0.0
        %1232 = vmatpush1.msra.mxu0 0.0
        %1233 = vmatprep.subr.mxu0 0.0
        %1234 = vmatpush1.msra.mxu0 0.0
        %1235 = vmatprep.subr.mxu0 0.0
        %1236 = vmatpush1.msra.mxu0 0.0
        %1237 = vmatprep.subr.mxu0 0.0
        %1238 = vmatpush1.msra.mxu0 %v826
        %1239 = vmatprep.subr.mxu0 0.0
        %1240 = vmatpush1.msra.mxu0 %v825
        %1241 = vmatprep.subr.mxu0 0.0
        %1242 = vmatpush1.msra.mxu0 %v824
        %1243 = vmatprep.subr.mxu0 0.0
        %1244 = vmatpush1.msra.mxu0 %v823
        %1245 = vmatprep.subr.mxu0 0.0
        %1246 = vmatpush1.msra.mxu0 %v822
        %1247 = vmatprep.subr.mxu0 0.0
        %1248 = vmatpush1.msra.mxu0 %v821
        %1249 = vmatprep.subr.mxu0 0.0
        %1250 = vmatpush1.msra.mxu0 %v820
        %1251 = vmatprep.subr.mxu0 0.0
        %1252 = vmatpush1.msra.mxu0 %v819
        %1253 = vmatprep.subr.mxu0 0.0
        %1254 = vmatpush2.msra.mxu0 0.0
        %1255 = vmatprep.subr.mxu0 0.0
        %1256 = vmatpush2.msra.mxu0 0.0
        %1257 = vmatprep.subr.mxu0 0.0
        %1258 = vmatpush2.msra.mxu0 0.0
        %1259 = vmatprep.subr.mxu0 0.0
        %1260 = vmatpush2.msra.mxu0 0.0
        %1261 = vmatprep.subr.mxu0 0.0
        %1262 = vmatpush2.msra.mxu0 0.0
        %1263 = vmatprep.subr.mxu0 0.0
        %1264 = vmatpush2.msra.mxu0 0.0
        %1265 = vmatprep.subr.mxu0 0.0
        %1266 = vmatpush2.msra.mxu0 0.0
        %1267 = vmatprep.subr.mxu0 0.0
        %1268 = vmatpush2.msra.mxu0 0.0
        %1269 = vmatprep.subr.mxu0 0.0
        %1270 = vmatpush2.msra.mxu0 0.0
        %1271 = vmatprep.subr.mxu0 0.0
        %1272 = vmatpush2.msra.mxu0 0.0
        %1273 = vmatprep.subr.mxu0 0.0
        %1274 = vmatpush2.msra.mxu0 0.0
        %1275 = vmatprep.subr.mxu0 0.0
        %1276 = vmatpush2.msra.mxu0 0.0
        %1277 = vmatprep.subr.mxu0 0.0
        %1278 = vmatpush2.msra.mxu0 0.0
        %1279 = vmatprep.subr.mxu0 0.0
        %1280 = vmatpush2.msra.mxu0 0.0
        %1281 = vmatprep.subr.mxu0 0.0
        %1282 = vmatpush2.msra.mxu0 0.0
        %1283 = vmatprep.subr.mxu0 0.0
        %1284 = vmatpush2.msra.mxu0 0.0
        %1285 = vmatprep.mubr.f32.mxu0 0.0
        %1286 = vmatmul.mubr.f32.gmra.mxu0 %v1219
        %v1287 = vpop.f32.mrf.mxu0
        %v1288 = vadd.f32 %v836, %v1287
        %v1289 = vpop.f32.mrf.mxu0
        %1290 = vdwg.mxu0
        %v1291 = vsel %vm837, %v1288, -inf
        %1292 = vmax.xlane.f32.xlu0 %v1291
        %v1293 = vpop.xlane.xlu0 %1292
        %v1294 = vsub.f32 %v1288, %v1293
        %v1295 = vmul.f32 %v1294, 1.442695
        %v1296 = vpow.pop %v1295
        %v1297 = vsel %vm837, %v1296, 0.0
        %1298 = vadd.xlane.f32.xlu0 %v1297
        %v1299 = vpop.xlane.xlu0 %1298
        %v1300 = vrcp.pop %v1299
        %v1301 = vmul.f32 %v1296, %v1300
        %v1303 = vsel %vm837, %v1301, 0
        %1305 = vmatprep.subr.mxu0 0.0
        %1306 = vmatpush1.msra.mxu0 0.0
        %1307 = vmatprep.subr.mxu0 0.0
        %1308 = vmatpush1.msra.mxu0 0.0
        %1309 = vmatprep.subr.mxu0 0.0
        %1310 = vmatpush1.msra.mxu0 0.0
        %1311 = vmatprep.subr.mxu0 0.0
        %1312 = vmatpush1.msra.mxu0 0.0
        %1313 = vmatprep.subr.mxu0 0.0
        %1314 = vmatpush1.msra.mxu0 0.0
        %1315 = vmatprep.subr.mxu0 0.0
        %1316 = vmatpush1.msra.mxu0 0.0
        %1317 = vmatprep.subr.mxu0 0.0
        %1318 = vmatpush1.msra.mxu0 0.0
        %1319 = vmatprep.subr.mxu0 0.0
        %1320 = vmatpush1.msra.mxu0 0.0
        %1321 = vmatprep.subr.mxu0 0.0
        %1322 = vmatpush1.msra.mxu0 0.0
        %1323 = vmatprep.subr.mxu0 0.0
        %1324 = vmatpush1.msra.mxu0 0.0
        %1325 = vmatprep.subr.mxu0 0.0
        %1326 = vmatpush1.msra.mxu0 0.0
        %1327 = vmatprep.subr.mxu0 0.0
        %1328 = vmatpush1.msra.mxu0 0.0
        %1329 = vmatprep.subr.mxu0 0.0
        %1330 = vmatpush1.msra.mxu0 0.0
        %1331 = vmatprep.subr.mxu0 0.0
        %1332 = vmatpush1.msra.mxu0 0.0
        %1333 = vmatprep.subr.mxu0 0.0
        %1334 = vmatpush1.msra.mxu0 0.0
        %1335 = vmatprep.subr.mxu0 0.0
        %1336 = vmatpush1.msra.mxu0 %v827
        %1337 = vmatprep.subr.mxu0 0.0
        %1338 = vmatpush2.msra.mxu0 0.0
        %1339 = vmatprep.subr.mxu0 0.0
        %1340 = vmatpush2.msra.mxu0 0.0
        %1341 = vmatprep.subr.mxu0 0.0
        %1342 = vmatpush2.msra.mxu0 0.0
        %1343 = vmatprep.subr.mxu0 0.0
        %1344 = vmatpush2.msra.mxu0 0.0
        %1345 = vmatprep.subr.mxu0 0.0
        %1346 = vmatpush2.msra.mxu0 0.0
        %1347 = vmatprep.subr.mxu0 0.0
        %1348 = vmatpush2.msra.mxu0 0.0
        %1349 = vmatprep.subr.mxu0 0.0
        %1350 = vmatpush2.msra.mxu0 0.0
        %1351 = vmatprep.subr.mxu0 0.0
        %1352 = vmatpush2.msra.mxu0 0.0
        %1353 = vmatprep.subr.mxu0 0.0
        %1354 = vmatpush2.msra.mxu0 0.0
        %1355 = vmatprep.subr.mxu0 0.0
        %1356 = vmatpush2.msra.mxu0 0.0
        %1357 = vmatprep.subr.mxu0 0.0
        %1358 = vmatpush2.msra.mxu0 0.0
        %1359 = vmatprep.subr.mxu0 0.0
        %1360 = vmatpush2.msra.mxu0 0.0
        %1361 = vmatprep.subr.mxu0 0.0
        %1362 = vmatpush2.msra.mxu0 0.0
        %1363 = vmatprep.subr.mxu0 0.0
        %1364 = vmatpush2.msra.mxu0 0.0
        %1365 = vmatprep.subr.mxu0 0.0
        %1366 = vmatpush2.msra.mxu0 0.0
        %1367 = vmatprep.subr.mxu0 0.0
        %1368 = vmatpush2.msra.mxu0 0.0
        %1369 = vmatprep.mubr.f32.mxu0 0.0
        %1370 = vmatmul.mubr.f32.gmra.mxu0 %v1303
        %v1371 = vpop.f32.mrf.mxu0
        %v1372 = vadd.f32 0.0, %v1371
        %v1373 = vpop.f32.mrf.mxu0
        %1374 = vdwg.mxu0
        %v1375 = vmul.f32 %v1372, %v813
        %v1377 = vsel %vm617, %v1375, 0
        %1379 = vmatprep.subr.mxu0 0.0
        %1380 = vmatpush1.msra.mxu0 0.0
        %1381 = vmatprep.subr.mxu0 0.0
        %1382 = vmatpush1.msra.mxu0 0.0
        %1383 = vmatprep.subr.mxu0 0.0
        %1384 = vmatpush1.msra.mxu0 0.0
        %1385 = vmatprep.subr.mxu0 0.0
        %1386 = vmatpush1.msra.mxu0 0.0
        %1387 = vmatprep.subr.mxu0 0.0
        %1388 = vmatpush1.msra.mxu0 0.0
        %1389 = vmatprep.subr.mxu0 0.0
        %1390 = vmatpush1.msra.mxu0 0.0
        %1391 = vmatprep.subr.mxu0 0.0
        %1392 = vmatpush1.msra.mxu0 0.0
        %1393 = vmatprep.subr.mxu0 0.0
        %1394 = vmatpush1.msra.mxu0 0.0
        %1395 = vmatprep.subr.mxu0 0.0
        %1396 = vmatpush1.msra.mxu0 %v835
        %1397 = vmatprep.subr.mxu0 0.0
        %1398 = vmatpush1.msra.mxu0 %v834
        %1399 = vmatprep.subr.mxu0 0.0
        %1400 = vmatpush1.msra.mxu0 %v833
        %1401 = vmatprep.subr.mxu0 0.0
        %1402 = vmatpush1.msra.mxu0 %v832
        %1403 = vmatprep.subr.mxu0 0.0
        %1404 = vmatpush1.msra.mxu0 %v831
        %1405 = vmatprep.subr.mxu0 0.0
        %1406 = vmatpush1.msra.mxu0 %v830
        %1407 = vmatprep.subr.mxu0 0.0
        %1408 = vmatpush1.msra.mxu0 %v829
        %1409 = vmatprep.subr.mxu0 0.0
        %1410 = vmatpush1.msra.mxu0 %v828
        %1411 = vmatprep.subr.mxu0 0.0
        %1412 = vmatpush2.msra.mxu0 0.0
        %1413 = vmatprep.subr.mxu0 0.0
        %1414 = vmatpush2.msra.mxu0 0.0
        %1415 = vmatprep.subr.mxu0 0.0
        %1416 = vmatpush2.msra.mxu0 0.0
        %1417 = vmatprep.subr.mxu0 0.0
        %1418 = vmatpush2.msra.mxu0 0.0
        %1419 = vmatprep.subr.mxu0 0.0
        %1420 = vmatpush2.msra.mxu0 0.0
        %1421 = vmatprep.subr.mxu0 0.0
        %1422 = vmatpush2.msra.mxu0 0.0
        %1423 = vmatprep.subr.mxu0 0.0
        %1424 = vmatpush2.msra.mxu0 0.0
        %1425 = vmatprep.subr.mxu0 0.0
        %1426 = vmatpush2.msra.mxu0 0.0
        %1427 = vmatprep.subr.mxu0 0.0
        %1428 = vmatpush2.msra.mxu0 0.0
        %1429 = vmatprep.subr.mxu0 0.0
        %1430 = vmatpush2.msra.mxu0 0.0
        %1431 = vmatprep.subr.mxu0 0.0
        %1432 = vmatpush2.msra.mxu0 0.0
        %1433 = vmatprep.subr.mxu0 0.0
        %1434 = vmatpush2.msra.mxu0 0.0
        %1435 = vmatprep.subr.mxu0 0.0
        %1436 = vmatpush2.msra.mxu0 0.0
        %1437 = vmatprep.subr.mxu0 0.0
        %1438 = vmatpush2.msra.mxu0 0.0
        %1439 = vmatprep.subr.mxu0 0.0
        %1440 = vmatpush2.msra.mxu0 0.0
        %1441 = vmatprep.subr.mxu0 0.0
        %1442 = vmatpush2.msra.mxu0 0.0
        %1443 = vmatprep.mubr.f32.mxu0 0.0
        %1444 = vmatmul.mubr.f32.gmra.mxu0 %v1377
        %v1445 = vpop.f32.mrf.mxu0
        %v1446 = vadd.f32 0.0, %v1445
        %v1447 = vpop.f32.mrf.mxu0
        %1448 = vdwg.mxu0
        %1449 = vrot.lane.b32.xlu0 %v656, 112
        %v1450 = vpop.permute.xlu0 %1449
        %v1451 = vsel %vm837, %v1450, 0
        %1453 = vmatprep.subr.mxu0 0.0
        %1454 = vmatpush1.msra.mxu0 0.0
        %1455 = vmatprep.subr.mxu0 0.0
        %1456 = vmatpush1.msra.mxu0 0.0
        %1457 = vmatprep.subr.mxu0 0.0
        %1458 = vmatpush1.msra.mxu0 0.0
        %1459 = vmatprep.subr.mxu0 0.0
        %1460 = vmatpush1.msra.mxu0 0.0
        %1461 = vmatprep.subr.mxu0 0.0
        %1462 = vmatpush1.msra.mxu0 0.0
        %1463 = vmatprep.subr.mxu0 0.0
        %1464 = vmatpush1.msra.mxu0 0.0
        %1465 = vmatprep.subr.mxu0 0.0
        %1466 = vmatpush1.msra.mxu0 0.0
        %1467 = vmatprep.subr.mxu0 0.0
        %1468 = vmatpush1.msra.mxu0 0.0
        %1469 = vmatprep.subr.mxu0 0.0
        %1470 = vmatpush1.msra.mxu0 0.0
        %1471 = vmatprep.subr.mxu0 0.0
        %1472 = vmatpush1.msra.mxu0 0.0
        %1473 = vmatprep.subr.mxu0 0.0
        %1474 = vmatpush1.msra.mxu0 0.0
        %1475 = vmatprep.subr.mxu0 0.0
        %1476 = vmatpush1.msra.mxu0 0.0
        %1477 = vmatprep.subr.mxu0 0.0
        %1478 = vmatpush1.msra.mxu0 0.0
        %1479 = vmatprep.subr.mxu0 0.0
        %1480 = vmatpush1.msra.mxu0 0.0
        %1481 = vmatprep.subr.mxu0 0.0
        %1482 = vmatpush1.msra.mxu0 0.0
        %1483 = vmatprep.subr.mxu0 0.0
        %1484 = vmatpush1.msra.mxu0 %v818
        %1485 = vmatprep.subr.mxu0 0.0
        %1486 = vmatpush2.msra.mxu0 0.0
        %1487 = vmatprep.subr.mxu0 0.0
        %1488 = vmatpush2.msra.mxu0 0.0
        %1489 = vmatprep.subr.mxu0 0.0
        %1490 = vmatpush2.msra.mxu0 0.0
        %1491 = vmatprep.subr.mxu0 0.0
        %1492 = vmatpush2.msra.mxu0 0.0
        %1493 = vmatprep.subr.mxu0 0.0
        %1494 = vmatpush2.msra.mxu0 0.0
        %1495 = vmatprep.subr.mxu0 0.0
        %1496 = vmatpush2.msra.mxu0 0.0
        %1497 = vmatprep.subr.mxu0 0.0
        %1498 = vmatpush2.msra.mxu0 0.0
        %1499 = vmatprep.subr.mxu0 0.0
        %1500 = vmatpush2.msra.mxu0 0.0
        %1501 = vmatprep.subr.mxu0 0.0
        %1502 = vmatpush2.msra.mxu0 0.0
        %1503 = vmatprep.subr.mxu0 0.0
        %1504 = vmatpush2.msra.mxu0 0.0
        %1505 = vmatprep.subr.mxu0 0.0
        %1506 = vmatpush2.msra.mxu0 0.0
        %1507 = vmatprep.subr.mxu0 0.0
        %1508 = vmatpush2.msra.mxu0 0.0
        %1509 = vmatprep.subr.mxu0 0.0
        %1510 = vmatpush2.msra.mxu0 0.0
        %1511 = vmatprep.subr.mxu0 0.0
        %1512 = vmatpush2.msra.mxu0 0.0
        %1513 = vmatprep.subr.mxu0 0.0
        %1514 = vmatpush2.msra.mxu0 0.0
        %1515 = vmatprep.subr.mxu0 0.0
        %1516 = vmatpush2.msra.mxu0 0.0
        %1517 = vmatprep.mubr.f32.mxu0 0.0
        %1518 = vmatmul.mubr.f32.gmra.mxu0 %v1451
        %v1519 = vpop.f32.mrf.mxu0
        %v1520 = vadd.f32 0.0, %v1519
        %v1521 = vpop.f32.mrf.mxu0
        %1522 = vdwg.mxu0
        %v1523 = vmul.f32 %v1520, %v731
        %v1525 = vsel %vm617, %v1523, 0
        %1527 = vmatprep.subr.mxu0 0.0
        %1528 = vmatpush1.msra.mxu0 0.0
        %1529 = vmatprep.subr.mxu0 0.0
        %1530 = vmatpush1.msra.mxu0 0.0
        %1531 = vmatprep.subr.mxu0 0.0
        %1532 = vmatpush1.msra.mxu0 0.0
        %1533 = vmatprep.subr.mxu0 0.0
        %1534 = vmatpush1.msra.mxu0 0.0
        %1535 = vmatprep.subr.mxu0 0.0
        %1536 = vmatpush1.msra.mxu0 0.0
        %1537 = vmatprep.subr.mxu0 0.0
        %1538 = vmatpush1.msra.mxu0 0.0
        %1539 = vmatprep.subr.mxu0 0.0
        %1540 = vmatpush1.msra.mxu0 0.0
        %1541 = vmatprep.subr.mxu0 0.0
        %1542 = vmatpush1.msra.mxu0 0.0
        %1543 = vmatprep.subr.mxu0 0.0
        %1544 = vmatpush1.msra.mxu0 %v826
        %1545 = vmatprep.subr.mxu0 0.0
        %1546 = vmatpush1.msra.mxu0 %v825
        %1547 = vmatprep.subr.mxu0 0.0
        %1548 = vmatpush1.msra.mxu0 %v824
        %1549 = vmatprep.subr.mxu0 0.0
        %1550 = vmatpush1.msra.mxu0 %v823
        %1551 = vmatprep.subr.mxu0 0.0
        %1552 = vmatpush1.msra.mxu0 %v822
        %1553 = vmatprep.subr.mxu0 0.0
        %1554 = vmatpush1.msra.mxu0 %v821
        %1555 = vmatprep.subr.mxu0 0.0
        %1556 = vmatpush1.msra.mxu0 %v820
        %1557 = vmatprep.subr.mxu0 0.0
        %1558 = vmatpush1.msra.mxu0 %v819
        %1559 = vmatprep.subr.mxu0 0.0
        %1560 = vmatpush2.msra.mxu0 0.0
        %1561 = vmatprep.subr.mxu0 0.0
        %1562 = vmatpush2.msra.mxu0 0.0
        %1563 = vmatprep.subr.mxu0 0.0
        %1564 = vmatpush2.msra.mxu0 0.0
        %1565 = vmatprep.subr.mxu0 0.0
        %1566 = vmatpush2.msra.mxu0 0.0
        %1567 = vmatprep.subr.mxu0 0.0
        %1568 = vmatpush2.msra.mxu0 0.0
        %1569 = vmatprep.subr.mxu0 0.0
        %1570 = vmatpush2.msra.mxu0 0.0
        %1571 = vmatprep.subr.mxu0 0.0
        %1572 = vmatpush2.msra.mxu0 0.0
        %1573 = vmatprep.subr.mxu0 0.0
        %1574 = vmatpush2.msra.mxu0 0.0
        %1575 = vmatprep.subr.mxu0 0.0
        %1576 = vmatpush2.msra.mxu0 0.0
        %1577 = vmatprep.subr.mxu0 0.0
        %1578 = vmatpush2.msra.mxu0 0.0
        %1579 = vmatprep.subr.mxu0 0.0
        %1580 = vmatpush2.msra.mxu0 0.0
        %1581 = vmatprep.subr.mxu0 0.0
        %1582 = vmatpush2.msra.mxu0 0.0
        %1583 = vmatprep.subr.mxu0 0.0
        %1584 = vmatpush2.msra.mxu0 0.0
        %1585 = vmatprep.subr.mxu0 0.0
        %1586 = vmatpush2.msra.mxu0 0.0
        %1587 = vmatprep.subr.mxu0 0.0
        %1588 = vmatpush2.msra.mxu0 0.0
        %1589 = vmatprep.subr.mxu0 0.0
        %1590 = vmatpush2.msra.mxu0 0.0
        %1591 = vmatprep.mubr.f32.mxu0 0.0
        %1592 = vmatmul.mubr.f32.gmra.mxu0 %v1525
        %v1593 = vpop.f32.mrf.mxu0
        %v1594 = vadd.f32 %v836, %v1593
        %v1595 = vpop.f32.mrf.mxu0
        %1596 = vdwg.mxu0
        %v1597 = vsel %vm837, %v1594, -inf
        %1598 = vmax.xlane.f32.xlu0 %v1597
        %v1599 = vpop.xlane.xlu0 %1598
        %v1600 = vsub.f32 %v1594, %v1599
        %v1601 = vmul.f32 %v1600, 1.442695
        %v1602 = vpow.pop %v1601
        %v1603 = vsel %vm837, %v1602, 0.0
        %1604 = vadd.xlane.f32.xlu0 %v1603
        %v1605 = vpop.xlane.xlu0 %1604
        %v1606 = vrcp.pop %v1605
        %v1607 = vmul.f32 %v1602, %v1606
        %v1609 = vsel %vm837, %v1607, 0
        %1611 = vmatprep.subr.mxu0 0.0
        %1612 = vmatpush1.msra.mxu0 0.0
        %1613 = vmatprep.subr.mxu0 0.0
        %1614 = vmatpush1.msra.mxu0 0.0
        %1615 = vmatprep.subr.mxu0 0.0
        %1616 = vmatpush1.msra.mxu0 0.0
        %1617 = vmatprep.subr.mxu0 0.0
        %1618 = vmatpush1.msra.mxu0 0.0
        %1619 = vmatprep.subr.mxu0 0.0
        %1620 = vmatpush1.msra.mxu0 0.0
        %1621 = vmatprep.subr.mxu0 0.0
        %1622 = vmatpush1.msra.mxu0 0.0
        %1623 = vmatprep.subr.mxu0 0.0
        %1624 = vmatpush1.msra.mxu0 0.0
        %1625 = vmatprep.subr.mxu0 0.0
        %1626 = vmatpush1.msra.mxu0 0.0
        %1627 = vmatprep.subr.mxu0 0.0
        %1628 = vmatpush1.msra.mxu0 0.0
        %1629 = vmatprep.subr.mxu0 0.0
        %1630 = vmatpush1.msra.mxu0 0.0
        %1631 = vmatprep.subr.mxu0 0.0
        %1632 = vmatpush1.msra.mxu0 0.0
        %1633 = vmatprep.subr.mxu0 0.0
        %1634 = vmatpush1.msra.mxu0 0.0
        %1635 = vmatprep.subr.mxu0 0.0
        %1636 = vmatpush1.msra.mxu0 0.0
        %1637 = vmatprep.subr.mxu0 0.0
        %1638 = vmatpush1.msra.mxu0 0.0
        %1639 = vmatprep.subr.mxu0 0.0
        %1640 = vmatpush1.msra.mxu0 0.0
        %1641 = vmatprep.subr.mxu0 0.0
        %1642 = vmatpush1.msra.mxu0 %v827
        %1643 = vmatprep.subr.mxu0 0.0
        %1644 = vmatpush2.msra.mxu0 0.0
        %1645 = vmatprep.subr.mxu0 0.0
        %1646 = vmatpush2.msra.mxu0 0.0
        %1647 = vmatprep.subr.mxu0 0.0
        %1648 = vmatpush2.msra.mxu0 0.0
        %1649 = vmatprep.subr.mxu0 0.0
        %1650 = vmatpush2.msra.mxu0 0.0
        %1651 = vmatprep.subr.mxu0 0.0
        %1652 = vmatpush2.msra.mxu0 0.0
        %1653 = vmatprep.subr.mxu0 0.0
        %1654 = vmatpush2.msra.mxu0 0.0
        %1655 = vmatprep.subr.mxu0 0.0
        %1656 = vmatpush2.msra.mxu0 0.0
        %1657 = vmatprep.subr.mxu0 0.0
        %1658 = vmatpush2.msra.mxu0 0.0
        %1659 = vmatprep.subr.mxu0 0.0
        %1660 = vmatpush2.msra.mxu0 0.0
        %1661 = vmatprep.subr.mxu0 0.0
        %1662 = vmatpush2.msra.mxu0 0.0
        %1663 = vmatprep.subr.mxu0 0.0
        %1664 = vmatpush2.msra.mxu0 0.0
        %1665 = vmatprep.subr.mxu0 0.0
        %1666 = vmatpush2.msra.mxu0 0.0
        %1667 = vmatprep.subr.mxu0 0.0
        %1668 = vmatpush2.msra.mxu0 0.0
        %1669 = vmatprep.subr.mxu0 0.0
        %1670 = vmatpush2.msra.mxu0 0.0
        %1671 = vmatprep.subr.mxu0 0.0
        %1672 = vmatpush2.msra.mxu0 0.0
        %1673 = vmatprep.subr.mxu0 0.0
        %1674 = vmatpush2.msra.mxu0 0.0
        %1675 = vmatprep.mubr.f32.mxu0 0.0
        %1676 = vmatmul.mubr.f32.gmra.mxu0 %v1609
        %v1677 = vpop.f32.mrf.mxu0
        %v1678 = vadd.f32 0.0, %v1677
        %v1679 = vpop.f32.mrf.mxu0
        %1680 = vdwg.mxu0
        %v1681 = vmul.f32 %v1678, %v813
        %v1683 = vsel %vm617, %v1681, 0
        %1685 = vmatprep.subr.mxu0 0.0
        %1686 = vmatpush1.msra.mxu0 0.0
        %1687 = vmatprep.subr.mxu0 0.0
        %1688 = vmatpush1.msra.mxu0 0.0
        %1689 = vmatprep.subr.mxu0 0.0
        %1690 = vmatpush1.msra.mxu0 0.0
        %1691 = vmatprep.subr.mxu0 0.0
        %1692 = vmatpush1.msra.mxu0 0.0
        %1693 = vmatprep.subr.mxu0 0.0
        %1694 = vmatpush1.msra.mxu0 0.0
        %1695 = vmatprep.subr.mxu0 0.0
        %1696 = vmatpush1.msra.mxu0 0.0
        %1697 = vmatprep.subr.mxu0 0.0
        %1698 = vmatpush1.msra.mxu0 0.0
        %1699 = vmatprep.subr.mxu0 0.0
        %1700 = vmatpush1.msra.mxu0 0.0
        %1701 = vmatprep.subr.mxu0 0.0
        %1702 = vmatpush1.msra.mxu0 %v835
        %1703 = vmatprep.subr.mxu0 0.0
        %1704 = vmatpush1.msra.mxu0 %v834
        %1705 = vmatprep.subr.mxu0 0.0
        %1706 = vmatpush1.msra.mxu0 %v833
        %1707 = vmatprep.subr.mxu0 0.0
        %1708 = vmatpush1.msra.mxu0 %v832
        %1709 = vmatprep.subr.mxu0 0.0
        %1710 = vmatpush1.msra.mxu0 %v831
        %1711 = vmatprep.subr.mxu0 0.0
        %1712 = vmatpush1.msra.mxu0 %v830
        %1713 = vmatprep.subr.mxu0 0.0
        %1714 = vmatpush1.msra.mxu0 %v829
        %1715 = vmatprep.subr.mxu0 0.0
        %1716 = vmatpush1.msra.mxu0 %v828
        %1717 = vmatprep.subr.mxu0 0.0
        %1718 = vmatpush2.msra.mxu0 0.0
        %1719 = vmatprep.subr.mxu0 0.0
        %1720 = vmatpush2.msra.mxu0 0.0
        %1721 = vmatprep.subr.mxu0 0.0
        %1722 = vmatpush2.msra.mxu0 0.0
        %1723 = vmatprep.subr.mxu0 0.0
        %1724 = vmatpush2.msra.mxu0 0.0
        %1725 = vmatprep.subr.mxu0 0.0
        %1726 = vmatpush2.msra.mxu0 0.0
        %1727 = vmatprep.subr.mxu0 0.0
        %1728 = vmatpush2.msra.mxu0 0.0
        %1729 = vmatprep.subr.mxu0 0.0
        %1730 = vmatpush2.msra.mxu0 0.0
        %1731 = vmatprep.subr.mxu0 0.0
        %1732 = vmatpush2.msra.mxu0 0.0
        %1733 = vmatprep.subr.mxu0 0.0
        %1734 = vmatpush2.msra.mxu0 0.0
        %1735 = vmatprep.subr.mxu0 0.0
        %1736 = vmatpush2.msra.mxu0 0.0
        %1737 = vmatprep.subr.mxu0 0.0
        %1738 = vmatpush2.msra.mxu0 0.0
        %1739 = vmatprep.subr.mxu0 0.0
        %1740 = vmatpush2.msra.mxu0 0.0
        %1741 = vmatprep.subr.mxu0 0.0
        %1742 = vmatpush2.msra.mxu0 0.0
        %1743 = vmatprep.subr.mxu0 0.0
        %1744 = vmatpush2.msra.mxu0 0.0
        %1745 = vmatprep.subr.mxu0 0.0
        %1746 = vmatpush2.msra.mxu0 0.0
        %1747 = vmatprep.subr.mxu0 0.0
        %1748 = vmatpush2.msra.mxu0 0.0
        %1749 = vmatprep.mubr.f32.mxu0 0.0
        %1750 = vmatmul.mubr.f32.gmra.mxu0 %v1683
        %v1751 = vpop.f32.mrf.mxu0
        %v1752 = vadd.f32 0.0, %v1751
        %v1753 = vpop.f32.mrf.mxu0
        %1754 = vdwg.mxu0
        %1755 = vrot.lane.b32.xlu0 %v656, 104
        %v1756 = vpop.permute.xlu0 %1755
        %v1757 = vsel %vm837, %v1756, 0
        %1759 = vmatprep.subr.mxu0 0.0
        %1760 = vmatpush1.msra.mxu0 0.0
        %1761 = vmatprep.subr.mxu0 0.0
        %1762 = vmatpush1.msra.mxu0 0.0
        %1763 = vmatprep.subr.mxu0 0.0
        %1764 = vmatpush1.msra.mxu0 0.0
        %1765 = vmatprep.subr.mxu0 0.0
        %1766 = vmatpush1.msra.mxu0 0.0
        %1767 = vmatprep.subr.mxu0 0.0
        %1768 = vmatpush1.msra.mxu0 0.0
        %1769 = vmatprep.subr.mxu0 0.0
        %1770 = vmatpush1.msra.mxu0 0.0
        %1771 = vmatprep.subr.mxu0 0.0
        %1772 = vmatpush1.msra.mxu0 0.0
        %1773 = vmatprep.subr.mxu0 0.0
        %1774 = vmatpush1.msra.mxu0 0.0
        %1775 = vmatprep.subr.mxu0 0.0
        %1776 = vmatpush1.msra.mxu0 0.0
        %1777 = vmatprep.subr.mxu0 0.0
        %1778 = vmatpush1.msra.mxu0 0.0
        %1779 = vmatprep.subr.mxu0 0.0
        %1780 = vmatpush1.msra.mxu0 0.0
        %1781 = vmatprep.subr.mxu0 0.0
        %1782 = vmatpush1.msra.mxu0 0.0
        %1783 = vmatprep.subr.mxu0 0.0
        %1784 = vmatpush1.msra.mxu0 0.0
        %1785 = vmatprep.subr.mxu0 0.0
        %1786 = vmatpush1.msra.mxu0 0.0
        %1787 = vmatprep.subr.mxu0 0.0
        %1788 = vmatpush1.msra.mxu0 0.0
        %1789 = vmatprep.subr.mxu0 0.0
        %1790 = vmatpush1.msra.mxu0 %v818
        %1791 = vmatprep.subr.mxu0 0.0
        %1792 = vmatpush2.msra.mxu0 0.0
        %1793 = vmatprep.subr.mxu0 0.0
        %1794 = vmatpush2.msra.mxu0 0.0
        %1795 = vmatprep.subr.mxu0 0.0
        %1796 = vmatpush2.msra.mxu0 0.0
        %1797 = vmatprep.subr.mxu0 0.0
        %1798 = vmatpush2.msra.mxu0 0.0
        %1799 = vmatprep.subr.mxu0 0.0
        %1800 = vmatpush2.msra.mxu0 0.0
        %1801 = vmatprep.subr.mxu0 0.0
        %1802 = vmatpush2.msra.mxu0 0.0
        %1803 = vmatprep.subr.mxu0 0.0
        %1804 = vmatpush2.msra.mxu0 0.0
        %1805 = vmatprep.subr.mxu0 0.0
        %1806 = vmatpush2.msra.mxu0 0.0
        %1807 = vmatprep.subr.mxu0 0.0
        %1808 = vmatpush2.msra.mxu0 0.0
        %1809 = vmatprep.subr.mxu0 0.0
        %1810 = vmatpush2.msra.mxu0 0.0
        %1811 = vmatprep.subr.mxu0 0.0
        %1812 = vmatpush2.msra.mxu0 0.0
        %1813 = vmatprep.subr.mxu0 0.0
        %1814 = vmatpush2.msra.mxu0 0.0
        %1815 = vmatprep.subr.mxu0 0.0
        %1816 = vmatpush2.msra.mxu0 0.0
        %1817 = vmatprep.subr.mxu0 0.0
        %1818 = vmatpush2.msra.mxu0 0.0
        %1819 = vmatprep.subr.mxu0 0.0
        %1820 = vmatpush2.msra.mxu0 0.0
        %1821 = vmatprep.subr.mxu0 0.0
        %1822 = vmatpush2.msra.mxu0 0.0
        %1823 = vmatprep.mubr.f32.mxu0 0.0
        %1824 = vmatmul.mubr.f32.gmra.mxu0 %v1757
        %v1825 = vpop.f32.mrf.mxu0
        %v1826 = vadd.f32 0.0, %v1825
        %v1827 = vpop.f32.mrf.mxu0
        %1828 = vdwg.mxu0
        %v1829 = vmul.f32 %v1826, %v731
        %v1831 = vsel %vm617, %v1829, 0
        %1833 = vmatprep.subr.mxu0 0.0
        %1834 = vmatpush1.msra.mxu0 0.0
        %1835 = vmatprep.subr.mxu0 0.0
        %1836 = vmatpush1.msra.mxu0 0.0
        %1837 = vmatprep.subr.mxu0 0.0
        %1838 = vmatpush1.msra.mxu0 0.0
        %1839 = vmatprep.subr.mxu0 0.0
        %1840 = vmatpush1.msra.mxu0 0.0
        %1841 = vmatprep.subr.mxu0 0.0
        %1842 = vmatpush1.msra.mxu0 0.0
        %1843 = vmatprep.subr.mxu0 0.0
        %1844 = vmatpush1.msra.mxu0 0.0
        %1845 = vmatprep.subr.mxu0 0.0
        %1846 = vmatpush1.msra.mxu0 0.0
        %1847 = vmatprep.subr.mxu0 0.0
        %1848 = vmatpush1.msra.mxu0 0.0
        %1849 = vmatprep.subr.mxu0 0.0
        %1850 = vmatpush1.msra.mxu0 %v826
        %1851 = vmatprep.subr.mxu0 0.0
        %1852 = vmatpush1.msra.mxu0 %v825
        %1853 = vmatprep.subr.mxu0 0.0
        %1854 = vmatpush1.msra.mxu0 %v824
        %1855 = vmatprep.subr.mxu0 0.0
        %1856 = vmatpush1.msra.mxu0 %v823
        %1857 = vmatprep.subr.mxu0 0.0
        %1858 = vmatpush1.msra.mxu0 %v822
        %1859 = vmatprep.subr.mxu0 0.0
        %1860 = vmatpush1.msra.mxu0 %v821
        %1861 = vmatprep.subr.mxu0 0.0
        %1862 = vmatpush1.msra.mxu0 %v820
        %1863 = vmatprep.subr.mxu0 0.0
        %1864 = vmatpush1.msra.mxu0 %v819
        %1865 = vmatprep.subr.mxu0 0.0
        %1866 = vmatpush2.msra.mxu0 0.0
        %1867 = vmatprep.subr.mxu0 0.0
        %1868 = vmatpush2.msra.mxu0 0.0
        %1869 = vmatprep.subr.mxu0 0.0
        %1870 = vmatpush2.msra.mxu0 0.0
        %1871 = vmatprep.subr.mxu0 0.0
        %1872 = vmatpush2.msra.mxu0 0.0
        %1873 = vmatprep.subr.mxu0 0.0
        %1874 = vmatpush2.msra.mxu0 0.0
        %1875 = vmatprep.subr.mxu0 0.0
        %1876 = vmatpush2.msra.mxu0 0.0
        %1877 = vmatprep.subr.mxu0 0.0
        %1878 = vmatpush2.msra.mxu0 0.0
        %1879 = vmatprep.subr.mxu0 0.0
        %1880 = vmatpush2.msra.mxu0 0.0
        %1881 = vmatprep.subr.mxu0 0.0
        %1882 = vmatpush2.msra.mxu0 0.0
        %1883 = vmatprep.subr.mxu0 0.0
        %1884 = vmatpush2.msra.mxu0 0.0
        %1885 = vmatprep.subr.mxu0 0.0
        %1886 = vmatpush2.msra.mxu0 0.0
        %1887 = vmatprep.subr.mxu0 0.0
        %1888 = vmatpush2.msra.mxu0 0.0
        %1889 = vmatprep.subr.mxu0 0.0
        %1890 = vmatpush2.msra.mxu0 0.0
        %1891 = vmatprep.subr.mxu0 0.0
        %1892 = vmatpush2.msra.mxu0 0.0
        %1893 = vmatprep.subr.mxu0 0.0
        %1894 = vmatpush2.msra.mxu0 0.0
        %1895 = vmatprep.subr.mxu0 0.0
        %1896 = vmatpush2.msra.mxu0 0.0
        %1897 = vmatprep.mubr.f32.mxu0 0.0
        %1898 = vmatmul.mubr.f32.gmra.mxu0 %v1831
        %v1899 = vpop.f32.mrf.mxu0
        %v1900 = vadd.f32 %v836, %v1899
        %v1901 = vpop.f32.mrf.mxu0
        %1902 = vdwg.mxu0
        %v1903 = vsel %vm837, %v1900, -inf
        %1904 = vmax.xlane.f32.xlu0 %v1903
        %v1905 = vpop.xlane.xlu0 %1904
        %v1906 = vsub.f32 %v1900, %v1905
        %v1907 = vmul.f32 %v1906, 1.442695
        %v1908 = vpow.pop %v1907
        %v1909 = vsel %vm837, %v1908, 0.0
        %1910 = vadd.xlane.f32.xlu0 %v1909
        %v1911 = vpop.xlane.xlu0 %1910
        %v1912 = vrcp.pop %v1911
        %v1913 = vmul.f32 %v1908, %v1912
        %v1915 = vsel %vm837, %v1913, 0
        %1917 = vmatprep.subr.mxu0 0.0
        %1918 = vmatpush1.msra.mxu0 0.0
        %1919 = vmatprep.subr.mxu0 0.0
        %1920 = vmatpush1.msra.mxu0 0.0
        %1921 = vmatprep.subr.mxu0 0.0
        %1922 = vmatpush1.msra.mxu0 0.0
        %1923 = vmatprep.subr.mxu0 0.0
        %1924 = vmatpush1.msra.mxu0 0.0
        %1925 = vmatprep.subr.mxu0 0.0
        %1926 = vmatpush1.msra.mxu0 0.0
        %1927 = vmatprep.subr.mxu0 0.0
        %1928 = vmatpush1.msra.mxu0 0.0
        %1929 = vmatprep.subr.mxu0 0.0
        %1930 = vmatpush1.msra.mxu0 0.0
        %1931 = vmatprep.subr.mxu0 0.0
        %1932 = vmatpush1.msra.mxu0 0.0
        %1933 = vmatprep.subr.mxu0 0.0
        %1934 = vmatpush1.msra.mxu0 0.0
        %1935 = vmatprep.subr.mxu0 0.0
        %1936 = vmatpush1.msra.mxu0 0.0
        %1937 = vmatprep.subr.mxu0 0.0
        %1938 = vmatpush1.msra.mxu0 0.0
        %1939 = vmatprep.subr.mxu0 0.0
        %1940 = vmatpush1.msra.mxu0 0.0
        %1941 = vmatprep.subr.mxu0 0.0
        %1942 = vmatpush1.msra.mxu0 0.0
        %1943 = vmatprep.subr.mxu0 0.0
        %1944 = vmatpush1.msra.mxu0 0.0
        %1945 = vmatprep.subr.mxu0 0.0
        %1946 = vmatpush1.msra.mxu0 0.0
        %1947 = vmatprep.subr.mxu0 0.0
        %1948 = vmatpush1.msra.mxu0 %v827
        %1949 = vmatprep.subr.mxu0 0.0
        %1950 = vmatpush2.msra.mxu0 0.0
        %1951 = vmatprep.subr.mxu0 0.0
        %1952 = vmatpush2.msra.mxu0 0.0
        %1953 = vmatprep.subr.mxu0 0.0
        %1954 = vmatpush2.msra.mxu0 0.0
        %1955 = vmatprep.subr.mxu0 0.0
        %1956 = vmatpush2.msra.mxu0 0.0
        %1957 = vmatprep.subr.mxu0 0.0
        %1958 = vmatpush2.msra.mxu0 0.0
        %1959 = vmatprep.subr.mxu0 0.0
        %1960 = vmatpush2.msra.mxu0 0.0
        %1961 = vmatprep.subr.mxu0 0.0
        %1962 = vmatpush2.msra.mxu0 0.0
        %1963 = vmatprep.subr.mxu0 0.0
        %1964 = vmatpush2.msra.mxu0 0.0
        %1965 = vmatprep.subr.mxu0 0.0
        %1966 = vmatpush2.msra.mxu0 0.0
        %1967 = vmatprep.subr.mxu0 0.0
        %1968 = vmatpush2.msra.mxu0 0.0
        %1969 = vmatprep.subr.mxu0 0.0
        %1970 = vmatpush2.msra.mxu0 0.0
        %1971 = vmatprep.subr.mxu0 0.0
        %1972 = vmatpush2.msra.mxu0 0.0
        %1973 = vmatprep.subr.mxu0 0.0
        %1974 = vmatpush2.msra.mxu0 0.0
        %1975 = vmatprep.subr.mxu0 0.0
        %1976 = vmatpush2.msra.mxu0 0.0
        %1977 = vmatprep.subr.mxu0 0.0
        %1978 = vmatpush2.msra.mxu0 0.0
        %1979 = vmatprep.subr.mxu0 0.0
        %1980 = vmatpush2.msra.mxu0 0.0
        %1981 = vmatprep.mubr.f32.mxu0 0.0
        %1982 = vmatmul.mubr.f32.gmra.mxu0 %v1915
        %v1983 = vpop.f32.mrf.mxu0
        %v1984 = vadd.f32 0.0, %v1983
        %v1985 = vpop.f32.mrf.mxu0
        %1986 = vdwg.mxu0
        %v1987 = vmul.f32 %v1984, %v813
        %v1989 = vsel %vm617, %v1987, 0
        %1991 = vmatprep.subr.mxu0 0.0
        %1992 = vmatpush1.msra.mxu0 0.0
        %1993 = vmatprep.subr.mxu0 0.0
        %1994 = vmatpush1.msra.mxu0 0.0
        %1995 = vmatprep.subr.mxu0 0.0
        %1996 = vmatpush1.msra.mxu0 0.0
        %1997 = vmatprep.subr.mxu0 0.0
        %1998 = vmatpush1.msra.mxu0 0.0
        %1999 = vmatprep.subr.mxu0 0.0
        %2000 = vmatpush1.msra.mxu0 0.0
        %2001 = vmatprep.subr.mxu0 0.0
        %2002 = vmatpush1.msra.mxu0 0.0
        %2003 = vmatprep.subr.mxu0 0.0
        %2004 = vmatpush1.msra.mxu0 0.0
        %2005 = vmatprep.subr.mxu0 0.0
        %2006 = vmatpush1.msra.mxu0 0.0
        %2007 = vmatprep.subr.mxu0 0.0
        %2008 = vmatpush1.msra.mxu0 %v835
        %2009 = vmatprep.subr.mxu0 0.0
        %2010 = vmatpush1.msra.mxu0 %v834
        %2011 = vmatprep.subr.mxu0 0.0
        %2012 = vmatpush1.msra.mxu0 %v833
        %2013 = vmatprep.subr.mxu0 0.0
        %2014 = vmatpush1.msra.mxu0 %v832
        %2015 = vmatprep.subr.mxu0 0.0
        %2016 = vmatpush1.msra.mxu0 %v831
        %2017 = vmatprep.subr.mxu0 0.0
        %2018 = vmatpush1.msra.mxu0 %v830
        %2019 = vmatprep.subr.mxu0 0.0
        %2020 = vmatpush1.msra.mxu0 %v829
        %2021 = vmatprep.subr.mxu0 0.0
        %2022 = vmatpush1.msra.mxu0 %v828
        %2023 = vmatprep.subr.mxu0 0.0
        %2024 = vmatpush2.msra.mxu0 0.0
        %2025 = vmatprep.subr.mxu0 0.0
        %2026 = vmatpush2.msra.mxu0 0.0
        %2027 = vmatprep.subr.mxu0 0.0
        %2028 = vmatpush2.msra.mxu0 0.0
        %2029 = vmatprep.subr.mxu0 0.0
        %2030 = vmatpush2.msra.mxu0 0.0
        %2031 = vmatprep.subr.mxu0 0.0
        %2032 = vmatpush2.msra.mxu0 0.0
        %2033 = vmatprep.subr.mxu0 0.0
        %2034 = vmatpush2.msra.mxu0 0.0
        %2035 = vmatprep.subr.mxu0 0.0
        %2036 = vmatpush2.msra.mxu0 0.0
        %2037 = vmatprep.subr.mxu0 0.0
        %2038 = vmatpush2.msra.mxu0 0.0
        %2039 = vmatprep.subr.mxu0 0.0
        %2040 = vmatpush2.msra.mxu0 0.0
        %2041 = vmatprep.subr.mxu0 0.0
        %2042 = vmatpush2.msra.mxu0 0.0
        %2043 = vmatprep.subr.mxu0 0.0
        %2044 = vmatpush2.msra.mxu0 0.0
        %2045 = vmatprep.subr.mxu0 0.0
        %2046 = vmatpush2.msra.mxu0 0.0
        %2047 = vmatprep.subr.mxu0 0.0
        %2048 = vmatpush2.msra.mxu0 0.0
        %2049 = vmatprep.subr.mxu0 0.0
        %2050 = vmatpush2.msra.mxu0 0.0
        %2051 = vmatprep.subr.mxu0 0.0
        %2052 = vmatpush2.msra.mxu0 0.0
        %2053 = vmatprep.subr.mxu0 0.0
        %2054 = vmatpush2.msra.mxu0 0.0
        %2055 = vmatprep.mubr.f32.mxu0 0.0
        %2056 = vmatmul.mubr.f32.gmra.mxu0 %v1989
        %v2057 = vpop.f32.mrf.mxu0
        %v2058 = vadd.f32 0.0, %v2057
        %v2059 = vpop.f32.mrf.mxu0
        %2060 = vdwg.mxu0
        %2061 = vrot.lane.b32.xlu0 %v656, 96
        %v2062 = vpop.permute.xlu0 %2061
        %v2063 = vsel %vm837, %v2062, 0
        %2065 = vmatprep.subr.mxu0 0.0
        %2066 = vmatpush1.msra.mxu0 0.0
        %2067 = vmatprep.subr.mxu0 0.0
        %2068 = vmatpush1.msra.mxu0 0.0
        %2069 = vmatprep.subr.mxu0 0.0
        %2070 = vmatpush1.msra.mxu0 0.0
        %2071 = vmatprep.subr.mxu0 0.0
        %2072 = vmatpush1.msra.mxu0 0.0
        %2073 = vmatprep.subr.mxu0 0.0
        %2074 = vmatpush1.msra.mxu0 0.0
        %2075 = vmatprep.subr.mxu0 0.0
        %2076 = vmatpush1.msra.mxu0 0.0
        %2077 = vmatprep.subr.mxu0 0.0
        %2078 = vmatpush1.msra.mxu0 0.0
        %2079 = vmatprep.subr.mxu0 0.0
        %2080 = vmatpush1.msra.mxu0 0.0
        %2081 = vmatprep.subr.mxu0 0.0
        %2082 = vmatpush1.msra.mxu0 0.0
        %2083 = vmatprep.subr.mxu0 0.0
        %2084 = vmatpush1.msra.mxu0 0.0
        %2085 = vmatprep.subr.mxu0 0.0
        %2086 = vmatpush1.msra.mxu0 0.0
        %2087 = vmatprep.subr.mxu0 0.0
        %2088 = vmatpush1.msra.mxu0 0.0
        %2089 = vmatprep.subr.mxu0 0.0
        %2090 = vmatpush1.msra.mxu0 0.0
        %2091 = vmatprep.subr.mxu0 0.0
        %2092 = vmatpush1.msra.mxu0 0.0
        %2093 = vmatprep.subr.mxu0 0.0
        %2094 = vmatpush1.msra.mxu0 0.0
        %2095 = vmatprep.subr.mxu0 0.0
        %2096 = vmatpush1.msra.mxu0 %v818
        %2097 = vmatprep.subr.mxu0 0.0
        %2098 = vmatpush2.msra.mxu0 0.0
        %2099 = vmatprep.subr.mxu0 0.0
        %2100 = vmatpush2.msra.mxu0 0.0
        %2101 = vmatprep.subr.mxu0 0.0
        %2102 = vmatpush2.msra.mxu0 0.0
        %2103 = vmatprep.subr.mxu0 0.0
        %2104 = vmatpush2.msra.mxu0 0.0
        %2105 = vmatprep.subr.mxu0 0.0
        %2106 = vmatpush2.msra.mxu0 0.0
        %2107 = vmatprep.subr.mxu0 0.0
        %2108 = vmatpush2.msra.mxu0 0.0
        %2109 = vmatprep.subr.mxu0 0.0
        %2110 = vmatpush2.msra.mxu0 0.0
        %2111 = vmatprep.subr.mxu0 0.0
        %2112 = vmatpush2.msra.mxu0 0.0
        %2113 = vmatprep.subr.mxu0 0.0
        %2114 = vmatpush2.msra.mxu0 0.0
        %2115 = vmatprep.subr.mxu0 0.0
        %2116 = vmatpush2.msra.mxu0 0.0
        %2117 = vmatprep.subr.mxu0 0.0
        %2118 = vmatpush2.msra.mxu0 0.0
        %2119 = vmatprep.subr.mxu0 0.0
        %2120 = vmatpush2.msra.mxu0 0.0
        %2121 = vmatprep.subr.mxu0 0.0
        %2122 = vmatpush2.msra.mxu0 0.0
        %2123 = vmatprep.subr.mxu0 0.0
        %2124 = vmatpush2.msra.mxu0 0.0
        %2125 = vmatprep.subr.mxu0 0.0
        %2126 = vmatpush2.msra.mxu0 0.0
        %2127 = vmatprep.subr.mxu0 0.0
        %2128 = vmatpush2.msra.mxu0 0.0
        %2129 = vmatprep.mubr.f32.mxu0 0.0
        %2130 = vmatmul.mubr.f32.gmra.mxu0 %v2063
        %v2131 = vpop.f32.mrf.mxu0
        %v2132 = vadd.f32 0.0, %v2131
        %v2133 = vpop.f32.mrf.mxu0
        %2134 = vdwg.mxu0
        %v2135 = vmul.f32 %v2132, %v731
        %v2137 = vsel %vm617, %v2135, 0
        %2139 = vmatprep.subr.mxu0 0.0
        %2140 = vmatpush1.msra.mxu0 0.0
        %2141 = vmatprep.subr.mxu0 0.0
        %2142 = vmatpush1.msra.mxu0 0.0
        %2143 = vmatprep.subr.mxu0 0.0
        %2144 = vmatpush1.msra.mxu0 0.0
        %2145 = vmatprep.subr.mxu0 0.0
        %2146 = vmatpush1.msra.mxu0 0.0
        %2147 = vmatprep.subr.mxu0 0.0
        %2148 = vmatpush1.msra.mxu0 0.0
        %2149 = vmatprep.subr.mxu0 0.0
        %2150 = vmatpush1.msra.mxu0 0.0
        %2151 = vmatprep.subr.mxu0 0.0
        %2152 = vmatpush1.msra.mxu0 0.0
        %2153 = vmatprep.subr.mxu0 0.0
        %2154 = vmatpush1.msra.mxu0 0.0
        %2155 = vmatprep.subr.mxu0 0.0
        %2156 = vmatpush1.msra.mxu0 %v826
        %2157 = vmatprep.subr.mxu0 0.0
        %2158 = vmatpush1.msra.mxu0 %v825
        %2159 = vmatprep.subr.mxu0 0.0
        %2160 = vmatpush1.msra.mxu0 %v824
        %2161 = vmatprep.subr.mxu0 0.0
        %2162 = vmatpush1.msra.mxu0 %v823
        %2163 = vmatprep.subr.mxu0 0.0
        %2164 = vmatpush1.msra.mxu0 %v822
        %2165 = vmatprep.subr.mxu0 0.0
        %2166 = vmatpush1.msra.mxu0 %v821
        %2167 = vmatprep.subr.mxu0 0.0
        %2168 = vmatpush1.msra.mxu0 %v820
        %2169 = vmatprep.subr.mxu0 0.0
        %2170 = vmatpush1.msra.mxu0 %v819
        %2171 = vmatprep.subr.mxu0 0.0
        %2172 = vmatpush2.msra.mxu0 0.0
        %2173 = vmatprep.subr.mxu0 0.0
        %2174 = vmatpush2.msra.mxu0 0.0
        %2175 = vmatprep.subr.mxu0 0.0
        %2176 = vmatpush2.msra.mxu0 0.0
        %2177 = vmatprep.subr.mxu0 0.0
        %2178 = vmatpush2.msra.mxu0 0.0
        %2179 = vmatprep.subr.mxu0 0.0
        %2180 = vmatpush2.msra.mxu0 0.0
        %2181 = vmatprep.subr.mxu0 0.0
        %2182 = vmatpush2.msra.mxu0 0.0
        %2183 = vmatprep.subr.mxu0 0.0
        %2184 = vmatpush2.msra.mxu0 0.0
        %2185 = vmatprep.subr.mxu0 0.0
        %2186 = vmatpush2.msra.mxu0 0.0
        %2187 = vmatprep.subr.mxu0 0.0
        %2188 = vmatpush2.msra.mxu0 0.0
        %2189 = vmatprep.subr.mxu0 0.0
        %2190 = vmatpush2.msra.mxu0 0.0
        %2191 = vmatprep.subr.mxu0 0.0
        %2192 = vmatpush2.msra.mxu0 0.0
        %2193 = vmatprep.subr.mxu0 0.0
        %2194 = vmatpush2.msra.mxu0 0.0
        %2195 = vmatprep.subr.mxu0 0.0
        %2196 = vmatpush2.msra.mxu0 0.0
        %2197 = vmatprep.subr.mxu0 0.0
        %2198 = vmatpush2.msra.mxu0 0.0
        %2199 = vmatprep.subr.mxu0 0.0
        %2200 = vmatpush2.msra.mxu0 0.0
        %2201 = vmatprep.subr.mxu0 0.0
        %2202 = vmatpush2.msra.mxu0 0.0
        %2203 = vmatprep.mubr.f32.mxu0 0.0
        %2204 = vmatmul.mubr.f32.gmra.mxu0 %v2137
        %v2205 = vpop.f32.mrf.mxu0
        %v2206 = vadd.f32 %v836, %v2205
        %v2207 = vpop.f32.mrf.mxu0
        %2208 = vdwg.mxu0
        %v2209 = vsel %vm837, %v2206, -inf
        %2210 = vmax.xlane.f32.xlu0 %v2209
        %v2211 = vpop.xlane.xlu0 %2210
        %v2212 = vsub.f32 %v2206, %v2211
        %v2213 = vmul.f32 %v2212, 1.442695
        %v2214 = vpow.pop %v2213
        %v2215 = vsel %vm837, %v2214, 0.0
        %2216 = vadd.xlane.f32.xlu0 %v2215
        %v2217 = vpop.xlane.xlu0 %2216
        %v2218 = vrcp.pop %v2217
        %v2219 = vmul.f32 %v2214, %v2218
        %v2221 = vsel %vm837, %v2219, 0
        %2223 = vmatprep.subr.mxu0 0.0
        %2224 = vmatpush1.msra.mxu0 0.0
        %2225 = vmatprep.subr.mxu0 0.0
        %2226 = vmatpush1.msra.mxu0 0.0
        %2227 = vmatprep.subr.mxu0 0.0
        %2228 = vmatpush1.msra.mxu0 0.0
        %2229 = vmatprep.subr.mxu0 0.0
        %2230 = vmatpush1.msra.mxu0 0.0
        %2231 = vmatprep.subr.mxu0 0.0
        %2232 = vmatpush1.msra.mxu0 0.0
        %2233 = vmatprep.subr.mxu0 0.0
        %2234 = vmatpush1.msra.mxu0 0.0
        %2235 = vmatprep.subr.mxu0 0.0
        %2236 = vmatpush1.msra.mxu0 0.0
        %2237 = vmatprep.subr.mxu0 0.0
        %2238 = vmatpush1.msra.mxu0 0.0
        %2239 = vmatprep.subr.mxu0 0.0
        %2240 = vmatpush1.msra.mxu0 0.0
        %2241 = vmatprep.subr.mxu0 0.0
        %2242 = vmatpush1.msra.mxu0 0.0
        %2243 = vmatprep.subr.mxu0 0.0
        %2244 = vmatpush1.msra.mxu0 0.0
        %2245 = vmatprep.subr.mxu0 0.0
        %2246 = vmatpush1.msra.mxu0 0.0
        %2247 = vmatprep.subr.mxu0 0.0
        %2248 = vmatpush1.msra.mxu0 0.0
        %2249 = vmatprep.subr.mxu0 0.0
        %2250 = vmatpush1.msra.mxu0 0.0
        %2251 = vmatprep.subr.mxu0 0.0
        %2252 = vmatpush1.msra.mxu0 0.0
        %2253 = vmatprep.subr.mxu0 0.0
        %2254 = vmatpush1.msra.mxu0 %v827
        %2255 = vmatprep.subr.mxu0 0.0
        %2256 = vmatpush2.msra.mxu0 0.0
        %2257 = vmatprep.subr.mxu0 0.0
        %2258 = vmatpush2.msra.mxu0 0.0
        %2259 = vmatprep.subr.mxu0 0.0
        %2260 = vmatpush2.msra.mxu0 0.0
        %2261 = vmatprep.subr.mxu0 0.0
        %2262 = vmatpush2.msra.mxu0 0.0
        %2263 = vmatprep.subr.mxu0 0.0
        %2264 = vmatpush2.msra.mxu0 0.0
        %2265 = vmatprep.subr.mxu0 0.0
        %2266 = vmatpush2.msra.mxu0 0.0
        %2267 = vmatprep.subr.mxu0 0.0
        %2268 = vmatpush2.msra.mxu0 0.0
        %2269 = vmatprep.subr.mxu0 0.0
        %2270 = vmatpush2.msra.mxu0 0.0
        %2271 = vmatprep.subr.mxu0 0.0
        %2272 = vmatpush2.msra.mxu0 0.0
        %2273 = vmatprep.subr.mxu0 0.0
        %2274 = vmatpush2.msra.mxu0 0.0
        %2275 = vmatprep.subr.mxu0 0.0
        %2276 = vmatpush2.msra.mxu0 0.0
        %2277 = vmatprep.subr.mxu0 0.0
        %2278 = vmatpush2.msra.mxu0 0.0
        %2279 = vmatprep.subr.mxu0 0.0
        %2280 = vmatpush2.msra.mxu0 0.0
        %2281 = vmatprep.subr.mxu0 0.0
        %2282 = vmatpush2.msra.mxu0 0.0
        %2283 = vmatprep.subr.mxu0 0.0
        %2284 = vmatpush2.msra.mxu0 0.0
        %2285 = vmatprep.subr.mxu0 0.0
        %2286 = vmatpush2.msra.mxu0 0.0
        %2287 = vmatprep.mubr.f32.mxu0 0.0
        %2288 = vmatmul.mubr.f32.gmra.mxu0 %v2221
        %v2289 = vpop.f32.mrf.mxu0
        %v2290 = vadd.f32 0.0, %v2289
        %v2291 = vpop.f32.mrf.mxu0
        %2292 = vdwg.mxu0
        %v2293 = vmul.f32 %v2290, %v813
        %v2295 = vsel %vm617, %v2293, 0
        %2297 = vmatprep.subr.mxu0 0.0
        %2298 = vmatpush1.msra.mxu0 0.0
        %2299 = vmatprep.subr.mxu0 0.0
        %2300 = vmatpush1.msra.mxu0 0.0
        %2301 = vmatprep.subr.mxu0 0.0
        %2302 = vmatpush1.msra.mxu0 0.0
        %2303 = vmatprep.subr.mxu0 0.0
        %2304 = vmatpush1.msra.mxu0 0.0
        %2305 = vmatprep.subr.mxu0 0.0
        %2306 = vmatpush1.msra.mxu0 0.0
        %2307 = vmatprep.subr.mxu0 0.0
        %2308 = vmatpush1.msra.mxu0 0.0
        %2309 = vmatprep.subr.mxu0 0.0
        %2310 = vmatpush1.msra.mxu0 0.0
        %2311 = vmatprep.subr.mxu0 0.0
        %2312 = vmatpush1.msra.mxu0 0.0
        %2313 = vmatprep.subr.mxu0 0.0
        %2314 = vmatpush1.msra.mxu0 %v835
        %2315 = vmatprep.subr.mxu0 0.0
        %2316 = vmatpush1.msra.mxu0 %v834
        %2317 = vmatprep.subr.mxu0 0.0
        %2318 = vmatpush1.msra.mxu0 %v833
        %2319 = vmatprep.subr.mxu0 0.0
        %2320 = vmatpush1.msra.mxu0 %v832
        %2321 = vmatprep.subr.mxu0 0.0
        %2322 = vmatpush1.msra.mxu0 %v831
        %2323 = vmatprep.subr.mxu0 0.0
        %2324 = vmatpush1.msra.mxu0 %v830
        %2325 = vmatprep.subr.mxu0 0.0
        %2326 = vmatpush1.msra.mxu0 %v829
        %2327 = vmatprep.subr.mxu0 0.0
        %2328 = vmatpush1.msra.mxu0 %v828
        %2329 = vmatprep.subr.mxu0 0.0
        %2330 = vmatpush2.msra.mxu0 0.0
        %2331 = vmatprep.subr.mxu0 0.0
        %2332 = vmatpush2.msra.mxu0 0.0
        %2333 = vmatprep.subr.mxu0 0.0
        %2334 = vmatpush2.msra.mxu0 0.0
        %2335 = vmatprep.subr.mxu0 0.0
        %2336 = vmatpush2.msra.mxu0 0.0
        %2337 = vmatprep.subr.mxu0 0.0
        %2338 = vmatpush2.msra.mxu0 0.0
        %2339 = vmatprep.subr.mxu0 0.0
        %2340 = vmatpush2.msra.mxu0 0.0
        %2341 = vmatprep.subr.mxu0 0.0
        %2342 = vmatpush2.msra.mxu0 0.0
        %2343 = vmatprep.subr.mxu0 0.0
        %2344 = vmatpush2.msra.mxu0 0.0
        %2345 = vmatprep.subr.mxu0 0.0
        %2346 = vmatpush2.msra.mxu0 0.0
        %2347 = vmatprep.subr.mxu0 0.0
        %2348 = vmatpush2.msra.mxu0 0.0
        %2349 = vmatprep.subr.mxu0 0.0
        %2350 = vmatpush2.msra.mxu0 0.0
        %2351 = vmatprep.subr.mxu0 0.0
        %2352 = vmatpush2.msra.mxu0 0.0
        %2353 = vmatprep.subr.mxu0 0.0
        %2354 = vmatpush2.msra.mxu0 0.0
        %2355 = vmatprep.subr.mxu0 0.0
        %2356 = vmatpush2.msra.mxu0 0.0
        %2357 = vmatprep.subr.mxu0 0.0
        %2358 = vmatpush2.msra.mxu0 0.0
        %2359 = vmatprep.subr.mxu0 0.0
        %2360 = vmatpush2.msra.mxu0 0.0
        %2361 = vmatprep.mubr.f32.mxu0 0.0
        %2362 = vmatmul.mubr.f32.gmra.mxu0 %v2295
        %v2363 = vpop.f32.mrf.mxu0
        %v2364 = vadd.f32 0.0, %v2363
        %v2365 = vpop.f32.mrf.mxu0
        %2366 = vdwg.mxu0
        %2367 = vrot.lane.b32.xlu0 %v656, 88
        %v2368 = vpop.permute.xlu0 %2367
        %v2369 = vsel %vm837, %v2368, 0
        %2371 = vmatprep.subr.mxu0 0.0
        %2372 = vmatpush1.msra.mxu0 0.0
        %2373 = vmatprep.subr.mxu0 0.0
        %2374 = vmatpush1.msra.mxu0 0.0
        %2375 = vmatprep.subr.mxu0 0.0
        %2376 = vmatpush1.msra.mxu0 0.0
        %2377 = vmatprep.subr.mxu0 0.0
        %2378 = vmatpush1.msra.mxu0 0.0
        %2379 = vmatprep.subr.mxu0 0.0
        %2380 = vmatpush1.msra.mxu0 0.0
        %2381 = vmatprep.subr.mxu0 0.0
        %2382 = vmatpush1.msra.mxu0 0.0
        %2383 = vmatprep.subr.mxu0 0.0
        %2384 = vmatpush1.msra.mxu0 0.0
        %2385 = vmatprep.subr.mxu0 0.0
        %2386 = vmatpush1.msra.mxu0 0.0
        %2387 = vmatprep.subr.mxu0 0.0
        %2388 = vmatpush1.msra.mxu0 0.0
        %2389 = vmatprep.subr.mxu0 0.0
        %2390 = vmatpush1.msra.mxu0 0.0
        %2391 = vmatprep.subr.mxu0 0.0
        %2392 = vmatpush1.msra.mxu0 0.0
        %2393 = vmatprep.subr.mxu0 0.0
        %2394 = vmatpush1.msra.mxu0 0.0
        %2395 = vmatprep.subr.mxu0 0.0
        %2396 = vmatpush1.msra.mxu0 0.0
        %2397 = vmatprep.subr.mxu0 0.0
        %2398 = vmatpush1.msra.mxu0 0.0
        %2399 = vmatprep.subr.mxu0 0.0
        %2400 = vmatpush1.msra.mxu0 0.0
        %2401 = vmatprep.subr.mxu0 0.0
        %2402 = vmatpush1.msra.mxu0 %v818
        %2403 = vmatprep.subr.mxu0 0.0
        %2404 = vmatpush2.msra.mxu0 0.0
        %2405 = vmatprep.subr.mxu0 0.0
        %2406 = vmatpush2.msra.mxu0 0.0
        %2407 = vmatprep.subr.mxu0 0.0
        %2408 = vmatpush2.msra.mxu0 0.0
        %2409 = vmatprep.subr.mxu0 0.0
        %2410 = vmatpush2.msra.mxu0 0.0
        %2411 = vmatprep.subr.mxu0 0.0
        %2412 = vmatpush2.msra.mxu0 0.0
        %2413 = vmatprep.subr.mxu0 0.0
        %2414 = vmatpush2.msra.mxu0 0.0
        %2415 = vmatprep.subr.mxu0 0.0
        %2416 = vmatpush2.msra.mxu0 0.0
        %2417 = vmatprep.subr.mxu0 0.0
        %2418 = vmatpush2.msra.mxu0 0.0
        %2419 = vmatprep.subr.mxu0 0.0
        %2420 = vmatpush2.msra.mxu0 0.0
        %2421 = vmatprep.subr.mxu0 0.0
        %2422 = vmatpush2.msra.mxu0 0.0
        %2423 = vmatprep.subr.mxu0 0.0
        %2424 = vmatpush2.msra.mxu0 0.0
        %2425 = vmatprep.subr.mxu0 0.0
        %2426 = vmatpush2.msra.mxu0 0.0
        %2427 = vmatprep.subr.mxu0 0.0
        %2428 = vmatpush2.msra.mxu0 0.0
        %2429 = vmatprep.subr.mxu0 0.0
        %2430 = vmatpush2.msra.mxu0 0.0
        %2431 = vmatprep.subr.mxu0 0.0
        %2432 = vmatpush2.msra.mxu0 0.0
        %2433 = vmatprep.subr.mxu0 0.0
        %2434 = vmatpush2.msra.mxu0 0.0
        %2435 = vmatprep.mubr.f32.mxu0 0.0
        %2436 = vmatmul.mubr.f32.gmra.mxu0 %v2369
        %v2437 = vpop.f32.mrf.mxu0
        %v2438 = vadd.f32 0.0, %v2437
        %v2439 = vpop.f32.mrf.mxu0
        %2440 = vdwg.mxu0
        %v2441 = vmul.f32 %v2438, %v731
        %v2443 = vsel %vm617, %v2441, 0
        %2445 = vmatprep.subr.mxu0 0.0
        %2446 = vmatpush1.msra.mxu0 0.0
        %2447 = vmatprep.subr.mxu0 0.0
        %2448 = vmatpush1.msra.mxu0 0.0
        %2449 = vmatprep.subr.mxu0 0.0
        %2450 = vmatpush1.msra.mxu0 0.0
        %2451 = vmatprep.subr.mxu0 0.0
        %2452 = vmatpush1.msra.mxu0 0.0
        %2453 = vmatprep.subr.mxu0 0.0
        %2454 = vmatpush1.msra.mxu0 0.0
        %2455 = vmatprep.subr.mxu0 0.0
        %2456 = vmatpush1.msra.mxu0 0.0
        %2457 = vmatprep.subr.mxu0 0.0
        %2458 = vmatpush1.msra.mxu0 0.0
        %2459 = vmatprep.subr.mxu0 0.0
        %2460 = vmatpush1.msra.mxu0 0.0
        %2461 = vmatprep.subr.mxu0 0.0
        %2462 = vmatpush1.msra.mxu0 %v826
        %2463 = vmatprep.subr.mxu0 0.0
        %2464 = vmatpush1.msra.mxu0 %v825
        %2465 = vmatprep.subr.mxu0 0.0
        %2466 = vmatpush1.msra.mxu0 %v824
        %2467 = vmatprep.subr.mxu0 0.0
        %2468 = vmatpush1.msra.mxu0 %v823
        %2469 = vmatprep.subr.mxu0 0.0
        %2470 = vmatpush1.msra.mxu0 %v822
        %2471 = vmatprep.subr.mxu0 0.0
        %2472 = vmatpush1.msra.mxu0 %v821
        %2473 = vmatprep.subr.mxu0 0.0
        %2474 = vmatpush1.msra.mxu0 %v820
        %2475 = vmatprep.subr.mxu0 0.0
        %2476 = vmatpush1.msra.mxu0 %v819
        %2477 = vmatprep.subr.mxu0 0.0
        %2478 = vmatpush2.msra.mxu0 0.0
        %2479 = vmatprep.subr.mxu0 0.0
        %2480 = vmatpush2.msra.mxu0 0.0
        %2481 = vmatprep.subr.mxu0 0.0
        %2482 = vmatpush2.msra.mxu0 0.0
        %2483 = vmatprep.subr.mxu0 0.0
        %2484 = vmatpush2.msra.mxu0 0.0
        %2485 = vmatprep.subr.mxu0 0.0
        %2486 = vmatpush2.msra.mxu0 0.0
        %2487 = vmatprep.subr.mxu0 0.0
        %2488 = vmatpush2.msra.mxu0 0.0
        %2489 = vmatprep.subr.mxu0 0.0
        %2490 = vmatpush2.msra.mxu0 0.0
        %2491 = vmatprep.subr.mxu0 0.0
        %2492 = vmatpush2.msra.mxu0 0.0
        %2493 = vmatprep.subr.mxu0 0.0
        %2494 = vmatpush2.msra.mxu0 0.0
        %2495 = vmatprep.subr.mxu0 0.0
        %2496 = vmatpush2.msra.mxu0 0.0
        %2497 = vmatprep.subr.mxu0 0.0
        %2498 = vmatpush2.msra.mxu0 0.0
        %2499 = vmatprep.subr.mxu0 0.0
        %2500 = vmatpush2.msra.mxu0 0.0
        %2501 = vmatprep.subr.mxu0 0.0
        %2502 = vmatpush2.msra.mxu0 0.0
        %2503 = vmatprep.subr.mxu0 0.0
        %2504 = vmatpush2.msra.mxu0 0.0
        %2505 = vmatprep.subr.mxu0 0.0
        %2506 = vmatpush2.msra.mxu0 0.0
        %2507 = vmatprep.subr.mxu0 0.0
        %2508 = vmatpush2.msra.mxu0 0.0
        %2509 = vmatprep.mubr.f32.mxu0 0.0
        %2510 = vmatmul.mubr.f32.gmra.mxu0 %v2443
        %v2511 = vpop.f32.mrf.mxu0
        %v2512 = vadd.f32 %v836, %v2511
        %v2513 = vpop.f32.mrf.mxu0
        %2514 = vdwg.mxu0
        %v2515 = vsel %vm837, %v2512, -inf
        %2516 = vmax.xlane.f32.xlu0 %v2515
        %v2517 = vpop.xlane.xlu0 %2516
        %v2518 = vsub.f32 %v2512, %v2517
        %v2519 = vmul.f32 %v2518, 1.442695
        %v2520 = vpow.pop %v2519
        %v2521 = vsel %vm837, %v2520, 0.0
        %2522 = vadd.xlane.f32.xlu0 %v2521
        %v2523 = vpop.xlane.xlu0 %2522
        %v2524 = vrcp.pop %v2523
        %v2525 = vmul.f32 %v2520, %v2524
        %v2527 = vsel %vm837, %v2525, 0
        %2529 = vmatprep.subr.mxu0 0.0
        %2530 = vmatpush1.msra.mxu0 0.0
        %2531 = vmatprep.subr.mxu0 0.0
        %2532 = vmatpush1.msra.mxu0 0.0
        %2533 = vmatprep.subr.mxu0 0.0
        %2534 = vmatpush1.msra.mxu0 0.0
        %2535 = vmatprep.subr.mxu0 0.0
        %2536 = vmatpush1.msra.mxu0 0.0
        %2537 = vmatprep.subr.mxu0 0.0
        %2538 = vmatpush1.msra.mxu0 0.0
        %2539 = vmatprep.subr.mxu0 0.0
        %2540 = vmatpush1.msra.mxu0 0.0
        %2541 = vmatprep.subr.mxu0 0.0
        %2542 = vmatpush1.msra.mxu0 0.0
        %2543 = vmatprep.subr.mxu0 0.0
        %2544 = vmatpush1.msra.mxu0 0.0
        %2545 = vmatprep.subr.mxu0 0.0
        %2546 = vmatpush1.msra.mxu0 0.0
        %2547 = vmatprep.subr.mxu0 0.0
        %2548 = vmatpush1.msra.mxu0 0.0
        %2549 = vmatprep.subr.mxu0 0.0
        %2550 = vmatpush1.msra.mxu0 0.0
        %2551 = vmatprep.subr.mxu0 0.0
        %2552 = vmatpush1.msra.mxu0 0.0
        %2553 = vmatprep.subr.mxu0 0.0
        %2554 = vmatpush1.msra.mxu0 0.0
        %2555 = vmatprep.subr.mxu0 0.0
        %2556 = vmatpush1.msra.mxu0 0.0
        %2557 = vmatprep.subr.mxu0 0.0
        %2558 = vmatpush1.msra.mxu0 0.0
        %2559 = vmatprep.subr.mxu0 0.0
        %2560 = vmatpush1.msra.mxu0 %v827
        %2561 = vmatprep.subr.mxu0 0.0
        %2562 = vmatpush2.msra.mxu0 0.0
        %2563 = vmatprep.subr.mxu0 0.0
        %2564 = vmatpush2.msra.mxu0 0.0
        %2565 = vmatprep.subr.mxu0 0.0
        %2566 = vmatpush2.msra.mxu0 0.0
        %2567 = vmatprep.subr.mxu0 0.0
        %2568 = vmatpush2.msra.mxu0 0.0
        %2569 = vmatprep.subr.mxu0 0.0
        %2570 = vmatpush2.msra.mxu0 0.0
        %2571 = vmatprep.subr.mxu0 0.0
        %2572 = vmatpush2.msra.mxu0 0.0
        %2573 = vmatprep.subr.mxu0 0.0
        %2574 = vmatpush2.msra.mxu0 0.0
        %2575 = vmatprep.subr.mxu0 0.0
        %2576 = vmatpush2.msra.mxu0 0.0
        %2577 = vmatprep.subr.mxu0 0.0
        %2578 = vmatpush2.msra.mxu0 0.0
        %2579 = vmatprep.subr.mxu0 0.0
        %2580 = vmatpush2.msra.mxu0 0.0
        %2581 = vmatprep.subr.mxu0 0.0
        %2582 = vmatpush2.msra.mxu0 0.0
        %2583 = vmatprep.subr.mxu0 0.0
        %2584 = vmatpush2.msra.mxu0 0.0
        %2585 = vmatprep.subr.mxu0 0.0
        %2586 = vmatpush2.msra.mxu0 0.0
        %2587 = vmatprep.subr.mxu0 0.0
        %2588 = vmatpush2.msra.mxu0 0.0
        %2589 = vmatprep.subr.mxu0 0.0
        %2590 = vmatpush2.msra.mxu0 0.0
        %2591 = vmatprep.subr.mxu0 0.0
        %2592 = vmatpush2.msra.mxu0 0.0
        %2593 = vmatprep.mubr.f32.mxu0 0.0
        %2594 = vmatmul.mubr.f32.gmra.mxu0 %v2527
        %v2595 = vpop.f32.mrf.mxu0
        %v2596 = vadd.f32 0.0, %v2595
        %v2597 = vpop.f32.mrf.mxu0
        %2598 = vdwg.mxu0
        %v2599 = vmul.f32 %v2596, %v813
        %v2601 = vsel %vm617, %v2599, 0
        %2603 = vmatprep.subr.mxu0 0.0
        %2604 = vmatpush1.msra.mxu0 0.0
        %2605 = vmatprep.subr.mxu0 0.0
        %2606 = vmatpush1.msra.mxu0 0.0
        %2607 = vmatprep.subr.mxu0 0.0
        %2608 = vmatpush1.msra.mxu0 0.0
        %2609 = vmatprep.subr.mxu0 0.0
        %2610 = vmatpush1.msra.mxu0 0.0
        %2611 = vmatprep.subr.mxu0 0.0
        %2612 = vmatpush1.msra.mxu0 0.0
        %2613 = vmatprep.subr.mxu0 0.0
        %2614 = vmatpush1.msra.mxu0 0.0
        %2615 = vmatprep.subr.mxu0 0.0
        %2616 = vmatpush1.msra.mxu0 0.0
        %2617 = vmatprep.subr.mxu0 0.0
        %2618 = vmatpush1.msra.mxu0 0.0
        %2619 = vmatprep.subr.mxu0 0.0
        %2620 = vmatpush1.msra.mxu0 %v835
        %2621 = vmatprep.subr.mxu0 0.0
        %2622 = vmatpush1.msra.mxu0 %v834
        %2623 = vmatprep.subr.mxu0 0.0
        %2624 = vmatpush1.msra.mxu0 %v833
        %2625 = vmatprep.subr.mxu0 0.0
        %2626 = vmatpush1.msra.mxu0 %v832
        %2627 = vmatprep.subr.mxu0 0.0
        %2628 = vmatpush1.msra.mxu0 %v831
        %2629 = vmatprep.subr.mxu0 0.0
        %2630 = vmatpush1.msra.mxu0 %v830
        %2631 = vmatprep.subr.mxu0 0.0
        %2632 = vmatpush1.msra.mxu0 %v829
        %2633 = vmatprep.subr.mxu0 0.0
        %2634 = vmatpush1.msra.mxu0 %v828
        %2635 = vmatprep.subr.mxu0 0.0
        %2636 = vmatpush2.msra.mxu0 0.0
        %2637 = vmatprep.subr.mxu0 0.0
        %2638 = vmatpush2.msra.mxu0 0.0
        %2639 = vmatprep.subr.mxu0 0.0
        %2640 = vmatpush2.msra.mxu0 0.0
        %2641 = vmatprep.subr.mxu0 0.0
        %2642 = vmatpush2.msra.mxu0 0.0
        %2643 = vmatprep.subr.mxu0 0.0
        %2644 = vmatpush2.msra.mxu0 0.0
        %2645 = vmatprep.subr.mxu0 0.0
        %2646 = vmatpush2.msra.mxu0 0.0
        %2647 = vmatprep.subr.mxu0 0.0
        %2648 = vmatpush2.msra.mxu0 0.0
        %2649 = vmatprep.subr.mxu0 0.0
        %2650 = vmatpush2.msra.mxu0 0.0
        %2651 = vmatprep.subr.mxu0 0.0
        %2652 = vmatpush2.msra.mxu0 0.0
        %2653 = vmatprep.subr.mxu0 0.0
        %2654 = vmatpush2.msra.mxu0 0.0
        %2655 = vmatprep.subr.mxu0 0.0
        %2656 = vmatpush2.msra.mxu0 0.0
        %2657 = vmatprep.subr.mxu0 0.0
        %2658 = vmatpush2.msra.mxu0 0.0
        %2659 = vmatprep.subr.mxu0 0.0
        %2660 = vmatpush2.msra.mxu0 0.0
        %2661 = vmatprep.subr.mxu0 0.0
        %2662 = vmatpush2.msra.mxu0 0.0
        %2663 = vmatprep.subr.mxu0 0.0
        %2664 = vmatpush2.msra.mxu0 0.0
        %2665 = vmatprep.subr.mxu0 0.0
        %2666 = vmatpush2.msra.mxu0 0.0
        %2667 = vmatprep.mubr.f32.mxu0 0.0
        %2668 = vmatmul.mubr.f32.gmra.mxu0 %v2601
        %v2669 = vpop.f32.mrf.mxu0
        %v2670 = vadd.f32 0.0, %v2669
        %v2671 = vpop.f32.mrf.mxu0
        %2672 = vdwg.mxu0
        %2673 = vrot.lane.b32.xlu0 %v656, 80
        %v2674 = vpop.permute.xlu0 %2673
        %v2675 = vsel %vm837, %v2674, 0
        %2677 = vmatprep.subr.mxu0 0.0
        %2678 = vmatpush1.msra.mxu0 0.0
        %2679 = vmatprep.subr.mxu0 0.0
        %2680 = vmatpush1.msra.mxu0 0.0
        %2681 = vmatprep.subr.mxu0 0.0
        %2682 = vmatpush1.msra.mxu0 0.0
        %2683 = vmatprep.subr.mxu0 0.0
        %2684 = vmatpush1.msra.mxu0 0.0
        %2685 = vmatprep.subr.mxu0 0.0
        %2686 = vmatpush1.msra.mxu0 0.0
        %2687 = vmatprep.subr.mxu0 0.0
        %2688 = vmatpush1.msra.mxu0 0.0
        %2689 = vmatprep.subr.mxu0 0.0
        %2690 = vmatpush1.msra.mxu0 0.0
        %2691 = vmatprep.subr.mxu0 0.0
        %2692 = vmatpush1.msra.mxu0 0.0
        %2693 = vmatprep.subr.mxu0 0.0
        %2694 = vmatpush1.msra.mxu0 0.0
        %2695 = vmatprep.subr.mxu0 0.0
        %2696 = vmatpush1.msra.mxu0 0.0
        %2697 = vmatprep.subr.mxu0 0.0
        %2698 = vmatpush1.msra.mxu0 0.0
        %2699 = vmatprep.subr.mxu0 0.0
        %2700 = vmatpush1.msra.mxu0 0.0
        %2701 = vmatprep.subr.mxu0 0.0
        %2702 = vmatpush1.msra.mxu0 0.0
        %2703 = vmatprep.subr.mxu0 0.0
        %2704 = vmatpush1.msra.mxu0 0.0
        %2705 = vmatprep.subr.mxu0 0.0
        %2706 = vmatpush1.msra.mxu0 0.0
        %2707 = vmatprep.subr.mxu0 0.0
        %2708 = vmatpush1.msra.mxu0 %v818
        %2709 = vmatprep.subr.mxu0 0.0
        %2710 = vmatpush2.msra.mxu0 0.0
        %2711 = vmatprep.subr.mxu0 0.0
        %2712 = vmatpush2.msra.mxu0 0.0
        %2713 = vmatprep.subr.mxu0 0.0
        %2714 = vmatpush2.msra.mxu0 0.0
        %2715 = vmatprep.subr.mxu0 0.0
        %2716 = vmatpush2.msra.mxu0 0.0
        %2717 = vmatprep.subr.mxu0 0.0
        %2718 = vmatpush2.msra.mxu0 0.0
        %2719 = vmatprep.subr.mxu0 0.0
        %2720 = vmatpush2.msra.mxu0 0.0
        %2721 = vmatprep.subr.mxu0 0.0
        %2722 = vmatpush2.msra.mxu0 0.0
        %2723 = vmatprep.subr.mxu0 0.0
        %2724 = vmatpush2.msra.mxu0 0.0
        %2725 = vmatprep.subr.mxu0 0.0
        %2726 = vmatpush2.msra.mxu0 0.0
        %2727 = vmatprep.subr.mxu0 0.0
        %2728 = vmatpush2.msra.mxu0 0.0
        %2729 = vmatprep.subr.mxu0 0.0
        %2730 = vmatpush2.msra.mxu0 0.0
        %2731 = vmatprep.subr.mxu0 0.0
        %2732 = vmatpush2.msra.mxu0 0.0
        %2733 = vmatprep.subr.mxu0 0.0
        %2734 = vmatpush2.msra.mxu0 0.0
        %2735 = vmatprep.subr.mxu0 0.0
        %2736 = vmatpush2.msra.mxu0 0.0
        %2737 = vmatprep.subr.mxu0 0.0
        %2738 = vmatpush2.msra.mxu0 0.0
        %2739 = vmatprep.subr.mxu0 0.0
        %2740 = vmatpush2.msra.mxu0 0.0
        %2741 = vmatprep.mubr.f32.mxu0 0.0
        %2742 = vmatmul.mubr.f32.gmra.mxu0 %v2675
        %v2743 = vpop.f32.mrf.mxu0
        %v2744 = vadd.f32 0.0, %v2743
        %v2745 = vpop.f32.mrf.mxu0
        %2746 = vdwg.mxu0
        %v2747 = vmul.f32 %v2744, %v731
        %v2749 = vsel %vm617, %v2747, 0
        %2751 = vmatprep.subr.mxu0 0.0
        %2752 = vmatpush1.msra.mxu0 0.0
        %2753 = vmatprep.subr.mxu0 0.0
        %2754 = vmatpush1.msra.mxu0 0.0
        %2755 = vmatprep.subr.mxu0 0.0
        %2756 = vmatpush1.msra.mxu0 0.0
        %2757 = vmatprep.subr.mxu0 0.0
        %2758 = vmatpush1.msra.mxu0 0.0
        %2759 = vmatprep.subr.mxu0 0.0
        %2760 = vmatpush1.msra.mxu0 0.0
        %2761 = vmatprep.subr.mxu0 0.0
        %2762 = vmatpush1.msra.mxu0 0.0
        %2763 = vmatprep.subr.mxu0 0.0
        %2764 = vmatpush1.msra.mxu0 0.0
        %2765 = vmatprep.subr.mxu0 0.0
        %2766 = vmatpush1.msra.mxu0 0.0
        %2767 = vmatprep.subr.mxu0 0.0
        %2768 = vmatpush1.msra.mxu0 %v826
        %2769 = vmatprep.subr.mxu0 0.0
        %2770 = vmatpush1.msra.mxu0 %v825
        %2771 = vmatprep.subr.mxu0 0.0
        %2772 = vmatpush1.msra.mxu0 %v824
        %2773 = vmatprep.subr.mxu0 0.0
        %2774 = vmatpush1.msra.mxu0 %v823
        %2775 = vmatprep.subr.mxu0 0.0
        %2776 = vmatpush1.msra.mxu0 %v822
        %2777 = vmatprep.subr.mxu0 0.0
        %2778 = vmatpush1.msra.mxu0 %v821
        %2779 = vmatprep.subr.mxu0 0.0
        %2780 = vmatpush1.msra.mxu0 %v820
        %2781 = vmatprep.subr.mxu0 0.0
        %2782 = vmatpush1.msra.mxu0 %v819
        %2783 = vmatprep.subr.mxu0 0.0
        %2784 = vmatpush2.msra.mxu0 0.0
        %2785 = vmatprep.subr.mxu0 0.0
        %2786 = vmatpush2.msra.mxu0 0.0
        %2787 = vmatprep.subr.mxu0 0.0
        %2788 = vmatpush2.msra.mxu0 0.0
        %2789 = vmatprep.subr.mxu0 0.0
        %2790 = vmatpush2.msra.mxu0 0.0
        %2791 = vmatprep.subr.mxu0 0.0
        %2792 = vmatpush2.msra.mxu0 0.0
        %2793 = vmatprep.subr.mxu0 0.0
        %2794 = vmatpush2.msra.mxu0 0.0
        %2795 = vmatprep.subr.mxu0 0.0
        %2796 = vmatpush2.msra.mxu0 0.0
        %2797 = vmatprep.subr.mxu0 0.0
        %2798 = vmatpush2.msra.mxu0 0.0
        %2799 = vmatprep.subr.mxu0 0.0
        %2800 = vmatpush2.msra.mxu0 0.0
        %2801 = vmatprep.subr.mxu0 0.0
        %2802 = vmatpush2.msra.mxu0 0.0
        %2803 = vmatprep.subr.mxu0 0.0
        %2804 = vmatpush2.msra.mxu0 0.0
        %2805 = vmatprep.subr.mxu0 0.0
        %2806 = vmatpush2.msra.mxu0 0.0
        %2807 = vmatprep.subr.mxu0 0.0
        %2808 = vmatpush2.msra.mxu0 0.0
        %2809 = vmatprep.subr.mxu0 0.0
        %2810 = vmatpush2.msra.mxu0 0.0
        %2811 = vmatprep.subr.mxu0 0.0
        %2812 = vmatpush2.msra.mxu0 0.0
        %2813 = vmatprep.subr.mxu0 0.0
        %2814 = vmatpush2.msra.mxu0 0.0
        %2815 = vmatprep.mubr.f32.mxu0 0.0
        %2816 = vmatmul.mubr.f32.gmra.mxu0 %v2749
        %v2817 = vpop.f32.mrf.mxu0
        %v2818 = vadd.f32 %v836, %v2817
        %v2819 = vpop.f32.mrf.mxu0
        %2820 = vdwg.mxu0
        %v2821 = vsel %vm837, %v2818, -inf
        %2822 = vmax.xlane.f32.xlu0 %v2821
        %v2823 = vpop.xlane.xlu0 %2822
        %v2824 = vsub.f32 %v2818, %v2823
        %v2825 = vmul.f32 %v2824, 1.442695
        %v2826 = vpow.pop %v2825
        %v2827 = vsel %vm837, %v2826, 0.0
        %2828 = vadd.xlane.f32.xlu0 %v2827
        %v2829 = vpop.xlane.xlu0 %2828
        %v2830 = vrcp.pop %v2829
        %v2831 = vmul.f32 %v2826, %v2830
        %v2833 = vsel %vm837, %v2831, 0
        %2835 = vmatprep.subr.mxu0 0.0
        %2836 = vmatpush1.msra.mxu0 0.0
        %2837 = vmatprep.subr.mxu0 0.0
        %2838 = vmatpush1.msra.mxu0 0.0
        %2839 = vmatprep.subr.mxu0 0.0
        %2840 = vmatpush1.msra.mxu0 0.0
        %2841 = vmatprep.subr.mxu0 0.0
        %2842 = vmatpush1.msra.mxu0 0.0
        %2843 = vmatprep.subr.mxu0 0.0
        %2844 = vmatpush1.msra.mxu0 0.0
        %2845 = vmatprep.subr.mxu0 0.0
        %2846 = vmatpush1.msra.mxu0 0.0
        %2847 = vmatprep.subr.mxu0 0.0
        %2848 = vmatpush1.msra.mxu0 0.0
        %2849 = vmatprep.subr.mxu0 0.0
        %2850 = vmatpush1.msra.mxu0 0.0
        %2851 = vmatprep.subr.mxu0 0.0
        %2852 = vmatpush1.msra.mxu0 0.0
        %2853 = vmatprep.subr.mxu0 0.0
        %2854 = vmatpush1.msra.mxu0 0.0
        %2855 = vmatprep.subr.mxu0 0.0
        %2856 = vmatpush1.msra.mxu0 0.0
        %2857 = vmatprep.subr.mxu0 0.0
        %2858 = vmatpush1.msra.mxu0 0.0
        %2859 = vmatprep.subr.mxu0 0.0
        %2860 = vmatpush1.msra.mxu0 0.0
        %2861 = vmatprep.subr.mxu0 0.0
        %2862 = vmatpush1.msra.mxu0 0.0
        %2863 = vmatprep.subr.mxu0 0.0
        %2864 = vmatpush1.msra.mxu0 0.0
        %2865 = vmatprep.subr.mxu0 0.0
        %2866 = vmatpush1.msra.mxu0 %v827
        %2867 = vmatprep.subr.mxu0 0.0
        %2868 = vmatpush2.msra.mxu0 0.0
        %2869 = vmatprep.subr.mxu0 0.0
        %2870 = vmatpush2.msra.mxu0 0.0
        %2871 = vmatprep.subr.mxu0 0.0
        %2872 = vmatpush2.msra.mxu0 0.0
        %2873 = vmatprep.subr.mxu0 0.0
        %2874 = vmatpush2.msra.mxu0 0.0
        %2875 = vmatprep.subr.mxu0 0.0
        %2876 = vmatpush2.msra.mxu0 0.0
        %2877 = vmatprep.subr.mxu0 0.0
        %2878 = vmatpush2.msra.mxu0 0.0
        %2879 = vmatprep.subr.mxu0 0.0
        %2880 = vmatpush2.msra.mxu0 0.0
        %2881 = vmatprep.subr.mxu0 0.0
        %2882 = vmatpush2.msra.mxu0 0.0
        %2883 = vmatprep.subr.mxu0 0.0
        %2884 = vmatpush2.msra.mxu0 0.0
        %2885 = vmatprep.subr.mxu0 0.0
        %2886 = vmatpush2.msra.mxu0 0.0
        %2887 = vmatprep.subr.mxu0 0.0
        %2888 = vmatpush2.msra.mxu0 0.0
        %2889 = vmatprep.subr.mxu0 0.0
        %2890 = vmatpush2.msra.mxu0 0.0
        %2891 = vmatprep.subr.mxu0 0.0
        %2892 = vmatpush2.msra.mxu0 0.0
        %2893 = vmatprep.subr.mxu0 0.0
        %2894 = vmatpush2.msra.mxu0 0.0
        %2895 = vmatprep.subr.mxu0 0.0
        %2896 = vmatpush2.msra.mxu0 0.0
        %2897 = vmatprep.subr.mxu0 0.0
        %2898 = vmatpush2.msra.mxu0 0.0
        %2899 = vmatprep.mubr.f32.mxu0 0.0
        %2900 = vmatmul.mubr.f32.gmra.mxu0 %v2833
        %v2901 = vpop.f32.mrf.mxu0
        %v2902 = vadd.f32 0.0, %v2901
        %v2903 = vpop.f32.mrf.mxu0
        %2904 = vdwg.mxu0
        %v2905 = vmul.f32 %v2902, %v813
        %v2907 = vsel %vm617, %v2905, 0
        %2909 = vmatprep.subr.mxu0 0.0
        %2910 = vmatpush1.msra.mxu0 0.0
        %2911 = vmatprep.subr.mxu0 0.0
        %2912 = vmatpush1.msra.mxu0 0.0
        %2913 = vmatprep.subr.mxu0 0.0
        %2914 = vmatpush1.msra.mxu0 0.0
        %2915 = vmatprep.subr.mxu0 0.0
        %2916 = vmatpush1.msra.mxu0 0.0
        %2917 = vmatprep.subr.mxu0 0.0
        %2918 = vmatpush1.msra.mxu0 0.0
        %2919 = vmatprep.subr.mxu0 0.0
        %2920 = vmatpush1.msra.mxu0 0.0
        %2921 = vmatprep.subr.mxu0 0.0
        %2922 = vmatpush1.msra.mxu0 0.0
        %2923 = vmatprep.subr.mxu0 0.0
        %2924 = vmatpush1.msra.mxu0 0.0
        %2925 = vmatprep.subr.mxu0 0.0
        %2926 = vmatpush1.msra.mxu0 %v835
        %2927 = vmatprep.subr.mxu0 0.0
        %2928 = vmatpush1.msra.mxu0 %v834
        %2929 = vmatprep.subr.mxu0 0.0
        %2930 = vmatpush1.msra.mxu0 %v833
        %2931 = vmatprep.subr.mxu0 0.0
        %2932 = vmatpush1.msra.mxu0 %v832
        %2933 = vmatprep.subr.mxu0 0.0
        %2934 = vmatpush1.msra.mxu0 %v831
        %2935 = vmatprep.subr.mxu0 0.0
        %2936 = vmatpush1.msra.mxu0 %v830
        %2937 = vmatprep.subr.mxu0 0.0
        %2938 = vmatpush1.msra.mxu0 %v829
        %2939 = vmatprep.subr.mxu0 0.0
        %2940 = vmatpush1.msra.mxu0 %v828
        %2941 = vmatprep.subr.mxu0 0.0
        %2942 = vmatpush2.msra.mxu0 0.0
        %2943 = vmatprep.subr.mxu0 0.0
        %2944 = vmatpush2.msra.mxu0 0.0
        %2945 = vmatprep.subr.mxu0 0.0
        %2946 = vmatpush2.msra.mxu0 0.0
        %2947 = vmatprep.subr.mxu0 0.0
        %2948 = vmatpush2.msra.mxu0 0.0
        %2949 = vmatprep.subr.mxu0 0.0
        %2950 = vmatpush2.msra.mxu0 0.0
        %2951 = vmatprep.subr.mxu0 0.0
        %2952 = vmatpush2.msra.mxu0 0.0
        %2953 = vmatprep.subr.mxu0 0.0
        %2954 = vmatpush2.msra.mxu0 0.0
        %2955 = vmatprep.subr.mxu0 0.0
        %2956 = vmatpush2.msra.mxu0 0.0
        %2957 = vmatprep.subr.mxu0 0.0
        %2958 = vmatpush2.msra.mxu0 0.0
        %2959 = vmatprep.subr.mxu0 0.0
        %2960 = vmatpush2.msra.mxu0 0.0
        %2961 = vmatprep.subr.mxu0 0.0
        %2962 = vmatpush2.msra.mxu0 0.0
        %2963 = vmatprep.subr.mxu0 0.0
        %2964 = vmatpush2.msra.mxu0 0.0
        %2965 = vmatprep.subr.mxu0 0.0
        %2966 = vmatpush2.msra.mxu0 0.0
        %2967 = vmatprep.subr.mxu0 0.0
        %2968 = vmatpush2.msra.mxu0 0.0
        %2969 = vmatprep.subr.mxu0 0.0
        %2970 = vmatpush2.msra.mxu0 0.0
        %2971 = vmatprep.subr.mxu0 0.0
        %2972 = vmatpush2.msra.mxu0 0.0
        %2973 = vmatprep.mubr.f32.mxu0 0.0
        %2974 = vmatmul.mubr.f32.gmra.mxu0 %v2907
        %v2975 = vpop.f32.mrf.mxu0
        %v2976 = vadd.f32 0.0, %v2975
        %v2977 = vpop.f32.mrf.mxu0
        %2978 = vdwg.mxu0
        %2979 = vrot.lane.b32.xlu0 %v656, 72
        %v2980 = vpop.permute.xlu0 %2979
        %v2981 = vsel %vm837, %v2980, 0
        %2983 = vmatprep.subr.mxu0 0.0
        %2984 = vmatpush1.msra.mxu0 0.0
        %2985 = vmatprep.subr.mxu0 0.0
        %2986 = vmatpush1.msra.mxu0 0.0
        %2987 = vmatprep.subr.mxu0 0.0
        %2988 = vmatpush1.msra.mxu0 0.0
        %2989 = vmatprep.subr.mxu0 0.0
        %2990 = vmatpush1.msra.mxu0 0.0
        %2991 = vmatprep.subr.mxu0 0.0
        %2992 = vmatpush1.msra.mxu0 0.0
        %2993 = vmatprep.subr.mxu0 0.0
        %2994 = vmatpush1.msra.mxu0 0.0
        %2995 = vmatprep.subr.mxu0 0.0
        %2996 = vmatpush1.msra.mxu0 0.0
        %2997 = vmatprep.subr.mxu0 0.0
        %2998 = vmatpush1.msra.mxu0 0.0
        %2999 = vmatprep.subr.mxu0 0.0
        %3000 = vmatpush1.msra.mxu0 0.0
        %3001 = vmatprep.subr.mxu0 0.0
        %3002 = vmatpush1.msra.mxu0 0.0
        %3003 = vmatprep.subr.mxu0 0.0
        %3004 = vmatpush1.msra.mxu0 0.0
        %3005 = vmatprep.subr.mxu0 0.0
        %3006 = vmatpush1.msra.mxu0 0.0
        %3007 = vmatprep.subr.mxu0 0.0
        %3008 = vmatpush1.msra.mxu0 0.0
        %3009 = vmatprep.subr.mxu0 0.0
        %3010 = vmatpush1.msra.mxu0 0.0
        %3011 = vmatprep.subr.mxu0 0.0
        %3012 = vmatpush1.msra.mxu0 0.0
        %3013 = vmatprep.subr.mxu0 0.0
        %3014 = vmatpush1.msra.mxu0 %v818
        %3015 = vmatprep.subr.mxu0 0.0
        %3016 = vmatpush2.msra.mxu0 0.0
        %3017 = vmatprep.subr.mxu0 0.0
        %3018 = vmatpush2.msra.mxu0 0.0
        %3019 = vmatprep.subr.mxu0 0.0
        %3020 = vmatpush2.msra.mxu0 0.0
        %3021 = vmatprep.subr.mxu0 0.0
        %3022 = vmatpush2.msra.mxu0 0.0
        %3023 = vmatprep.subr.mxu0 0.0
        %3024 = vmatpush2.msra.mxu0 0.0
        %3025 = vmatprep.subr.mxu0 0.0
        %3026 = vmatpush2.msra.mxu0 0.0
        %3027 = vmatprep.subr.mxu0 0.0
        %3028 = vmatpush2.msra.mxu0 0.0
        %3029 = vmatprep.subr.mxu0 0.0
        %3030 = vmatpush2.msra.mxu0 0.0
        %3031 = vmatprep.subr.mxu0 0.0
        %3032 = vmatpush2.msra.mxu0 0.0
        %3033 = vmatprep.subr.mxu0 0.0
        %3034 = vmatpush2.msra.mxu0 0.0
        %3035 = vmatprep.subr.mxu0 0.0
        %3036 = vmatpush2.msra.mxu0 0.0
        %3037 = vmatprep.subr.mxu0 0.0
        %3038 = vmatpush2.msra.mxu0 0.0
        %3039 = vmatprep.subr.mxu0 0.0
        %3040 = vmatpush2.msra.mxu0 0.0
        %3041 = vmatprep.subr.mxu0 0.0
        %3042 = vmatpush2.msra.mxu0 0.0
        %3043 = vmatprep.subr.mxu0 0.0
        %3044 = vmatpush2.msra.mxu0 0.0
        %3045 = vmatprep.subr.mxu0 0.0
        %3046 = vmatpush2.msra.mxu0 0.0
        %3047 = vmatprep.mubr.f32.mxu0 0.0
        %3048 = vmatmul.mubr.f32.gmra.mxu0 %v2981
        %v3049 = vpop.f32.mrf.mxu0
        %v3050 = vadd.f32 0.0, %v3049
        %v3051 = vpop.f32.mrf.mxu0
        %3052 = vdwg.mxu0
        %v3053 = vmul.f32 %v3050, %v731
        %v3055 = vsel %vm617, %v3053, 0
        %3057 = vmatprep.subr.mxu0 0.0
        %3058 = vmatpush1.msra.mxu0 0.0
        %3059 = vmatprep.subr.mxu0 0.0
        %3060 = vmatpush1.msra.mxu0 0.0
        %3061 = vmatprep.subr.mxu0 0.0
        %3062 = vmatpush1.msra.mxu0 0.0
        %3063 = vmatprep.subr.mxu0 0.0
        %3064 = vmatpush1.msra.mxu0 0.0
        %3065 = vmatprep.subr.mxu0 0.0
        %3066 = vmatpush1.msra.mxu0 0.0
        %3067 = vmatprep.subr.mxu0 0.0
        %3068 = vmatpush1.msra.mxu0 0.0
        %3069 = vmatprep.subr.mxu0 0.0
        %3070 = vmatpush1.msra.mxu0 0.0
        %3071 = vmatprep.subr.mxu0 0.0
        %3072 = vmatpush1.msra.mxu0 0.0
        %3073 = vmatprep.subr.mxu0 0.0
        %3074 = vmatpush1.msra.mxu0 %v826
        %3075 = vmatprep.subr.mxu0 0.0
        %3076 = vmatpush1.msra.mxu0 %v825
        %3077 = vmatprep.subr.mxu0 0.0
        %3078 = vmatpush1.msra.mxu0 %v824
        %3079 = vmatprep.subr.mxu0 0.0
        %3080 = vmatpush1.msra.mxu0 %v823
        %3081 = vmatprep.subr.mxu0 0.0
        %3082 = vmatpush1.msra.mxu0 %v822
        %3083 = vmatprep.subr.mxu0 0.0
        %3084 = vmatpush1.msra.mxu0 %v821
        %3085 = vmatprep.subr.mxu0 0.0
        %3086 = vmatpush1.msra.mxu0 %v820
        %3087 = vmatprep.subr.mxu0 0.0
        %3088 = vmatpush1.msra.mxu0 %v819
        %3089 = vmatprep.subr.mxu0 0.0
        %3090 = vmatpush2.msra.mxu0 0.0
        %3091 = vmatprep.subr.mxu0 0.0
        %3092 = vmatpush2.msra.mxu0 0.0
        %3093 = vmatprep.subr.mxu0 0.0
        %3094 = vmatpush2.msra.mxu0 0.0
        %3095 = vmatprep.subr.mxu0 0.0
        %3096 = vmatpush2.msra.mxu0 0.0
        %3097 = vmatprep.subr.mxu0 0.0
        %3098 = vmatpush2.msra.mxu0 0.0
        %3099 = vmatprep.subr.mxu0 0.0
        %3100 = vmatpush2.msra.mxu0 0.0
        %3101 = vmatprep.subr.mxu0 0.0
        %3102 = vmatpush2.msra.mxu0 0.0
        %3103 = vmatprep.subr.mxu0 0.0
        %3104 = vmatpush2.msra.mxu0 0.0
        %3105 = vmatprep.subr.mxu0 0.0
        %3106 = vmatpush2.msra.mxu0 0.0
        %3107 = vmatprep.subr.mxu0 0.0
        %3108 = vmatpush2.msra.mxu0 0.0
        %3109 = vmatprep.subr.mxu0 0.0
        %3110 = vmatpush2.msra.mxu0 0.0
        %3111 = vmatprep.subr.mxu0 0.0
        %3112 = vmatpush2.msra.mxu0 0.0
        %3113 = vmatprep.subr.mxu0 0.0
        %3114 = vmatpush2.msra.mxu0 0.0
        %3115 = vmatprep.subr.mxu0 0.0
        %3116 = vmatpush2.msra.mxu0 0.0
        %3117 = vmatprep.subr.mxu0 0.0
        %3118 = vmatpush2.msra.mxu0 0.0
        %3119 = vmatprep.subr.mxu0 0.0
        %3120 = vmatpush2.msra.mxu0 0.0
        %3121 = vmatprep.mubr.f32.mxu0 0.0
        %3122 = vmatmul.mubr.f32.gmra.mxu0 %v3055
        %v3123 = vpop.f32.mrf.mxu0
        %v3124 = vadd.f32 %v836, %v3123
        %v3125 = vpop.f32.mrf.mxu0
        %3126 = vdwg.mxu0
        %v3127 = vsel %vm837, %v3124, -inf
        %3128 = vmax.xlane.f32.xlu0 %v3127
        %v3129 = vpop.xlane.xlu0 %3128
        %v3130 = vsub.f32 %v3124, %v3129
        %v3131 = vmul.f32 %v3130, 1.442695
        %v3132 = vpow.pop %v3131
        %v3133 = vsel %vm837, %v3132, 0.0
        %3134 = vadd.xlane.f32.xlu0 %v3133
        %v3135 = vpop.xlane.xlu0 %3134
        %v3136 = vrcp.pop %v3135
        %v3137 = vmul.f32 %v3132, %v3136
        %v3139 = vsel %vm837, %v3137, 0
        %3141 = vmatprep.subr.mxu0 0.0
        %3142 = vmatpush1.msra.mxu0 0.0
        %3143 = vmatprep.subr.mxu0 0.0
        %3144 = vmatpush1.msra.mxu0 0.0
        %3145 = vmatprep.subr.mxu0 0.0
        %3146 = vmatpush1.msra.mxu0 0.0
        %3147 = vmatprep.subr.mxu0 0.0
        %3148 = vmatpush1.msra.mxu0 0.0
        %3149 = vmatprep.subr.mxu0 0.0
        %3150 = vmatpush1.msra.mxu0 0.0
        %3151 = vmatprep.subr.mxu0 0.0
        %3152 = vmatpush1.msra.mxu0 0.0
        %3153 = vmatprep.subr.mxu0 0.0
        %3154 = vmatpush1.msra.mxu0 0.0
        %3155 = vmatprep.subr.mxu0 0.0
        %3156 = vmatpush1.msra.mxu0 0.0
        %3157 = vmatprep.subr.mxu0 0.0
        %3158 = vmatpush1.msra.mxu0 0.0
        %3159 = vmatprep.subr.mxu0 0.0
        %3160 = vmatpush1.msra.mxu0 0.0
        %3161 = vmatprep.subr.mxu0 0.0
        %3162 = vmatpush1.msra.mxu0 0.0
        %3163 = vmatprep.subr.mxu0 0.0
        %3164 = vmatpush1.msra.mxu0 0.0
        %3165 = vmatprep.subr.mxu0 0.0
        %3166 = vmatpush1.msra.mxu0 0.0
        %3167 = vmatprep.subr.mxu0 0.0
        %3168 = vmatpush1.msra.mxu0 0.0
        %3169 = vmatprep.subr.mxu0 0.0
        %3170 = vmatpush1.msra.mxu0 0.0
        %3171 = vmatprep.subr.mxu0 0.0
        %3172 = vmatpush1.msra.mxu0 %v827
        %3173 = vmatprep.subr.mxu0 0.0
        %3174 = vmatpush2.msra.mxu0 0.0
        %3175 = vmatprep.subr.mxu0 0.0
        %3176 = vmatpush2.msra.mxu0 0.0
        %3177 = vmatprep.subr.mxu0 0.0
        %3178 = vmatpush2.msra.mxu0 0.0
        %3179 = vmatprep.subr.mxu0 0.0
        %3180 = vmatpush2.msra.mxu0 0.0
        %3181 = vmatprep.subr.mxu0 0.0
        %3182 = vmatpush2.msra.mxu0 0.0
        %3183 = vmatprep.subr.mxu0 0.0
        %3184 = vmatpush2.msra.mxu0 0.0
        %3185 = vmatprep.subr.mxu0 0.0
        %3186 = vmatpush2.msra.mxu0 0.0
        %3187 = vmatprep.subr.mxu0 0.0
        %3188 = vmatpush2.msra.mxu0 0.0
        %3189 = vmatprep.subr.mxu0 0.0
        %3190 = vmatpush2.msra.mxu0 0.0
        %3191 = vmatprep.subr.mxu0 0.0
        %3192 = vmatpush2.msra.mxu0 0.0
        %3193 = vmatprep.subr.mxu0 0.0
        %3194 = vmatpush2.msra.mxu0 0.0
        %3195 = vmatprep.subr.mxu0 0.0
        %3196 = vmatpush2.msra.mxu0 0.0
        %3197 = vmatprep.subr.mxu0 0.0
        %3198 = vmatpush2.msra.mxu0 0.0
        %3199 = vmatprep.subr.mxu0 0.0
        %3200 = vmatpush2.msra.mxu0 0.0
        %3201 = vmatprep.subr.mxu0 0.0
        %3202 = vmatpush2.msra.mxu0 0.0
        %3203 = vmatprep.subr.mxu0 0.0
        %3204 = vmatpush2.msra.mxu0 0.0
        %3205 = vmatprep.mubr.f32.mxu0 0.0
        %3206 = vmatmul.mubr.f32.gmra.mxu0 %v3139
        %v3207 = vpop.f32.mrf.mxu0
        %v3208 = vadd.f32 0.0, %v3207
        %v3209 = vpop.f32.mrf.mxu0
        %3210 = vdwg.mxu0
        %v3211 = vmul.f32 %v3208, %v813
        %v3213 = vsel %vm617, %v3211, 0
        %3215 = vmatprep.subr.mxu0 0.0
        %3216 = vmatpush1.msra.mxu0 0.0
        %3217 = vmatprep.subr.mxu0 0.0
        %3218 = vmatpush1.msra.mxu0 0.0
        %3219 = vmatprep.subr.mxu0 0.0
        %3220 = vmatpush1.msra.mxu0 0.0
        %3221 = vmatprep.subr.mxu0 0.0
        %3222 = vmatpush1.msra.mxu0 0.0
        %3223 = vmatprep.subr.mxu0 0.0
        %3224 = vmatpush1.msra.mxu0 0.0
        %3225 = vmatprep.subr.mxu0 0.0
        %3226 = vmatpush1.msra.mxu0 0.0
        %3227 = vmatprep.subr.mxu0 0.0
        %3228 = vmatpush1.msra.mxu0 0.0
        %3229 = vmatprep.subr.mxu0 0.0
        %3230 = vmatpush1.msra.mxu0 0.0
        %3231 = vmatprep.subr.mxu0 0.0
        %3232 = vmatpush1.msra.mxu0 %v835
        %3233 = vmatprep.subr.mxu0 0.0
        %3234 = vmatpush1.msra.mxu0 %v834
        %3235 = vmatprep.subr.mxu0 0.0
        %3236 = vmatpush1.msra.mxu0 %v833
        %3237 = vmatprep.subr.mxu0 0.0
        %3238 = vmatpush1.msra.mxu0 %v832
        %3239 = vmatprep.subr.mxu0 0.0
        %3240 = vmatpush1.msra.mxu0 %v831
        %3241 = vmatprep.subr.mxu0 0.0
        %3242 = vmatpush1.msra.mxu0 %v830
        %3243 = vmatprep.subr.mxu0 0.0
        %3244 = vmatpush1.msra.mxu0 %v829
        %3245 = vmatprep.subr.mxu0 0.0
        %3246 = vmatpush1.msra.mxu0 %v828
        %3247 = vmatprep.subr.mxu0 0.0
        %3248 = vmatpush2.msra.mxu0 0.0
        %3249 = vmatprep.subr.mxu0 0.0
        %3250 = vmatpush2.msra.mxu0 0.0
        %3251 = vmatprep.subr.mxu0 0.0
        %3252 = vmatpush2.msra.mxu0 0.0
        %3253 = vmatprep.subr.mxu0 0.0
        %3254 = vmatpush2.msra.mxu0 0.0
        %3255 = vmatprep.subr.mxu0 0.0
        %3256 = vmatpush2.msra.mxu0 0.0
        %3257 = vmatprep.subr.mxu0 0.0
        %3258 = vmatpush2.msra.mxu0 0.0
        %3259 = vmatprep.subr.mxu0 0.0
        %3260 = vmatpush2.msra.mxu0 0.0
        %3261 = vmatprep.subr.mxu0 0.0
        %3262 = vmatpush2.msra.mxu0 0.0
        %3263 = vmatprep.subr.mxu0 0.0
        %3264 = vmatpush2.msra.mxu0 0.0
        %3265 = vmatprep.subr.mxu0 0.0
        %3266 = vmatpush2.msra.mxu0 0.0
        %3267 = vmatprep.subr.mxu0 0.0
        %3268 = vmatpush2.msra.mxu0 0.0
        %3269 = vmatprep.subr.mxu0 0.0
        %3270 = vmatpush2.msra.mxu0 0.0
        %3271 = vmatprep.subr.mxu0 0.0
        %3272 = vmatpush2.msra.mxu0 0.0
        %3273 = vmatprep.subr.mxu0 0.0
        %3274 = vmatpush2.msra.mxu0 0.0
        %3275 = vmatprep.subr.mxu0 0.0
        %3276 = vmatpush2.msra.mxu0 0.0
        %3277 = vmatprep.subr.mxu0 0.0
        %3278 = vmatpush2.msra.mxu0 0.0
        %3279 = vmatprep.mubr.f32.mxu0 0.0
        %3280 = vmatmul.mubr.f32.gmra.mxu0 %v3213
        %v3281 = vpop.f32.mrf.mxu0
        %v3282 = vadd.f32 0.0, %v3281
        %v3283 = vpop.f32.mrf.mxu0
        %3284 = vdwg.mxu0
        %3286 = vrot.lane.b32.xlu0 %v1446, 8
        %v3287 = vpop.permute.xlu0 %3286
        %3290 = vrot.lane.b32.xlu0 %v1752, 16
        %v3291 = vpop.permute.xlu0 %3290
        %3294 = vrot.lane.b32.xlu0 %v2058, 24
        %v3295 = vpop.permute.xlu0 %3294
        %3298 = vrot.lane.b32.xlu0 %v2364, 32
        %v3299 = vpop.permute.xlu0 %3298
        %3302 = vrot.lane.b32.xlu0 %v2670, 40
        %v3303 = vpop.permute.xlu0 %3302
        %3306 = vrot.lane.b32.xlu0 %v2976, 48
        %v3307 = vpop.permute.xlu0 %3306
        %3310 = vrot.lane.b32.xlu0 %v3282, 56
        %v3311 = vpop.permute.xlu0 %3310
        %v3313 = vsel %vm837, %v1140, %v3287
        %vm3314 = vcmask 130048
        %v3315 = vsel %vm3314, %v3313, %v3291
        %vm3316 = vcmask 195584
        %v3317 = vsel %vm3316, %v3315, %v3295
        %vm3318 = vcmask 261120
        %v3319 = vsel %vm3318, %v3317, %v3299
        %vm3320 = vcmask 326656
        %v3321 = vsel %vm3320, %v3319, %v3303
        %vm3322 = vcmask 392192
        %v3323 = vsel %vm3322, %v3321, %v3307
        %vm3324 = vcmask 457728
        %v3325 = vsel %vm3324, %v3323, %v3311
        %3326 = vst.msk [vmem:[%s551] sm:$0xff] %vm617, %v3325
        %3327 = vst.msk [vmem:[%s558] sm:$0xff] %vm617, %v656
        %s3328 = sand.u32 %s331, 1
        %s3329 = scalar_lea.sflag [#allocation4], %s3328
        %s3330 = sand.u32 %s331, 1
        %s3331 = smul.addr %s3330, 8
        %s3332 = scalar_lea.vmem [#allocation11], %s3331
        %s3333 = sand.u32 %s357, 1
        %s3334 = scalar_lea.sflag [#allocation13], %s3333
        %s3335 = sand.u32 %s357, 1
        %s3336 = smul.addr %s3335, 8
        %s3337 = scalar_lea.vmem [#allocation12], %s3336
        // Predicated region
        $region93: #{tpu_custom_call.1} parent=71 // pred_check
          %p3338 = pneg %p341
        $region94: #{tpu_custom_call.1} parent=71 // pred_check_branch
          %3340 = sbr.rel (%p3338) target = $region96
        $region95: #{tpu_custom_call.1} parent=71 // pred_region
          %s3342 = ssub.s32 128, 128
          %3343 = vsyncadd %s3329, %s3342
          %s3344 = smul.addr %s35, 128
          %s3345 = scalar_lea.hbm %s13, %s3344
          %s3347 = sshll.u32 %s3332, 4
          %s3348 = int_to_ptr.vmem [resolvable:$true] %s3347
          %3350 = dma.vmem_to_hbm [thread:$0]  %s3348, 128, %s3345, %s3329
        $region96: #{tpu_custom_call.1} parent=71 // pred_fallthru
          _
        // Predicated region
        $region97: #{tpu_custom_call.1} parent=71 // pred_check
          %p3351 = pneg %p367
        $region98: #{tpu_custom_call.1} parent=71 // pred_check_branch
          %3353 = sbr.rel (%p3351) target = $region100
        $region99: #{tpu_custom_call.1} parent=71 // pred_region
          %s3355 = ssub.s32 128, 128
          %3356 = vsyncadd %s3334, %s3355
          %s3357 = smul.addr %s35, 128
          %s3358 = scalar_lea.hbm %s14, %s3357
          %s3360 = sshll.u32 %s3337, 4
          %s3361 = int_to_ptr.vmem [resolvable:$true] %s3360
          %3363 = dma.vmem_to_hbm [thread:$0]  %s3361, 128, %s3358, %s3334
        $region100: #{tpu_custom_call.1} parent=71 // pred_fallthru
          _
      $region72: #{tpu_custom_call.1} parent=5 // pred_fallthru
        _
      %p3364 = scmp.le.s32.totalorder 2, %s30
      // Predicated region
      $region101: #{tpu_custom_call.1} parent=5 // pred_check
        %p3365 = pneg %p3364
      $region102: #{tpu_custom_call.1} parent=5 // pred_check_branch
        %3367 = sbr.rel (%p3365) target = $region104
      $region103: #{tpu_custom_call.1} parent=5 // pred_region
        %s3368 = ssub.s32 %s30, 2
        // Predicated region
        $region105: #{tpu_custom_call.1} parent=103 // pred_check
          %p3369 = pneg %p347
        $region106: #{tpu_custom_call.1} parent=103 // pred_check_branch
          %3371 = sbr.rel (%p3369) target = $region108
        $region107: #{tpu_custom_call.1} parent=103 // pred_region
          %s3372 = sand.u32 %s332, 1
          %s3373 = scalar_lea.sflag [#allocation4], %s3372
          %s3374 = sand.u32 %s332, 1
          %s3375 = smul.addr %s3374, 8
          %s3376 = scalar_lea.vmem [#allocation11], %s3375
          %3377 = dma.done %s3373, 128
        $region108: #{tpu_custom_call.1} parent=103 // pred_fallthru
          _
        // Predicated region
        $region109: #{tpu_custom_call.1} parent=103 // pred_check
          %p3378 = pneg %p373
        $region110: #{tpu_custom_call.1} parent=103 // pred_check_branch
          %3380 = sbr.rel (%p3378) target = $region112
        $region111: #{tpu_custom_call.1} parent=103 // pred_region
          %s3381 = sand.u32 %s358, 1
          %s3382 = scalar_lea.sflag [#allocation13], %s3381
          %s3383 = sand.u32 %s358, 1
          %s3384 = smul.addr %s3383, 8
          %s3385 = scalar_lea.vmem [#allocation12], %s3384
          %3386 = dma.done %s3382, 128
        $region112: #{tpu_custom_call.1} parent=103 // pred_fallthru
          _
      $region104: #{tpu_custom_call.1} parent=5 // pred_fallthru
        _
    $region6: #{tpu_custom_call.1} parent=1 // loop_footer
      %s34 = sadd.s32 1, %s30
    $region7: #{tpu_custom_call.1} parent=1 // loop_footer_branch
      %29 = sbr.rel target = $region3
    $region8: #{tpu_custom_call.1} parent=1 // loop_exit
      _
    %3387 = vsyncpa [#allocation3], 1
    %s3388 = scalar_lea.sflag [#allocation3], 1
    %3389 = vsyncpa %s3388, 1
    %3390 = vsyncpa [#allocation6], 1
    %3391 = vsyncpa [#allocation9], 1
    %3392 = vsyncpa [#allocation4], 1
    %s3393 = scalar_lea.sflag [#allocation4], 1
    %3394 = vsyncpa %s3393, 1
    %3395 = vsyncpa [#allocation13], 1
    %s3396 = scalar_lea.sflag [#allocation13], 1
    %3397 = vsyncpa %s3396, 1

</llo_original>
